<compile_context>
chip_gen: v5e
topology: v5e:2x2
jax: 0.10.0
libtpu: 0.0.40
codegen_flags: <defaults>
</compile_context>

<pallas_src>
import functools

import jax
import jax.numpy as jnp
from jax.experimental import pallas as pl
from jax.experimental.pallas import tpu as pltpu


def _round_up(x, m):
    return (x + m - 1) // m * m


# ---------------------------------------------------------------------------
# Fused kernel: Bt batch elements per grid step.
#   emb_ref : [Bt, L, E]        we_ref : [E, Hp] bf16      be_ref : [1, Hp] f32
#   wK_ref  : [3*Hp, 2*Hp] bf16 (tap-major K, value|gate N) bK_ref : [1, 2*Hp] f32
#   wt_ref  : [Hp, Tp] bf16     bt_ref : [1, Tp] f32
#   out_ref : [Bt, L, Tp]
# (Hp, Tp are the lane-padded hidden / tag sizes; padding is numerically exact.)
# ---------------------------------------------------------------------------
def _fused_feature_kernel(emb_ref, we_ref, be_ref,
                          w1_ref, b1_ref, w2_ref, b2_ref, w4_ref, b4_ref,
                          wt_ref, bt_ref, out_ref, *, dils):
    Bt, L, E = emb_ref.shape
    Hp = we_ref.shape[1]
    M = Bt * L

    x = emb_ref[...].reshape(M, E)                       # flatten (Bt,L) -> M rows

    # --- e2f: Linear + gelu(y) = y * sigmoid(1.702 y) -----------------------
    h = jnp.dot(x.astype(jnp.bfloat16), we_ref[...],
                preferred_element_type=jnp.float32) + be_ref[...]
    h = h * jax.nn.sigmoid(1.702 * h)                    # [M, Hp] f32

    # Position-within-sequence per row (hoisted out of the block loop).
    t_idx = jax.lax.broadcasted_iota(jnp.int32, (Bt, L, Hp), 1).reshape(M, Hp)

    # --- gated dilated conv blocks (win=3, "same" padding, residual) --------
    for w_ref, b_ref, dil in ((w1_ref, b1_ref, dils[0]),
                              (w2_ref, b2_ref, dils[1]),
                              (w4_ref, b4_ref, dils[2])):
        # left tap x[t-dil] (zero for t<dil); right tap x[t+dil] (zero for t>=L-dil).
        # Rolls are on the flattened rows; the masks kill every wrapped /
        # cross-batch row, so this equals the per-sequence zero-padded conv.
        xl = jnp.where(t_idx >= dil, pltpu.roll(h, dil, 0), 0.0)
        xr = jnp.where(t_idx < L - dil, pltpu.roll(h, M - dil, 0), 0.0)
        taps = jnp.concatenate([xl.astype(jnp.bfloat16),
                                h.astype(jnp.bfloat16),
                                xr.astype(jnp.bfloat16)], axis=1)   # [M, 3*Hp]
        acc = jnp.dot(taps, w_ref[...],
                      preferred_element_type=jnp.float32) + b_ref[...]  # [M, 2*Hp]
        # gate (conv2) * value (conv1) + residual (in_s == out_s -> use_x=True)
        h = acc[:, :Hp] * jax.nn.sigmoid(acc[:, Hp:]) + h

    # --- hidden2tag (no activation), lane-dense padded-T store --------------
    tags = jnp.dot(h.astype(jnp.bfloat16), wt_ref[...],
                   preferred_element_type=jnp.float32) + bt_ref[...]
    out_ref[...] = tags.reshape(Bt, L, -1).astype(out_ref.dtype)


# ---------------------------------------------------------------------------
# Parameters (random init; linear weights stored [in, out] for x @ W,
# conv weights as [3(tap), H(in), H(out)]).
# ---------------------------------------------------------------------------
def init_params(key, e_size, hidden, num_tags):
    ks = jax.random.split(key, 16)
    p = {}
    p["e2f_w"] = jax.random.normal(ks[0], (e_size, hidden), jnp.float32) * 0.1
    p["e2f_b"] = jax.random.normal(ks[1], (hidden,), jnp.float32) * 0.1
    for i, name in enumerate(("c1", "c2", "c4")):
        p[f"{name}_w1"] = jax.random.normal(ks[2 + 4 * i], (3, hidden, hidden), jnp.float32) * 0.1
        p[f"{name}_w2"] = jax.random.normal(ks[3 + 4 * i], (3, hidden, hidden), jnp.float32) * 0.1
        p[f"{name}_b1"] = jax.random.normal(ks[4 + 4 * i], (hidden,), jnp.float32) * 0.1
        p[f"{name}_b2"] = jax.random.normal(ks[5 + 4 * i], (hidden,), jnp.float32) * 0.1
    p["h2t_w"] = jax.random.normal(ks[14], (hidden, num_tags), jnp.float32) * 0.1
    p["h2t_b"] = jax.random.normal(ks[15], (num_tags,), jnp.float32) * 0.1
    return p


# ---------------------------------------------------------------------------
# Pure-JAX f32 reference of FeatureExtraction(mode_type='cnn').forward (eval).
# ---------------------------------------------------------------------------
def _reference_forward(params, embedding, mask):
    h = jnp.einsum("ble,eh->blh", embedding, params["e2f_w"]) + params["e2f_b"]
    h = h * jax.nn.sigmoid(1.702 * h)
    for name, dil in (("c1", 1), ("c2", 2), ("c4", 4)):
        B, L, H = h.shape
        zp = jnp.zeros((B, dil, H), h.dtype)
        xl = jnp.concatenate([zp, h[:, :L - dil, :]], axis=1)    # x[t-dil]
        xr = jnp.concatenate([h[:, dil:, :], zp], axis=1)        # x[t+dil]

        def conv(w, b):
            return (jnp.einsum("blh,hk->blk", xl, w[0])
                    + jnp.einsum("blh,hk->blk", h, w[1])
                    + jnp.einsum("blh,hk->blk", xr, w[2]) + b)

        v = conv(params[f"{name}_w1"], params[f"{name}_b1"])
        g = conv(params[f"{name}_w2"], params[f"{name}_b2"])
        h = v * jax.nn.sigmoid(g) + h
    tags = jnp.einsum("blh,ht->blt", h, params["h2t_w"]) + params["h2t_b"]
    return tags.transpose(1, 0, 2), mask.T


# ---------------------------------------------------------------------------
# FeatureExtraction forward (mode_type='cnn')
#   embedding: [B, L, E], mask: [B, L]  ->  tags [L, B, T], mask [L, B]
# ---------------------------------------------------------------------------
def feature_extraction_forward(params, embedding, mask):
    B, L, E = embedding.shape
    H = params["e2f_w"].shape[1]
    T = params["h2t_w"].shape[1]
    Hp = _round_up(max(H, 128), 128)                 # lane-dense channel dim
    Tp = _round_up(max(T, 128), 128)                 # lane-dense tag dim (store)
    pad_h, pad_t = Hp - H, Tp - T

    # ---- batch blocking: Bt rows per grid step so M = Bt*L targets >= 128 --
    Bt = max(1, min(B, pl.cdiv(128, L)))
    B_pad = _round_up(B, Bt)
    emb = embedding if B_pad == B else jnp.pad(
        embedding, ((0, B_pad - B), (0, 0), (0, 0)))

    # ---- pack weights (bf16 operands; zero channel/tag padding is exact) ---
    f32, bf16 = jnp.float32, jnp.bfloat16
    we = jnp.pad(params["e2f_w"], ((0, 0), (0, pad_h))).astype(bf16)
    be = jnp.pad(params["e2f_b"], (0, pad_h)).reshape(1, Hp).astype(f32)

    def conv_pack(name):
        w1 = jnp.pad(params[f"{name}_w1"], ((0, 0), (0, pad_h), (0, pad_h)))
        w2 = jnp.pad(params[f"{name}_w2"], ((0, 0), (0, pad_h), (0, pad_h)))
        # [3, Hp, 2Hp] (value|gate on N) -> tap-major [3Hp, 2Hp] for K-fused dot
        w = jnp.concatenate([w1, w2], axis=2).reshape(3 * Hp, 2 * Hp).astype(bf16)
        b = jnp.concatenate([jnp.pad(params[f"{name}_b1"], (0, pad_h)),
                             jnp.pad(params[f"{name}_b2"], (0, pad_h))]
                            ).reshape(1, 2 * Hp).astype(f32)
        return w, b

    w1c, b1c = conv_pack("c1")
    w2c, b2c = conv_pack("c2")
    w4c, b4c = conv_pack("c4")

    wt = jnp.pad(params["h2t_w"], ((0, pad_h), (0, pad_t))).astype(bf16)
    bt = jnp.pad(params["h2t_b"], (0, pad_t)).reshape(1, Tp).astype(f32)

    kernel = functools.partial(_fused_feature_kernel, dils=(1, 2, 4))
    grid = (B_pad // Bt,)

    def call(weight_mode):
        def const_spec(shape):
            n = len(shape)

            def idx(b):
                return (0,) * n

            if weight_mode is None:
                return pl.BlockSpec(shape, idx)
            return pl.BlockSpec(shape, idx, pipeline_mode=weight_mode)

        return pl.pallas_call(
            kernel,
            out_shape=jax.ShapeDtypeStruct((B_pad, L, Tp), embedding.dtype),
            grid=grid,
            in_specs=[
                pl.BlockSpec((Bt, L, E), lambda b: (b, 0, 0)),   # embedding (streamed)
                const_spec((E, Hp)),                             # e2f W   (resident)
                const_spec((1, Hp)),                             # e2f b
                const_spec((3 * Hp, 2 * Hp)),                    # conv1 W (value|gate)
                const_spec((1, 2 * Hp)),                         # conv1 b
                const_spec((3 * Hp, 2 * Hp)),                    # conv2 W
                const_spec((1, 2 * Hp)),                         # conv2 b
                const_spec((3 * Hp, 2 * Hp)),                    # conv4 W
                const_spec((1, 2 * Hp)),                         # conv4 b
                const_spec((Hp, Tp)),                            # hidden2tag W
                const_spec((1, Tp)),                             # hidden2tag b
            ],
            out_specs=pl.BlockSpec((Bt, L, Tp), lambda b: (b, 0, 0)),
            compiler_params=pltpu.CompilerParams(
                dimension_semantics=("parallel",),   # shard batch blocks over TCs (v7x)
                vmem_limit_bytes=64 * 1024 * 1024,   # bf16 weights keep this tiny; OK on v7x 64MiB
            ),
        )(emb, we, be, w1c, b1c, w2c, b2c, w4c, b4c, wt, bt)

    try:
        tags_full = call(pl.Buffered(1))             # single-buffer resident weights
    except Exception:
        # TODO(synk): drop this fallback once pipeline_mode=pl.Buffered(1) is
        # confirmed supported on every deployed jax version.
        tags_full = call(None)

    # conv_4(out).permute(2,0,1) then hidden2tag  ==  [B,L,T] -> [L,B,T]
    tags = tags_full[:B, :, :T].transpose(1, 0, 2)
    mask_out = mask.T                                # mask.transpose(0, 1)
    return tags, mask_out


if __name__ == "__main__":
    B, L, E, H, T = 2, 16, 24, 32, 8
    key = jax.random.PRNGKey(0)
    k_emb, k_par = jax.random.split(key)

    embedding = jax.random.normal(k_emb, (B, L, E), jnp.float32)
    mask = jnp.ones((B, L), jnp.int32)
    params = init_params(k_par, E, H, T)

    tags, mask_out = feature_extraction_forward(params, embedding, mask)
    jax.block_until_ready((tags, mask_out))

    ref_tags, ref_mask = _reference_forward(params, embedding, mask)

    assert tags.shape == (L, B, T)
    assert mask_out.shape == (L, B)
    assert bool(jnp.all(jnp.isfinite(tags)))
    # bf16 MXU operands vs. f32 reference: allow bf16-level tolerance.
    max_err = float(jnp.max(jnp.abs(tags - ref_tags)))
    assert bool(jnp.allclose(tags, ref_tags, atol=7e-2, rtol=7e-2)), f"max err {max_err}"
    assert bool(jnp.array_equal(mask_out, ref_mask))
    print("KERNEL_OK")
</pallas_src>

<mosaic_0001>
module attributes {stable_mosaic.version = 11 : i64} {
  func.func @_fused_feature_kernel(%arg0: i32, %arg1: memref<2x16x24xf32, #tpu.memory_space<vmem>>, %arg2: memref<24x128xbf16, #tpu.memory_space<vmem>>, %arg3: memref<1x128xf32, #tpu.memory_space<vmem>>, %arg4: memref<384x256xbf16, #tpu.memory_space<vmem>>, %arg5: memref<1x256xf32, #tpu.memory_space<vmem>>, %arg6: memref<384x256xbf16, #tpu.memory_space<vmem>>, %arg7: memref<1x256xf32, #tpu.memory_space<vmem>>, %arg8: memref<384x256xbf16, #tpu.memory_space<vmem>>, %arg9: memref<1x256xf32, #tpu.memory_space<vmem>>, %arg10: memref<128x128xbf16, #tpu.memory_space<vmem>>, %arg11: memref<1x128xf32, #tpu.memory_space<vmem>>, %arg12: memref<2x16x128xf32, #tpu.memory_space<vmem>>) attributes {dimension_semantics = [#tpu.dimension_semantics<parallel>], iteration_bounds = array<i64: 1>, scalar_prefetch = 0 : i64, scratch_operands = 0 : i64, tpu.core_type = #tpu.core_type<tc>, window_params = [{transform_indices = @transform_0, window_bounds = array<i64: 2, 16, 24>}, {pipeline_mode = #tpu.pipeline_mode<synchronous>, transform_indices = @transform_1, window_bounds = array<i64: 24, 128>}, {pipeline_mode = #tpu.pipeline_mode<synchronous>, transform_indices = @transform_2, window_bounds = array<i64: 1, 128>}, {pipeline_mode = #tpu.pipeline_mode<synchronous>, transform_indices = @transform_3, window_bounds = array<i64: 384, 256>}, {pipeline_mode = #tpu.pipeline_mode<synchronous>, transform_indices = @transform_4, window_bounds = array<i64: 1, 256>}, {pipeline_mode = #tpu.pipeline_mode<synchronous>, transform_indices = @transform_5, window_bounds = array<i64: 384, 256>}, {pipeline_mode = #tpu.pipeline_mode<synchronous>, transform_indices = @transform_6, window_bounds = array<i64: 1, 256>}, {pipeline_mode = #tpu.pipeline_mode<synchronous>, transform_indices = @transform_7, window_bounds = array<i64: 384, 256>}, {pipeline_mode = #tpu.pipeline_mode<synchronous>, transform_indices = @transform_8, window_bounds = array<i64: 1, 256>}, {pipeline_mode = #tpu.pipeline_mode<synchronous>, transform_indices = @transform_9, window_bounds = array<i64: 128, 128>}, {pipeline_mode = #tpu.pipeline_mode<synchronous>, transform_indices = @transform_10, window_bounds = array<i64: 1, 128>}, {transform_indices = @transform_11, window_bounds = array<i64: 2, 16, 128>}]} {
    %c0 = arith.constant 0 : index
    %c0_0 = arith.constant 0 : index
    %c0_1 = arith.constant 0 : index
    %0 = vector.load %arg1[%c0, %c0_0, %c0_1] : memref<2x16x24xf32, #tpu.memory_space<vmem>>, vector<2x16x24xf32>
    %1 = vector.shape_cast %0 : vector<2x16x24xf32> to vector<32x24xf32>
    %2 = arith.truncf %1 : vector<32x24xf32> to vector<32x24xbf16>
    %c0_2 = arith.constant 0 : index
    %c0_3 = arith.constant 0 : index
    %3 = vector.load %arg2[%c0_2, %c0_3] : memref<24x128xbf16, #tpu.memory_space<vmem>>, vector<24x128xbf16>
    %cst = arith.constant dense<0.000000e+00> : vector<32x128xf32>
    %4 = tpu.matmul %2, %3, %cst {dimension_numbers = #tpu.dot_dimension_numbers<[1], [0], [0], [1], [0, 0, 1, 1], [], []>} : vector<32x24xbf16>, vector<24x128xbf16>, vector<32x128xf32> -> vector<32x128xf32>
    %c0_4 = arith.constant 0 : index
    %c0_5 = arith.constant 0 : index
    %5 = vector.load %arg3[%c0_4, %c0_5] : memref<1x128xf32, #tpu.memory_space<vmem>>, vector<1x128xf32>
    %6 = vector.broadcast %5 : vector<1x128xf32> to vector<32x128xf32>
    %7 = arith.addf %4, %6 : vector<32x128xf32>
    %cst_6 = arith.constant 1.702000e+00 : f32
    %8 = vector.broadcast %cst_6 : f32 to vector<32x128xf32>
    %9 = arith.mulf %8, %7 : vector<32x128xf32>
    %10 = arith.negf %9 : vector<32x128xf32>
    %11 = math.exp %10 : vector<32x128xf32>
    %cst_7 = arith.constant 1.000000e+00 : f32
    %12 = vector.broadcast %cst_7 : f32 to vector<32x128xf32>
    %13 = arith.addf %12, %11 : vector<32x128xf32>
    %14 = arith.divf %12, %13 : vector<32x128xf32>
    %15 = arith.mulf %7, %14 : vector<32x128xf32>
    %16 = tpu.iota {dimensions = array<i32: 1>} : vector<2x16x128xi32>
    %17 = vector.shape_cast %16 : vector<2x16x128xi32> to vector<32x128xi32>
    %c1_i32 = arith.constant 1 : i32
    %18 = vector.broadcast %c1_i32 : i32 to vector<32x128xi32>
    %19 = arith.cmpi sge, %17, %18 : vector<32x128xi32>
    %c1_i32_8 = arith.constant 1 : i32
    %20 = tpu.dynamic_rotate %15 by %c1_i32_8 dim 0 : vector<32x128xf32>, i32 -> vector<32x128xf32>
    %cst_9 = arith.constant 0.000000e+00 : f32
    %21 = vector.broadcast %cst_9 : f32 to vector<32x128xf32>
    %22 = arith.select %19, %20, %21 : vector<32x128xi1>, vector<32x128xf32>
    %c15_i32 = arith.constant 15 : i32
    %23 = vector.broadcast %c15_i32 : i32 to vector<32x128xi32>
    %24 = arith.cmpi slt, %17, %23 : vector<32x128xi32>
    %c31_i32 = arith.constant 31 : i32
    %25 = tpu.dynamic_rotate %15 by %c31_i32 dim 0 : vector<32x128xf32>, i32 -> vector<32x128xf32>
    %cst_10 = arith.constant 0.000000e+00 : f32
    %26 = vector.broadcast %cst_10 : f32 to vector<32x128xf32>
    %27 = arith.select %24, %25, %26 : vector<32x128xi1>, vector<32x128xf32>
    %28 = arith.truncf %22 : vector<32x128xf32> to vector<32x128xbf16>
    %29 = arith.truncf %15 : vector<32x128xf32> to vector<32x128xbf16>
    %30 = arith.truncf %27 : vector<32x128xf32> to vector<32x128xbf16>
    %31 = tpu.concatenate %28, %29, %30 in 1 : vector<32x128xbf16>, vector<32x128xbf16>, vector<32x128xbf16> -> vector<32x384xbf16>
    %c0_11 = arith.constant 0 : index
    %c0_12 = arith.constant 0 : index
    %32 = vector.load %arg4[%c0_11, %c0_12] : memref<384x256xbf16, #tpu.memory_space<vmem>>, vector<384x256xbf16>
    %cst_13 = arith.constant dense<0.000000e+00> : vector<32x256xf32>
    %33 = tpu.matmul %31, %32, %cst_13 {dimension_numbers = #tpu.dot_dimension_numbers<[1], [0], [0], [1], [0, 0, 1, 1], [], []>} : vector<32x384xbf16>, vector<384x256xbf16>, vector<32x256xf32> -> vector<32x256xf32>
    %c0_14 = arith.constant 0 : index
    %c0_15 = arith.constant 0 : index
    %34 = vector.load %arg5[%c0_14, %c0_15] : memref<1x256xf32, #tpu.memory_space<vmem>>, vector<1x256xf32>
    %35 = vector.broadcast %34 : vector<1x256xf32> to vector<32x256xf32>
    %36 = arith.addf %33, %35 : vector<32x256xf32>
    %37 = vector.extract_strided_slice %36 {offsets = [0, 0], sizes = [32, 128], strides = [1, 1]} : vector<32x256xf32> to vector<32x128xf32>
    %38 = vector.extract_strided_slice %36 {offsets = [0, 128], sizes = [32, 128], strides = [1, 1]} : vector<32x256xf32> to vector<32x128xf32>
    %39 = arith.negf %38 : vector<32x128xf32>
    %40 = math.exp %39 : vector<32x128xf32>
    %cst_16 = arith.constant 1.000000e+00 : f32
    %41 = vector.broadcast %cst_16 : f32 to vector<32x128xf32>
    %42 = arith.addf %41, %40 : vector<32x128xf32>
    %43 = arith.divf %41, %42 : vector<32x128xf32>
    %44 = arith.mulf %37, %43 : vector<32x128xf32>
    %45 = arith.addf %44, %15 : vector<32x128xf32>
    %c2_i32 = arith.constant 2 : i32
    %46 = vector.broadcast %c2_i32 : i32 to vector<32x128xi32>
    %47 = arith.cmpi sge, %17, %46 : vector<32x128xi32>
    %c2_i32_17 = arith.constant 2 : i32
    %48 = tpu.dynamic_rotate %45 by %c2_i32_17 dim 0 : vector<32x128xf32>, i32 -> vector<32x128xf32>
    %cst_18 = arith.constant 0.000000e+00 : f32
    %49 = vector.broadcast %cst_18 : f32 to vector<32x128xf32>
    %50 = arith.select %47, %48, %49 : vector<32x128xi1>, vector<32x128xf32>
    %c14_i32 = arith.constant 14 : i32
    %51 = vector.broadcast %c14_i32 : i32 to vector<32x128xi32>
    %52 = arith.cmpi slt, %17, %51 : vector<32x128xi32>
    %c30_i32 = arith.constant 30 : i32
    %53 = tpu.dynamic_rotate %45 by %c30_i32 dim 0 : vector<32x128xf32>, i32 -> vector<32x128xf32>
    %cst_19 = arith.constant 0.000000e+00 : f32
    %54 = vector.broadcast %cst_19 : f32 to vector<32x128xf32>
    %55 = arith.select %52, %53, %54 : vector<32x128xi1>, vector<32x128xf32>
    %56 = arith.truncf %50 : vector<32x128xf32> to vector<32x128xbf16>
    %57 = arith.truncf %45 : vector<32x128xf32> to vector<32x128xbf16>
    %58 = arith.truncf %55 : vector<32x128xf32> to vector<32x128xbf16>
    %59 = tpu.concatenate %56, %57, %58 in 1 : vector<32x128xbf16>, vector<32x128xbf16>, vector<32x128xbf16> -> vector<32x384xbf16>
    %c0_20 = arith.constant 0 : index
    %c0_21 = arith.constant 0 : index
    %60 = vector.load %arg6[%c0_20, %c0_21] : memref<384x256xbf16, #tpu.memory_space<vmem>>, vector<384x256xbf16>
    %cst_22 = arith.constant dense<0.000000e+00> : vector<32x256xf32>
    %61 = tpu.matmul %59, %60, %cst_22 {dimension_numbers = #tpu.dot_dimension_numbers<[1], [0], [0], [1], [0, 0, 1, 1], [], []>} : vector<32x384xbf16>, vector<384x256xbf16>, vector<32x256xf32> -> vector<32x256xf32>
    %c0_23 = arith.constant 0 : index
    %c0_24 = arith.constant 0 : index
    %62 = vector.load %arg7[%c0_23, %c0_24] : memref<1x256xf32, #tpu.memory_space<vmem>>, vector<1x256xf32>
    %63 = vector.broadcast %62 : vector<1x256xf32> to vector<32x256xf32>
    %64 = arith.addf %61, %63 : vector<32x256xf32>
    %65 = vector.extract_strided_slice %64 {offsets = [0, 0], sizes = [32, 128], strides = [1, 1]} : vector<32x256xf32> to vector<32x128xf32>
    %66 = vector.extract_strided_slice %64 {offsets = [0, 128], sizes = [32, 128], strides = [1, 1]} : vector<32x256xf32> to vector<32x128xf32>
    %67 = arith.negf %66 : vector<32x128xf32>
    %68 = math.exp %67 : vector<32x128xf32>
    %cst_25 = arith.constant 1.000000e+00 : f32
    %69 = vector.broadcast %cst_25 : f32 to vector<32x128xf32>
    %70 = arith.addf %69, %68 : vector<32x128xf32>
    %71 = arith.divf %69, %70 : vector<32x128xf32>
    %72 = arith.mulf %65, %71 : vector<32x128xf32>
    %73 = arith.addf %72, %45 : vector<32x128xf32>
    %c4_i32 = arith.constant 4 : i32
    %74 = vector.broadcast %c4_i32 : i32 to vector<32x128xi32>
    %75 = arith.cmpi sge, %17, %74 : vector<32x128xi32>
    %c4_i32_26 = arith.constant 4 : i32
    %76 = tpu.dynamic_rotate %73 by %c4_i32_26 dim 0 : vector<32x128xf32>, i32 -> vector<32x128xf32>
    %cst_27 = arith.constant 0.000000e+00 : f32
    %77 = vector.broadcast %cst_27 : f32 to vector<32x128xf32>
    %78 = arith.select %75, %76, %77 : vector<32x128xi1>, vector<32x128xf32>
    %c12_i32 = arith.constant 12 : i32
    %79 = vector.broadcast %c12_i32 : i32 to vector<32x128xi32>
    %80 = arith.cmpi slt, %17, %79 : vector<32x128xi32>
    %c28_i32 = arith.constant 28 : i32
    %81 = tpu.dynamic_rotate %73 by %c28_i32 dim 0 : vector<32x128xf32>, i32 -> vector<32x128xf32>
    %cst_28 = arith.constant 0.000000e+00 : f32
    %82 = vector.broadcast %cst_28 : f32 to vector<32x128xf32>
    %83 = arith.select %80, %81, %82 : vector<32x128xi1>, vector<32x128xf32>
    %84 = arith.truncf %78 : vector<32x128xf32> to vector<32x128xbf16>
    %85 = arith.truncf %73 : vector<32x128xf32> to vector<32x128xbf16>
    %86 = arith.truncf %83 : vector<32x128xf32> to vector<32x128xbf16>
    %87 = tpu.concatenate %84, %85, %86 in 1 : vector<32x128xbf16>, vector<32x128xbf16>, vector<32x128xbf16> -> vector<32x384xbf16>
    %c0_29 = arith.constant 0 : index
    %c0_30 = arith.constant 0 : index
    %88 = vector.load %arg8[%c0_29, %c0_30] : memref<384x256xbf16, #tpu.memory_space<vmem>>, vector<384x256xbf16>
    %cst_31 = arith.constant dense<0.000000e+00> : vector<32x256xf32>
    %89 = tpu.matmul %87, %88, %cst_31 {dimension_numbers = #tpu.dot_dimension_numbers<[1], [0], [0], [1], [0, 0, 1, 1], [], []>} : vector<32x384xbf16>, vector<384x256xbf16>, vector<32x256xf32> -> vector<32x256xf32>
    %c0_32 = arith.constant 0 : index
    %c0_33 = arith.constant 0 : index
    %90 = vector.load %arg9[%c0_32, %c0_33] : memref<1x256xf32, #tpu.memory_space<vmem>>, vector<1x256xf32>
    %91 = vector.broadcast %90 : vector<1x256xf32> to vector<32x256xf32>
    %92 = arith.addf %89, %91 : vector<32x256xf32>
    %93 = vector.extract_strided_slice %92 {offsets = [0, 0], sizes = [32, 128], strides = [1, 1]} : vector<32x256xf32> to vector<32x128xf32>
    %94 = vector.extract_strided_slice %92 {offsets = [0, 128], sizes = [32, 128], strides = [1, 1]} : vector<32x256xf32> to vector<32x128xf32>
    %95 = arith.negf %94 : vector<32x128xf32>
    %96 = math.exp %95 : vector<32x128xf32>
    %cst_34 = arith.constant 1.000000e+00 : f32
    %97 = vector.broadcast %cst_34 : f32 to vector<32x128xf32>
    %98 = arith.addf %97, %96 : vector<32x128xf32>
    %99 = arith.divf %97, %98 : vector<32x128xf32>
    %100 = arith.mulf %93, %99 : vector<32x128xf32>
    %101 = arith.addf %100, %73 : vector<32x128xf32>
    %102 = arith.truncf %101 : vector<32x128xf32> to vector<32x128xbf16>
    %c0_35 = arith.constant 0 : index
    %c0_36 = arith.constant 0 : index
    %103 = vector.load %arg10[%c0_35, %c0_36] : memref<128x128xbf16, #tpu.memory_space<vmem>>, vector<128x128xbf16>
    %cst_37 = arith.constant dense<0.000000e+00> : vector<32x128xf32>
    %104 = tpu.matmul %102, %103, %cst_37 {dimension_numbers = #tpu.dot_dimension_numbers<[1], [0], [0], [1], [0, 0, 1, 1], [], []>} : vector<32x128xbf16>, vector<128x128xbf16>, vector<32x128xf32> -> vector<32x128xf32>
    %c0_38 = arith.constant 0 : index
    %c0_39 = arith.constant 0 : index
    %105 = vector.load %arg11[%c0_38, %c0_39] : memref<1x128xf32, #tpu.memory_space<vmem>>, vector<1x128xf32>
    %106 = vector.broadcast %105 : vector<1x128xf32> to vector<32x128xf32>
    %107 = arith.addf %104, %106 : vector<32x128xf32>
    %108 = vector.shape_cast %107 : vector<32x128xf32> to vector<2x16x128xf32>
    %c0_40 = arith.constant 0 : index
    %c0_41 = arith.constant 0 : index
    %c0_42 = arith.constant 0 : index
    %109 = vector.load %arg12[%c0_40, %c0_41, %c0_42] : memref<2x16x128xf32, #tpu.memory_space<vmem>>, vector<2x16x128xf32>
    tpu.vector_store %arg12[%c0_40, %c0_41, %c0_42], %108 {strides = array<i32>} : memref<2x16x128xf32, #tpu.memory_space<vmem>>, vector<2x16x128xf32>,
    return
  }
  func.func @transform_0(%arg0: i32) -> (i32, i32, i32) {
    %c0_i32 = arith.constant 0 : i32
    %c0_i32_0 = arith.constant 0 : i32
    %c0_i32_1 = arith.constant 0 : i32
    return %arg0, %c0_i32, %c0_i32_0 : i32, i32, i32
  }
  func.func @transform_1(%arg0: i32) -> (i32, i32) {
    %c0_i32 = arith.constant 0 : i32
    %c0_i32_0 = arith.constant 0 : i32
    %c0_i32_1 = arith.constant 0 : i32
    return %c0_i32, %c0_i32_0 : i32, i32
  }
  func.func @transform_2(%arg0: i32) -> (i32, i32) {
    %c0_i32 = arith.constant 0 : i32
    %c0_i32_0 = arith.constant 0 : i32
    %c0_i32_1 = arith.constant 0 : i32
    return %c0_i32, %c0_i32_0 : i32, i32
  }
  func.func @transform_3(%arg0: i32) -> (i32, i32) {
    %c0_i32 = arith.constant 0 : i32
    %c0_i32_0 = arith.constant 0 : i32
    %c0_i32_1 = arith.constant 0 : i32
    return %c0_i32, %c0_i32_0 : i32, i32
  }
  func.func @transform_4(%arg0: i32) -> (i32, i32) {
    %c0_i32 = arith.constant 0 : i32
    %c0_i32_0 = arith.constant 0 : i32
    %c0_i32_1 = arith.constant 0 : i32
    return %c0_i32, %c0_i32_0 : i32, i32
  }
  func.func @transform_5(%arg0: i32) -> (i32, i32) {
    %c0_i32 = arith.constant 0 : i32
    %c0_i32_0 = arith.constant 0 : i32
    %c0_i32_1 = arith.constant 0 : i32
    return %c0_i32, %c0_i32_0 : i32, i32
  }
  func.func @transform_6(%arg0: i32) -> (i32, i32) {
    %c0_i32 = arith.constant 0 : i32
    %c0_i32_0 = arith.constant 0 : i32
    %c0_i32_1 = arith.constant 0 : i32
    return %c0_i32, %c0_i32_0 : i32, i32
  }
  func.func @transform_7(%arg0: i32) -> (i32, i32) {
    %c0_i32 = arith.constant 0 : i32
    %c0_i32_0 = arith.constant 0 : i32
    %c0_i32_1 = arith.constant 0 : i32
    return %c0_i32, %c0_i32_0 : i32, i32
  }
  func.func @transform_8(%arg0: i32) -> (i32, i32) {
    %c0_i32 = arith.constant 0 : i32
    %c0_i32_0 = arith.constant 0 : i32
    %c0_i32_1 = arith.constant 0 : i32
    return %c0_i32, %c0_i32_0 : i32, i32
  }
  func.func @transform_9(%arg0: i32) -> (i32, i32) {
    %c0_i32 = arith.constant 0 : i32
    %c0_i32_0 = arith.constant 0 : i32
    %c0_i32_1 = arith.constant 0 : i32
    return %c0_i32, %c0_i32_0 : i32, i32
  }
  func.func @transform_10(%arg0: i32) -> (i32, i32) {
    %c0_i32 = arith.constant 0 : i32
    %c0_i32_0 = arith.constant 0 : i32
    %c0_i32_1 = arith.constant 0 : i32
    return %c0_i32, %c0_i32_0 : i32, i32
  }
  func.func @transform_11(%arg0: i32) -> (i32, i32, i32) {
    %c0_i32 = arith.constant 0 : i32
    %c0_i32_0 = arith.constant 0 : i32
    %c0_i32_1 = arith.constant 0 : i32
    return %arg0, %c0_i32, %c0_i32_0 : i32, i32, i32
  }
}

module attributes {stable_mosaic.version = 11 : i64} {
  func.func @_fused_feature_kernel(%arg0: i32, %arg1: memref<2x16x24xf32, #tpu.memory_space<vmem>>, %arg2: memref<24x128xbf16, #tpu.memory_space<vmem>>, %arg3: memref<1x128xf32, #tpu.memory_space<vmem>>, %arg4: memref<384x256xbf16, #tpu.memory_space<vmem>>, %arg5: memref<1x256xf32, #tpu.memory_space<vmem>>, %arg6: memref<384x256xbf16, #tpu.memory_space<vmem>>, %arg7: memref<1x256xf32, #tpu.memory_space<vmem>>, %arg8: memref<384x256xbf16, #tpu.memory_space<vmem>>, %arg9: memref<1x256xf32, #tpu.memory_space<vmem>>, %arg10: memref<128x128xbf16, #tpu.memory_space<vmem>>, %arg11: memref<1x128xf32, #tpu.memory_space<vmem>>, %arg12: memref<2x16x128xf32, #tpu.memory_space<vmem>>) attributes {dimension_semantics = [#tpu.dimension_semantics<parallel>], iteration_bounds = array<i64: 1>, scalar_prefetch = 0 : i64, scratch_operands = 0 : i64, tpu.core_type = #tpu.core_type<tc>, window_params = [{transform_indices = @transform_0, window_bounds = array<i64: 2, 16, 24>}, {pipeline_mode = #tpu.pipeline_mode<synchronous>, transform_indices = @transform_1, window_bounds = array<i64: 24, 128>}, {pipeline_mode = #tpu.pipeline_mode<synchronous>, transform_indices = @transform_2, window_bounds = array<i64: 1, 128>}, {pipeline_mode = #tpu.pipeline_mode<synchronous>, transform_indices = @transform_3, window_bounds = array<i64: 384, 256>}, {pipeline_mode = #tpu.pipeline_mode<synchronous>, transform_indices = @transform_4, window_bounds = array<i64: 1, 256>}, {pipeline_mode = #tpu.pipeline_mode<synchronous>, transform_indices = @transform_5, window_bounds = array<i64: 384, 256>}, {pipeline_mode = #tpu.pipeline_mode<synchronous>, transform_indices = @transform_6, window_bounds = array<i64: 1, 256>}, {pipeline_mode = #tpu.pipeline_mode<synchronous>, transform_indices = @transform_7, window_bounds = array<i64: 384, 256>}, {pipeline_mode = #tpu.pipeline_mode<synchronous>, transform_indices = @transform_8, window_bounds = array<i64: 1, 256>}, {pipeline_mode = #tpu.pipeline_mode<synchronous>, transform_indices = @transform_9, window_bounds = array<i64: 128, 128>}, {pipeline_mode = #tpu.pipeline_mode<synchronous>, transform_indices = @transform_10, window_bounds = array<i64: 1, 128>}, {transform_indices = @transform_11, window_bounds = array<i64: 2, 16, 128>}]} {
    %c0 = arith.constant 0 : index
    %c0_0 = arith.constant 0 : index
    %c0_1 = arith.constant 0 : index
    %0 = vector.load %arg1[%c0, %c0_0, %c0_1] : memref<2x16x24xf32, #tpu.memory_space<vmem>>, vector<2x16x24xf32>
    %1 = vector.shape_cast %0 : vector<2x16x24xf32> to vector<32x24xf32>
    %2 = arith.truncf %1 : vector<32x24xf32> to vector<32x24xbf16>
    %c0_2 = arith.constant 0 : index
    %c0_3 = arith.constant 0 : index
    %3 = vector.load %arg2[%c0_2, %c0_3] : memref<24x128xbf16, #tpu.memory_space<vmem>>, vector<24x128xbf16>
    %cst = arith.constant dense<0.000000e+00> : vector<32x128xf32>
    %4 = tpu.matmul %2, %3, %cst {dimension_numbers = #tpu.dot_dimension_numbers<[1], [0], [0], [1], [0, 0, 1, 1], [], []>} : vector<32x24xbf16>, vector<24x128xbf16>, vector<32x128xf32> -> vector<32x128xf32>
    %c0_4 = arith.constant 0 : index
    %c0_5 = arith.constant 0 : index
    %5 = vector.load %arg3[%c0_4, %c0_5] : memref<1x128xf32, #tpu.memory_space<vmem>>, vector<1x128xf32>
    %6 = vector.broadcast %5 : vector<1x128xf32> to vector<32x128xf32>
    %7 = arith.addf %4, %6 : vector<32x128xf32>
    %cst_6 = arith.constant 1.702000e+00 : f32
    %8 = vector.broadcast %cst_6 : f32 to vector<32x128xf32>
    %9 = arith.mulf %8, %7 : vector<32x128xf32>
    %10 = arith.negf %9 : vector<32x128xf32>
    %11 = math.exp %10 : vector<32x128xf32>
    %cst_7 = arith.constant 1.000000e+00 : f32
    %12 = vector.broadcast %cst_7 : f32 to vector<32x128xf32>
    %13 = arith.addf %12, %11 : vector<32x128xf32>
    %14 = arith.divf %12, %13 : vector<32x128xf32>
    %15 = arith.mulf %7, %14 : vector<32x128xf32>
    %16 = tpu.iota {dimensions = array<i32: 1>} : vector<2x16x128xi32>
    %17 = vector.shape_cast %16 : vector<2x16x128xi32> to vector<32x128xi32>
    %c1_i32 = arith.constant 1 : i32
    %18 = vector.broadcast %c1_i32 : i32 to vector<32x128xi32>
    %19 = arith.cmpi sge, %17, %18 : vector<32x128xi32>
    %c1_i32_8 = arith.constant 1 : i32
    %20 = tpu.dynamic_rotate %15 by %c1_i32_8 dim 0 : vector<32x128xf32>, i32 -> vector<32x128xf32>
    %cst_9 = arith.constant 0.000000e+00 : f32
    %21 = vector.broadcast %cst_9 : f32 to vector<32x128xf32>
    %22 = arith.select %19, %20, %21 : vector<32x128xi1>, vector<32x128xf32>
    %c15_i32 = arith.constant 15 : i32
    %23 = vector.broadcast %c15_i32 : i32 to vector<32x128xi32>
    %24 = arith.cmpi slt, %17, %23 : vector<32x128xi32>
    %c31_i32 = arith.constant 31 : i32
    %25 = tpu.dynamic_rotate %15 by %c31_i32 dim 0 : vector<32x128xf32>, i32 -> vector<32x128xf32>
    %cst_10 = arith.constant 0.000000e+00 : f32
    %26 = vector.broadcast %cst_10 : f32 to vector<32x128xf32>
    %27 = arith.select %24, %25, %26 : vector<32x128xi1>, vector<32x128xf32>
    %28 = arith.truncf %22 : vector<32x128xf32> to vector<32x128xbf16>
    %29 = arith.truncf %15 : vector<32x128xf32> to vector<32x128xbf16>
    %30 = arith.truncf %27 : vector<32x128xf32> to vector<32x128xbf16>
    %31 = tpu.concatenate %28, %29, %30 in 1 : vector<32x128xbf16>, vector<32x128xbf16>, vector<32x128xbf16> -> vector<32x384xbf16>
    %c0_11 = arith.constant 0 : index
    %c0_12 = arith.constant 0 : index
    %32 = vector.load %arg4[%c0_11, %c0_12] : memref<384x256xbf16, #tpu.memory_space<vmem>>, vector<384x256xbf16>
    %cst_13 = arith.constant dense<0.000000e+00> : vector<32x256xf32>
    %33 = tpu.matmul %31, %32, %cst_13 {dimension_numbers = #tpu.dot_dimension_numbers<[1], [0], [0], [1], [0, 0, 1, 1], [], []>} : vector<32x384xbf16>, vector<384x256xbf16>, vector<32x256xf32> -> vector<32x256xf32>
    %c0_14 = arith.constant 0 : index
    %c0_15 = arith.constant 0 : index
    %34 = vector.load %arg5[%c0_14, %c0_15] : memref<1x256xf32, #tpu.memory_space<vmem>>, vector<1x256xf32>
    %35 = vector.broadcast %34 : vector<1x256xf32> to vector<32x256xf32>
    %36 = arith.addf %33, %35 : vector<32x256xf32>
    %37 = vector.extract_strided_slice %36 {offsets = [0, 0], sizes = [32, 128], strides = [1, 1]} : vector<32x256xf32> to vector<32x128xf32>
    %38 = vector.extract_strided_slice %36 {offsets = [0, 128], sizes = [32, 128], strides = [1, 1]} : vector<32x256xf32> to vector<32x128xf32>
    %39 = arith.negf %38 : vector<32x128xf32>
    %40 = math.exp %39 : vector<32x128xf32>
    %cst_16 = arith.constant 1.000000e+00 : f32
    %41 = vector.broadcast %cst_16 : f32 to vector<32x128xf32>
    %42 = arith.addf %41, %40 : vector<32x128xf32>
    %43 = arith.divf %41, %42 : vector<32x128xf32>
    %44 = arith.mulf %37, %43 : vector<32x128xf32>
    %45 = arith.addf %44, %15 : vector<32x128xf32>
    %c2_i32 = arith.constant 2 : i32
    %46 = vector.broadcast %c2_i32 : i32 to vector<32x128xi32>
    %47 = arith.cmpi sge, %17, %46 : vector<32x128xi32>
    %c2_i32_17 = arith.constant 2 : i32
    %48 = tpu.dynamic_rotate %45 by %c2_i32_17 dim 0 : vector<32x128xf32>, i32 -> vector<32x128xf32>
    %cst_18 = arith.constant 0.000000e+00 : f32
    %49 = vector.broadcast %cst_18 : f32 to vector<32x128xf32>
    %50 = arith.select %47, %48, %49 : vector<32x128xi1>, vector<32x128xf32>
    %c14_i32 = arith.constant 14 : i32
    %51 = vector.broadcast %c14_i32 : i32 to vector<32x128xi32>
    %52 = arith.cmpi slt, %17, %51 : vector<32x128xi32>
    %c30_i32 = arith.constant 30 : i32
    %53 = tpu.dynamic_rotate %45 by %c30_i32 dim 0 : vector<32x128xf32>, i32 -> vector<32x128xf32>
    %cst_19 = arith.constant 0.000000e+00 : f32
    %54 = vector.broadcast %cst_19 : f32 to vector<32x128xf32>
    %55 = arith.select %52, %53, %54 : vector<32x128xi1>, vector<32x128xf32>
    %56 = arith.truncf %50 : vector<32x128xf32> to vector<32x128xbf16>
    %57 = arith.truncf %45 : vector<32x128xf32> to vector<32x128xbf16>
    %58 = arith.truncf %55 : vector<32x128xf32> to vector<32x128xbf16>
    %59 = tpu.concatenate %56, %57, %58 in 1 : vector<32x128xbf16>, vector<32x128xbf16>, vector<32x128xbf16> -> vector<32x384xbf16>
    %c0_20 = arith.constant 0 : index
    %c0_21 = arith.constant 0 : index
    %60 = vector.load %arg6[%c0_20, %c0_21] : memref<384x256xbf16, #tpu.memory_space<vmem>>, vector<384x256xbf16>
    %cst_22 = arith.constant dense<0.000000e+00> : vector<32x256xf32>
    %61 = tpu.matmul %59, %60, %cst_22 {dimension_numbers = #tpu.dot_dimension_numbers<[1], [0], [0], [1], [0, 0, 1, 1], [], []>} : vector<32x384xbf16>, vector<384x256xbf16>, vector<32x256xf32> -> vector<32x256xf32>
    %c0_23 = arith.constant 0 : index
    %c0_24 = arith.constant 0 : index
    %62 = vector.load %arg7[%c0_23, %c0_24] : memref<1x256xf32, #tpu.memory_space<vmem>>, vector<1x256xf32>
    %63 = vector.broadcast %62 : vector<1x256xf32> to vector<32x256xf32>
    %64 = arith.addf %61, %63 : vector<32x256xf32>
    %65 = vector.extract_strided_slice %64 {offsets = [0, 0], sizes = [32, 128], strides = [1, 1]} : vector<32x256xf32> to vector<32x128xf32>
    %66 = vector.extract_strided_slice %64 {offsets = [0, 128], sizes = [32, 128], strides = [1, 1]} : vector<32x256xf32> to vector<32x128xf32>
    %67 = arith.negf %66 : vector<32x128xf32>
    %68 = math.exp %67 : vector<32x128xf32>
    %cst_25 = arith.constant 1.000000e+00 : f32
    %69 = vector.broadcast %cst_25 : f32 to vector<32x128xf32>
    %70 = arith.addf %69, %68 : vector<32x128xf32>
    %71 = arith.divf %69, %70 : vector<32x128xf32>
    %72 = arith.mulf %65, %71 : vector<32x128xf32>
    %73 = arith.addf %72, %45 : vector<32x128xf32>
    %c4_i32 = arith.constant 4 : i32
    %74 = vector.broadcast %c4_i32 : i32 to vector<32x128xi32>
    %75 = arith.cmpi sge, %17, %74 : vector<32x128xi32>
    %c4_i32_26 = arith.constant 4 : i32
    %76 = tpu.dynamic_rotate %73 by %c4_i32_26 dim 0 : vector<32x128xf32>, i32 -> vector<32x128xf32>
    %cst_27 = arith.constant 0.000000e+00 : f32
    %77 = vector.broadcast %cst_27 : f32 to vector<32x128xf32>
    %78 = arith.select %75, %76, %77 : vector<32x128xi1>, vector<32x128xf32>
    %c12_i32 = arith.constant 12 : i32
    %79 = vector.broadcast %c12_i32 : i32 to vector<32x128xi32>
    %80 = arith.cmpi slt, %17, %79 : vector<32x128xi32>
    %c28_i32 = arith.constant 28 : i32
    %81 = tpu.dynamic_rotate %73 by %c28_i32 dim 0 : vector<32x128xf32>, i32 -> vector<32x128xf32>
    %cst_28 = arith.constant 0.000000e+00 : f32
    %82 = vector.broadcast %cst_28 : f32 to vector<32x128xf32>
    %83 = arith.select %80, %81, %82 : vector<32x128xi1>, vector<32x128xf32>
    %84 = arith.truncf %78 : vector<32x128xf32> to vector<32x128xbf16>
    %85 = arith.truncf %73 : vector<32x128xf32> to vector<32x128xbf16>
    %86 = arith.truncf %83 : vector<32x128xf32> to vector<32x128xbf16>
    %87 = tpu.concatenate %84, %85, %86 in 1 : vector<32x128xbf16>, vector<32x128xbf16>, vector<32x128xbf16> -> vector<32x384xbf16>
    %c0_29 = arith.constant 0 : index
    %c0_30 = arith.constant 0 : index
    %88 = vector.load %arg8[%c0_29, %c0_30] : memref<384x256xbf16, #tpu.memory_space<vmem>>, vector<384x256xbf16>
    %cst_31 = arith.constant dense<0.000000e+00> : vector<32x256xf32>
    %89 = tpu.matmul %87, %88, %cst_31 {dimension_numbers = #tpu.dot_dimension_numbers<[1], [0], [0], [1], [0, 0, 1, 1], [], []>} : vector<32x384xbf16>, vector<384x256xbf16>, vector<32x256xf32> -> vector<32x256xf32>
    %c0_32 = arith.constant 0 : index
    %c0_33 = arith.constant 0 : index
    %90 = vector.load %arg9[%c0_32, %c0_33] : memref<1x256xf32, #tpu.memory_space<vmem>>, vector<1x256xf32>
    %91 = vector.broadcast %90 : vector<1x256xf32> to vector<32x256xf32>
    %92 = arith.addf %89, %91 : vector<32x256xf32>
    %93 = vector.extract_strided_slice %92 {offsets = [0, 0], sizes = [32, 128], strides = [1, 1]} : vector<32x256xf32> to vector<32x128xf32>
    %94 = vector.extract_strided_slice %92 {offsets = [0, 128], sizes = [32, 128], strides = [1, 1]} : vector<32x256xf32> to vector<32x128xf32>
    %95 = arith.negf %94 : vector<32x128xf32>
    %96 = math.exp %95 : vector<32x128xf32>
    %cst_34 = arith.constant 1.000000e+00 : f32
    %97 = vector.broadcast %cst_34 : f32 to vector<32x128xf32>
    %98 = arith.addf %97, %96 : vector<32x128xf32>
    %99 = arith.divf %97, %98 : vector<32x128xf32>
    %100 = arith.mulf %93, %99 : vector<32x128xf32>
    %101 = arith.addf %100, %73 : vector<32x128xf32>
    %102 = arith.truncf %101 : vector<32x128xf32> to vector<32x128xbf16>
    %c0_35 = arith.constant 0 : index
    %c0_36 = arith.constant 0 : index
    %103 = vector.load %arg10[%c0_35, %c0_36] : memref<128x128xbf16, #tpu.memory_space<vmem>>, vector<128x128xbf16>
    %cst_37 = arith.constant dense<0.000000e+00> : vector<32x128xf32>
    %104 = tpu.matmul %102, %103, %cst_37 {dimension_numbers = #tpu.dot_dimension_numbers<[1], [0], [0], [1], [0, 0, 1, 1], [], []>} : vector<32x128xbf16>, vector<128x128xbf16>, vector<32x128xf32> -> vector<32x128xf32>
    %c0_38 = arith.constant 0 : index
    %c0_39 = arith.constant 0 : index
    %105 = vector.load %arg11[%c0_38, %c0_39] : memref<1x128xf32, #tpu.memory_space<vmem>>, vector<1x128xf32>
    %106 = vector.broadcast %105 : vector<1x128xf32> to vector<32x128xf32>
    %107 = arith.addf %104, %106 : vector<32x128xf32>
    %108 = vector.shape_cast %107 : vector<32x128xf32> to vector<2x16x128xf32>
    %c0_40 = arith.constant 0 : index
    %c0_41 = arith.constant 0 : index
    %c0_42 = arith.constant 0 : index
    %109 = vector.load %arg12[%c0_40, %c0_41, %c0_42] : memref<2x16x128xf32, #tpu.memory_space<vmem>>, vector<2x16x128xf32>
    tpu.vector_store %arg12[%c0_40, %c0_41, %c0_42], %108 {strides = array<i32>} : memref<2x16x128xf32, #tpu.memory_space<vmem>>, vector<2x16x128xf32>,
    return
  }
  func.func @transform_0(%arg0: i32) -> (i32, i32, i32) {
    %c0_i32 = arith.constant 0 : i32
    %c0_i32_0 = arith.constant 0 : i32
    %c0_i32_1 = arith.constant 0 : i32
    return %arg0, %c0_i32, %c0_i32_0 : i32, i32, i32
  }
  func.func @transform_1(%arg0: i32) -> (i32, i32) {
    %c0_i32 = arith.constant 0 : i32
    %c0_i32_0 = arith.constant 0 : i32
    %c0_i32_1 = arith.constant 0 : i32
    return %c0_i32, %c0_i32_0 : i32, i32
  }
  func.func @transform_2(%arg0: i32) -> (i32, i32) {
    %c0_i32 = arith.constant 0 : i32
    %c0_i32_0 = arith.constant 0 : i32
    %c0_i32_1 = arith.constant 0 : i32
    return %c0_i32, %c0_i32_0 : i32, i32
  }
  func.func @transform_3(%arg0: i32) -> (i32, i32) {
    %c0_i32 = arith.constant 0 : i32
    %c0_i32_0 = arith.constant 0 : i32
    %c0_i32_1 = arith.constant 0 : i32
    return %c0_i32, %c0_i32_0 : i32, i32
  }
  func.func @transform_4(%arg0: i32) -> (i32, i32) {
    %c0_i32 = arith.constant 0 : i32
    %c0_i32_0 = arith.constant 0 : i32
    %c0_i32_1 = arith.constant 0 : i32
    return %c0_i32, %c0_i32_0 : i32, i32
  }
  func.func @transform_5(%arg0: i32) -> (i32, i32) {
    %c0_i32 = arith.constant 0 : i32
    %c0_i32_0 = arith.constant 0 : i32
    %c0_i32_1 = arith.constant 0 : i32
    return %c0_i32, %c0_i32_0 : i32, i32
  }
  func.func @transform_6(%arg0: i32) -> (i32, i32) {
    %c0_i32 = arith.constant 0 : i32
    %c0_i32_0 = arith.constant 0 : i32
    %c0_i32_1 = arith.constant 0 : i32
    return %c0_i32, %c0_i32_0 : i32, i32
  }
  func.func @transform_7(%arg0: i32) -> (i32, i32) {
    %c0_i32 = arith.constant 0 : i32
    %c0_i32_0 = arith.constant 0 : i32
    %c0_i32_1 = arith.constant 0 : i32
    return %c0_i32, %c0_i32_0 : i32, i32
  }
  func.func @transform_8(%arg0: i32) -> (i32, i32) {
    %c0_i32 = arith.constant 0 : i32
    %c0_i32_0 = arith.constant 0 : i32
    %c0_i32_1 = arith.constant 0 : i32
    return %c0_i32, %c0_i32_0 : i32, i32
  }
  func.func @transform_9(%arg0: i32) -> (i32, i32) {
    %c0_i32 = arith.constant 0 : i32
    %c0_i32_0 = arith.constant 0 : i32
    %c0_i32_1 = arith.constant 0 : i32
    return %c0_i32, %c0_i32_0 : i32, i32
  }
  func.func @transform_10(%arg0: i32) -> (i32, i32) {
    %c0_i32 = arith.constant 0 : i32
    %c0_i32_0 = arith.constant 0 : i32
    %c0_i32_1 = arith.constant 0 : i32
    return %c0_i32, %c0_i32_0 : i32, i32
  }
  func.func @transform_11(%arg0: i32) -> (i32, i32, i32) {
    %c0_i32 = arith.constant 0 : i32
    %c0_i32_0 = arith.constant 0 : i32
    %c0_i32_1 = arith.constant 0 : i32
    return %arg0, %c0_i32, %c0_i32_0 : i32, i32, i32
  }
}

</mosaic_0001>

<llo_original>
// kernel: tpu_custom_call.1
$region0: #{tpu_custom_call.1}
  #allocation0 [shape = 'u32[]', space=smem, size = 0x4, offset = 0x4, fixed_abs, tag = 'smem constant byte address 0x4 - core index']
  #allocation1 [shape = 'u32[72,128]{1,0:T(1,128)}', space=vmem, size = 0x9000, scoped, tag = 'internal scratch']
  %s0 = inlined_call_operand.hbm [shape: f32[2,16,24], index: 0, kind: input, shape index: {}]
  %s1 = inlined_call_operand.hbm [shape: bf16[24,128], index: 1, kind: input, shape index: {}]
  %s2 = inlined_call_operand.hbm [shape: f32[1,128], index: 2, kind: input, shape index: {}]
  %s3 = inlined_call_operand.hbm [shape: bf16[384,256], index: 3, kind: input, shape index: {}]
  %s4 = inlined_call_operand.vmem [shape: f32[1,256], index: 4, kind: input, shape index: {}]
  %s5 = inlined_call_operand.hbm [shape: bf16[384,256], index: 5, kind: input, shape index: {}]
  %s6 = inlined_call_operand.vmem [shape: f32[1,256], index: 6, kind: input, shape index: {}]
  %s7 = inlined_call_operand.hbm [shape: bf16[384,256], index: 7, kind: input, shape index: {}]
  %s8 = inlined_call_operand.vmem [shape: f32[1,256], index: 8, kind: input, shape index: {}]
  %s9 = inlined_call_operand.hbm [shape: bf16[128,128], index: 9, kind: input, shape index: {}]
  %s10 = inlined_call_operand.vmem [shape: f32[1,128], index: 10, kind: input, shape index: {}]
  %s11 = inlined_call_operand.hbm [shape: f32[2,16,128], index: 11, kind: output, shape index: {}]
  %s12 = sld [smem:[#allocation0]]
  $region82: #{tpu_custom_call.1} parent=0
    _
  %s14 = ssub.s32 1, %s12
  %s15 = scalar_select 0, %s14, %s12
  $region1: #{tpu_custom_call.1} parent=0
    #allocation2 [shape = 'u8[16384]{0}', space=vmem, size = 0x4000, scoped, tag = 'input window, operand 0, single buffered']
    #allocation3 [shape = 's32[1]{0}', space=sflag, size = 0x4, scoped, tag = 'scoped memory for tpu_custom_call.1']
    #allocation4 [shape = 's32[1]{0}', space=sflag, size = 0x4, scoped, tag = 'scoped memory for tpu_custom_call.1']
    #allocation5 [shape = 'u8[6144]{0}', space=vmem, size = 0x1800, scoped, tag = 'input window, operand 1, single buffered']
    #allocation6 [shape = 's32[1]{0}', space=sflag, size = 0x4, scoped, tag = 'scoped memory for tpu_custom_call.1']
    #allocation7 [shape = 'u8[512]{0}', space=vmem, size = 0x400, scoped, tag = 'input window, operand 2, single buffered']
    #allocation8 [shape = 'u8[196608]{0}', space=vmem, size = 0x30000, scoped, tag = 'input window, operand 3, single buffered']
    #allocation9 [shape = 's32[1]{0}', space=sflag, size = 0x4, scoped, tag = 'scoped memory for tpu_custom_call.1']
    #allocation10 [shape = 'u8[196608]{0}', space=vmem, size = 0x30000, scoped, tag = 'input window, operand 5, single buffered']
    #allocation11 [shape = 'u8[196608]{0}', space=vmem, size = 0x30000, scoped, tag = 'input window, operand 7, single buffered']
    #allocation12 [shape = 's32[1]{0}', space=sflag, size = 0x4, scoped, tag = 'scoped memory for tpu_custom_call.1']
    #allocation13 [shape = 'u8[32768]{0}', space=vmem, size = 0x8000, scoped, tag = 'input window, operand 9, single buffered']
    #allocation14 [shape = 'u8[16384]{0}', space=vmem, size = 0x4000, scoped, tag = 'output window, operand 0, single buffered']
    %16 = vsyncpa [#allocation3], 0
    %17 = vsyncpa [#allocation6], 0
    %18 = vsyncpa [#allocation9], 0
    %19 = vsyncpa [#allocation12], 0
    %20 = vsyncpa [#allocation4], 0
    // Predicated region
    $region2: #{tpu_custom_call.1} parent=1 // pred_check
      _
    $region3: #{tpu_custom_call.1} parent=1 // pred_check_branch
      %22 = sbr.rel (0) target = $region5
    $region4: #{tpu_custom_call.1} parent=1 // pred_region
      %24 = vsyncadd [#allocation3], 0
      %s25 = sshll.u32 %s0, 4
      %s26 = int_to_ptr.hbm [resolvable:$true] %s25
      %s27 = sshll.u32 [#allocation2], 4
      %s28 = int_to_ptr.vmem [resolvable:$true] %s27
      %33 = dma.hbm_to_vmem [thread:$0]  %s26, 512, %s28, [#allocation3], 128, 128, 8
    $region5: #{tpu_custom_call.1} parent=1 // pred_fallthru
      _
    // Predicated region
    $region6: #{tpu_custom_call.1} parent=1 // pred_check
      _
    $region7: #{tpu_custom_call.1} parent=1 // pred_check_branch
      %35 = sbr.rel (0) target = $region9
    $region8: #{tpu_custom_call.1} parent=1 // pred_region
      %37 = vsyncadd [#allocation6], 0
      %s38 = sshll.u32 %s1, 4
      %s39 = int_to_ptr.hbm [resolvable:$true] %s38
      %s40 = sshll.u32 [#allocation5], 4
      %s41 = int_to_ptr.vmem [resolvable:$true] %s40
      %46 = dma.hbm_to_vmem [thread:$0]  %s39, 192, %s41, [#allocation6], 64, 64, 4
    $region9: #{tpu_custom_call.1} parent=1 // pred_fallthru
      _
    // Predicated region
    $region10: #{tpu_custom_call.1} parent=1 // pred_check
      _
    $region11: #{tpu_custom_call.1} parent=1 // pred_check_branch
      %48 = sbr.rel (0) target = $region13
    $region12: #{tpu_custom_call.1} parent=1 // pred_region
      %50 = vsyncadd [#allocation6], 0
      %s52 = sshll.u32 %s2, 4
      %s53 = int_to_ptr.hbm [resolvable:$true] %s52
      %s54 = sshll.u32 [#allocation7], 4
      %s55 = int_to_ptr.vmem [resolvable:$true] %s54
      %57 = dma.hbm_to_vmem [thread:$0]  %s53, 16, %s55, [#allocation6]
    $region13: #{tpu_custom_call.1} parent=1 // pred_fallthru
      _
    // Predicated region
    $region14: #{tpu_custom_call.1} parent=1 // pred_check
      _
    $region15: #{tpu_custom_call.1} parent=1 // pred_check_branch
      %59 = sbr.rel (0) target = $region17
    $region16: #{tpu_custom_call.1} parent=1 // pred_region
      %61 = vsyncadd [#allocation9], 0
      %s62 = sshll.u32 %s3, 4
      %s63 = int_to_ptr.hbm [resolvable:$true] %s62
      %s64 = sshll.u32 [#allocation8], 4
      %s65 = int_to_ptr.vmem [resolvable:$true] %s64
      %70 = dma.hbm_to_vmem [thread:$0]  %s63, 6144, %s65, [#allocation9], 128, 128, 8
    $region17: #{tpu_custom_call.1} parent=1 // pred_fallthru
      _
    // Predicated region
    $region18: #{tpu_custom_call.1} parent=1 // pred_check
      _
    $region19: #{tpu_custom_call.1} parent=1 // pred_check_branch
      %72 = sbr.rel (0) target = $region21
    $region20: #{tpu_custom_call.1} parent=1 // pred_region
      _
    $region21: #{tpu_custom_call.1} parent=1 // pred_fallthru
      _
    // Predicated region
    $region22: #{tpu_custom_call.1} parent=1 // pred_check
      _
    $region23: #{tpu_custom_call.1} parent=1 // pred_check_branch
      %74 = sbr.rel (0) target = $region25
    $region24: #{tpu_custom_call.1} parent=1 // pred_region
      %76 = vsyncadd [#allocation9], 0
      %s77 = sshll.u32 %s5, 4
      %s78 = int_to_ptr.hbm [resolvable:$true] %s77
      %s79 = sshll.u32 [#allocation10], 4
      %s80 = int_to_ptr.vmem [resolvable:$true] %s79
      %85 = dma.hbm_to_vmem [thread:$0]  %s78, 6144, %s80, [#allocation9], 128, 128, 8
    $region25: #{tpu_custom_call.1} parent=1 // pred_fallthru
      _
    // Predicated region
    $region26: #{tpu_custom_call.1} parent=1 // pred_check
      _
    $region27: #{tpu_custom_call.1} parent=1 // pred_check_branch
      %87 = sbr.rel (0) target = $region29
    $region28: #{tpu_custom_call.1} parent=1 // pred_region
      _
    $region29: #{tpu_custom_call.1} parent=1 // pred_fallthru
      _
    // Predicated region
    $region30: #{tpu_custom_call.1} parent=1 // pred_check
      _
    $region31: #{tpu_custom_call.1} parent=1 // pred_check_branch
      %89 = sbr.rel (0) target = $region33
    $region32: #{tpu_custom_call.1} parent=1 // pred_region
      %91 = vsyncadd [#allocation12], 0
      %s92 = sshll.u32 %s7, 4
      %s93 = int_to_ptr.hbm [resolvable:$true] %s92
      %s94 = sshll.u32 [#allocation11], 4
      %s95 = int_to_ptr.vmem [resolvable:$true] %s94
      %100 = dma.hbm_to_vmem [thread:$0]  %s93, 6144, %s95, [#allocation12], 128, 128, 8
    $region33: #{tpu_custom_call.1} parent=1 // pred_fallthru
      _
    // Predicated region
    $region34: #{tpu_custom_call.1} parent=1 // pred_check
      _
    $region35: #{tpu_custom_call.1} parent=1 // pred_check_branch
      %102 = sbr.rel (0) target = $region37
    $region36: #{tpu_custom_call.1} parent=1 // pred_region
      _
    $region37: #{tpu_custom_call.1} parent=1 // pred_fallthru
      _
    // Predicated region
    $region38: #{tpu_custom_call.1} parent=1 // pred_check
      _
    $region39: #{tpu_custom_call.1} parent=1 // pred_check_branch
      %104 = sbr.rel (0) target = $region41
    $region40: #{tpu_custom_call.1} parent=1 // pred_region
      %106 = vsyncadd [#allocation12], 0
      %s107 = sshll.u32 %s9, 4
      %s108 = int_to_ptr.hbm [resolvable:$true] %s107
      %s109 = sshll.u32 [#allocation13], 4
      %s110 = int_to_ptr.vmem [resolvable:$true] %s109
      %115 = dma.hbm_to_vmem [thread:$0]  %s108, 1024, %s110, [#allocation12], 64, 64, 4
    $region41: #{tpu_custom_call.1} parent=1 // pred_fallthru
      _
    // Predicated region
    $region42: #{tpu_custom_call.1} parent=1 // pred_check
      _
    $region43: #{tpu_custom_call.1} parent=1 // pred_check_branch
      %117 = sbr.rel (0) target = $region45
    $region44: #{tpu_custom_call.1} parent=1 // pred_region
      _
    $region45: #{tpu_custom_call.1} parent=1 // pred_fallthru
      _
    // Predicated region
    $region46: #{tpu_custom_call.1} parent=1 // pred_check
      _
    $region47: #{tpu_custom_call.1} parent=1 // pred_check_branch
      %119 = sbr.rel (0) target = $region49
    $region48: #{tpu_custom_call.1} parent=1 // pred_region
      %121 = dma.done [#allocation3], 512
    $region49: #{tpu_custom_call.1} parent=1 // pred_fallthru
      _
    // Predicated region
    $region50: #{tpu_custom_call.1} parent=1 // pred_check
      _
    $region51: #{tpu_custom_call.1} parent=1 // pred_check_branch
      %123 = sbr.rel (0) target = $region53
    $region52: #{tpu_custom_call.1} parent=1 // pred_region
      %125 = dma.done [#allocation6], 192
    $region53: #{tpu_custom_call.1} parent=1 // pred_fallthru
      _
    // Predicated region
    $region54: #{tpu_custom_call.1} parent=1 // pred_check
      _
    $region55: #{tpu_custom_call.1} parent=1 // pred_check_branch
      %127 = sbr.rel (0) target = $region57
    $region56: #{tpu_custom_call.1} parent=1 // pred_region
      %129 = dma.done [#allocation6], 16
    $region57: #{tpu_custom_call.1} parent=1 // pred_fallthru
      _
    // Predicated region
    $region58: #{tpu_custom_call.1} parent=1 // pred_check
      _
    $region59: #{tpu_custom_call.1} parent=1 // pred_check_branch
      %131 = sbr.rel (0) target = $region61
    $region60: #{tpu_custom_call.1} parent=1 // pred_region
      %133 = dma.done [#allocation9], 6144
    $region61: #{tpu_custom_call.1} parent=1 // pred_fallthru
      _
    // Predicated region
    $region62: #{tpu_custom_call.1} parent=1 // pred_check
      _
    $region63: #{tpu_custom_call.1} parent=1 // pred_check_branch
      %135 = sbr.rel (0) target = $region65
    $region64: #{tpu_custom_call.1} parent=1 // pred_region
      %137 = dma.done [#allocation9], 6144
    $region65: #{tpu_custom_call.1} parent=1 // pred_fallthru
      _
    // Predicated region
    $region66: #{tpu_custom_call.1} parent=1 // pred_check
      _
    $region67: #{tpu_custom_call.1} parent=1 // pred_check_branch
      %139 = sbr.rel (0) target = $region69
    $region68: #{tpu_custom_call.1} parent=1 // pred_region
      %141 = dma.done [#allocation12], 6144
    $region69: #{tpu_custom_call.1} parent=1 // pred_fallthru
      _
    // Predicated region
    $region70: #{tpu_custom_call.1} parent=1 // pred_check
      _
    $region71: #{tpu_custom_call.1} parent=1 // pred_check_branch
      %143 = sbr.rel (0) target = $region73
    $region72: #{tpu_custom_call.1} parent=1 // pred_region
      %145 = dma.done [#allocation12], 1024
    $region73: #{tpu_custom_call.1} parent=1 // pred_fallthru
      _
    %v147 = vld [vmem:[#allocation2] sm:$0xff]
    %v148 = vld [vmem:[#allocation2 + $0x8] sm:$0xff]
    %v149 = vld [vmem:[#allocation2 + $0x10] sm:$0xff]
    %v150 = vld [vmem:[#allocation2 + $0x18] sm:$0xff]
    %v151 = vpack.c.bf16 %v148, %v147
    %v152 = vpack.c.bf16 %v150, %v149
    %v153 = vld [vmem:[#allocation5] sm:$0xf]
    %v154 = vld [vmem:[#allocation5 + $0x4] sm:$0xf]
    %v155 = vld [vmem:[#allocation5 + $0x8] sm:$0xf]
    %v156 = vld [vmem:[#allocation7] sm:$0x1]
    %v158 = vperm.slane %v156, 0
    %v163 = vunpack.c.l.b16 %v153
    %v164 = vunpack.c.l.b16 %v154
    %v165 = vunpack.c.l.b16 %v155
    %v166 = vpack.c.b16 %v164, %v163
    %v167 = vpack.c.b16 %v165, %v165
    %vm169 = vcmask 195584
    %v171 = vsel %vm169, %v151, 0
    %v174 = vsel %vm169, %v152, 0
    %vm176 = vcmask 1043456
    %v178 = vsel %vm176, %v167, 0
    %180 = vmatpush.bf16.msra.mxu0 0
    %181 = vmatpush.bf16.msra.mxu0 0
    %182 = vmatpush.bf16.msra.mxu0 0
    %183 = vmatpush.bf16.msra.mxu0 0
    %184 = vmatpush.bf16.msra.mxu0 0
    %185 = vmatpush.bf16.msra.mxu0 0
    %186 = vmatpush.bf16.msra.mxu0 %v178
    %187 = vmatpush.bf16.msra.mxu0 %v166
    %188 = vmatmul.bf16.gmra.mxu0 %v171
    %v189 = vpop.f32.mrf.mxu0
    %v190 = vadd.f32 %v158, %v189
    %v191 = vpop.f32.mrf.mxu0
    %v192 = vadd.f32 %v158, %v191
    %193 = vmatmul.bf16.gmra.mxu0 %v174
    %v194 = vpop.f32.mrf.mxu0
    %v195 = vadd.f32 %v158, %v194
    %v196 = vpop.f32.mrf.mxu0
    %v197 = vadd.f32 %v158, %v196
    %198 = vdwg.mxu0
    %v199 = vmul.f32 %v190, 1.702
    %v200 = vmul.f32 %v192, 1.702
    %v201 = vmul.f32 %v195, 1.702
    %v202 = vmul.f32 %v197, 1.702
    %v203 = vxor.u32 %v199, 2147483648
    %v204 = vxor.u32 %v200, 2147483648
    %v205 = vxor.u32 %v201, 2147483648
    %v206 = vxor.u32 %v202, 2147483648
    %v207 = vmul.f32 %v203, 1.442695
    %v208 = vpow.pop %v207
    %v209 = vmul.f32 %v204, 1.442695
    %v210 = vpow.pop %v209
    %v211 = vmul.f32 %v205, 1.442695
    %v212 = vpow.pop %v211
    %v213 = vmul.f32 %v206, 1.442695
    %v214 = vpow.pop %v213
    %v215 = vadd.f32 %v208, 1.0
    %v216 = vadd.f32 %v210, 1.0
    %v217 = vadd.f32 %v212, 1.0
    %v218 = vadd.f32 %v214, 1.0
    %v219 = vrcp.pop %v215
    %v220 = vmul.f32 %v215, %v219
    %v221 = vsub.f32 1.0, %v220
    %v222 = vmul.f32 %v219, %v221
    %v223 = vadd.f32 %v219, %v222
    %vm224 = vweird.f32 %v215
    %vm225 = vweird.f32 %v219
    %vm226 = vmor %vm224, %vm225
    %v227 = vsel %vm226, %v219, %v223
    %v228 = vand.u32 2147483647, %v215
    %vm229 = vcmp.eq.f32.partialorder %v228, 8.507059e+37
    %v230 = vand.u32 %v215, 2147483648
    %v231 = vor.u32 1.1754944e-38, %v230
    %v232 = vsel %vm229, %v231, %v227
    %v233 = vmul.f32 1.0, %v232
    %v234 = vrcp.pop %v216
    %v235 = vmul.f32 %v216, %v234
    %v236 = vsub.f32 1.0, %v235
    %v237 = vmul.f32 %v234, %v236
    %v238 = vadd.f32 %v234, %v237
    %vm239 = vweird.f32 %v216
    %vm240 = vweird.f32 %v234
    %vm241 = vmor %vm239, %vm240
    %v242 = vsel %vm241, %v234, %v238
    %v243 = vand.u32 2147483647, %v216
    %vm244 = vcmp.eq.f32.partialorder %v243, 8.507059e+37
    %v245 = vand.u32 %v216, 2147483648
    %v246 = vor.u32 1.1754944e-38, %v245
    %v247 = vsel %vm244, %v246, %v242
    %v248 = vmul.f32 1.0, %v247
    %v249 = vrcp.pop %v217
    %v250 = vmul.f32 %v217, %v249
    %v251 = vsub.f32 1.0, %v250
    %v252 = vmul.f32 %v249, %v251
    %v253 = vadd.f32 %v249, %v252
    %vm254 = vweird.f32 %v217
    %vm255 = vweird.f32 %v249
    %vm256 = vmor %vm254, %vm255
    %v257 = vsel %vm256, %v249, %v253
    %v258 = vand.u32 2147483647, %v217
    %vm259 = vcmp.eq.f32.partialorder %v258, 8.507059e+37
    %v260 = vand.u32 %v217, 2147483648
    %v261 = vor.u32 1.1754944e-38, %v260
    %v262 = vsel %vm259, %v261, %v257
    %v263 = vmul.f32 1.0, %v262
    %v264 = vrcp.pop %v218
    %v265 = vmul.f32 %v218, %v264
    %v266 = vsub.f32 1.0, %v265
    %v267 = vmul.f32 %v264, %v266
    %v268 = vadd.f32 %v264, %v267
    %vm269 = vweird.f32 %v218
    %vm270 = vweird.f32 %v264
    %vm271 = vmor %vm269, %vm270
    %v272 = vsel %vm271, %v264, %v268
    %v273 = vand.u32 2147483647, %v218
    %vm274 = vcmp.eq.f32.partialorder %v273, 8.507059e+37
    %v275 = vand.u32 %v218, 2147483648
    %v276 = vor.u32 1.1754944e-38, %v275
    %v277 = vsel %vm274, %v276, %v272
    %v278 = vmul.f32 1.0, %v277
    %v279 = vmul.f32 %v190, %v233
    %v280 = vmul.f32 %v192, %v248
    %v281 = vmul.f32 %v195, %v263
    %v282 = vmul.f32 %v197, %v278
    %v283 = vlaneseq
    %v284 = vshrl.u32 %v283, 7
    %v285 = vadd.s32 %v284, 8
    %vm286 = vcmp.ge.s32.totalorder %v284, 1
    %vm287 = vcmp.ge.s32.totalorder %v285, 1
    %v288 = vrot.slane %v279, 7
    %v289 = vrot.slane %v280, 7
    %v290 = vrot.slane %v281, 7
    %v291 = vrot.slane %v282, 7
    %vm292 = vcmp.lt.s32.totalorder %v284, 1
    %v293 = vsel %vm292, %v290, %v291
    %v294 = vsel %vm292, %v289, %v290
    %v295 = vsel %vm292, %v288, %v289
    %v296 = vsel %vm292, %v291, %v288
    %v297 = vsel %vm286, %v296, 0.0
    %v298 = vsel %vm287, %v295, 0.0
    %v299 = vsel %vm286, %v294, 0.0
    %v300 = vsel %vm287, %v293, 0.0
    %vm301 = vcmp.lt.s32.totalorder %v284, 15
    %vm302 = vcmp.lt.s32.totalorder %v285, 15
    %v303 = vrot.slane %v279, 1
    %v304 = vrot.slane %v280, 1
    %v305 = vrot.slane %v281, 1
    %v306 = vrot.slane %v282, 1
    %vm307 = vcmp.lt.s32.totalorder %v284, 7
    %v308 = vsel %vm307, %v305, %v306
    %v309 = vsel %vm307, %v304, %v305
    %v310 = vsel %vm307, %v303, %v304
    %v311 = vsel %vm307, %v306, %v303
    %v312 = vsel %vm301, %v310, 0.0
    %v313 = vsel %vm302, %v309, 0.0
    %v314 = vsel %vm301, %v308, 0.0
    %v315 = vsel %vm302, %v311, 0.0
    %v316 = vpack.c.bf16 %v297, %v297
    %v317 = vpack.c.bf16 %v298, %v298
    %v318 = vpack.c.bf16 %v299, %v299
    %v319 = vpack.c.bf16 %v300, %v300
    %v320 = vpack.c.bf16 %v279, %v279
    %v321 = vpack.c.bf16 %v280, %v280
    %v322 = vpack.c.bf16 %v281, %v281
    %v323 = vpack.c.bf16 %v282, %v282
    %v324 = vpack.c.bf16 %v312, %v312
    %v325 = vpack.c.bf16 %v313, %v313
    %v326 = vpack.c.bf16 %v314, %v314
    %v327 = vpack.c.bf16 %v315, %v315
    %v332 = vunpack.c.l.b16 %v316
    %v333 = vunpack.c.l.b16 %v317
    %v334 = vunpack.c.l.b16 %v318
    %v335 = vunpack.c.l.b16 %v319
    %v336 = vpack.c.b16 %v333, %v332
    %v337 = vpack.c.b16 %v335, %v334
    %v344 = vunpack.c.l.b16 %v320
    %v345 = vunpack.c.l.b16 %v321
    %v346 = vunpack.c.l.b16 %v322
    %v347 = vunpack.c.l.b16 %v323
    %v348 = vpack.c.b16 %v345, %v344
    %v349 = vpack.c.b16 %v347, %v346
    %v356 = vunpack.c.l.b16 %v324
    %v357 = vunpack.c.l.b16 %v325
    %v358 = vunpack.c.l.b16 %v326
    %v359 = vunpack.c.l.b16 %v327
    %v360 = vpack.c.b16 %v357, %v356
    %v361 = vpack.c.b16 %v359, %v358
    %v364 = vld [vmem:[#allocation8] sm:$0xff]
    %v365 = vld [vmem:[#allocation8 + $0x8] sm:$0xff]
    %v366 = vld [vmem:[#allocation8 + $0x10] sm:$0xff]
    %v367 = vld [vmem:[#allocation8 + $0x18] sm:$0xff]
    %v368 = vld [vmem:[#allocation8 + $0x20] sm:$0xff]
    %v369 = vld [vmem:[#allocation8 + $0x28] sm:$0xff]
    %v370 = vld [vmem:[#allocation8 + $0x30] sm:$0xff]
    %v371 = vld [vmem:[#allocation8 + $0x38] sm:$0xff]
    %v372 = vld [vmem:[#allocation8 + $0x40] sm:$0xff]
    %v373 = vld [vmem:[#allocation8 + $0x48] sm:$0xff]
    %v374 = vld [vmem:[#allocation8 + $0x50] sm:$0xff]
    %v375 = vld [vmem:[#allocation8 + $0x58] sm:$0xff]
    %v376 = vld [vmem:[#allocation8 + $0x60] sm:$0xff]
    %v377 = vld [vmem:[#allocation8 + $0x68] sm:$0xff]
    %v378 = vld [vmem:[#allocation8 + $0x70] sm:$0xff]
    %v379 = vld [vmem:[#allocation8 + $0x78] sm:$0xff]
    %v380 = vld [vmem:[#allocation8 + $0x80] sm:$0xff]
    %v381 = vld [vmem:[#allocation8 + $0x88] sm:$0xff]
    %v382 = vld [vmem:[#allocation8 + $0x90] sm:$0xff]
    %v383 = vld [vmem:[#allocation8 + $0x98] sm:$0xff]
    %v384 = vld [vmem:[#allocation8 + $0xa0] sm:$0xff]
    %v385 = vld [vmem:[#allocation8 + $0xa8] sm:$0xff]
    %v386 = vld [vmem:[#allocation8 + $0xb0] sm:$0xff]
    %v387 = vld [vmem:[#allocation8 + $0xb8] sm:$0xff]
    %v388 = vld [vmem:[#allocation8 + $0xc0] sm:$0xff]
    %v389 = vld [vmem:[#allocation8 + $0xc8] sm:$0xff]
    %v390 = vld [vmem:[#allocation8 + $0xd0] sm:$0xff]
    %v391 = vld [vmem:[#allocation8 + $0xd8] sm:$0xff]
    %v392 = vld [vmem:[#allocation8 + $0xe0] sm:$0xff]
    %v393 = vld [vmem:[#allocation8 + $0xe8] sm:$0xff]
    %v394 = vld [vmem:[#allocation8 + $0xf0] sm:$0xff]
    %v395 = vld [vmem:[#allocation8 + $0xf8] sm:$0xff]
    %v396 = vld [vmem:[#allocation8 + $0x100] sm:$0xff]
    %v397 = vld [vmem:[#allocation8 + $0x108] sm:$0xff]
    %v398 = vld [vmem:[#allocation8 + $0x110] sm:$0xff]
    %v399 = vld [vmem:[#allocation8 + $0x118] sm:$0xff]
    %v400 = vld [vmem:[#allocation8 + $0x120] sm:$0xff]
    %v401 = vld [vmem:[#allocation8 + $0x128] sm:$0xff]
    %v402 = vld [vmem:[#allocation8 + $0x130] sm:$0xff]
    %v403 = vld [vmem:[#allocation8 + $0x138] sm:$0xff]
    %v404 = vld [vmem:[#allocation8 + $0x140] sm:$0xff]
    %v405 = vld [vmem:[#allocation8 + $0x148] sm:$0xff]
    %v406 = vld [vmem:[#allocation8 + $0x150] sm:$0xff]
    %v407 = vld [vmem:[#allocation8 + $0x158] sm:$0xff]
    %v408 = vld [vmem:[#allocation8 + $0x160] sm:$0xff]
    %v409 = vld [vmem:[#allocation8 + $0x168] sm:$0xff]
    %v410 = vld [vmem:[#allocation8 + $0x170] sm:$0xff]
    %v411 = vld [vmem:[#allocation8 + $0x178] sm:$0xff]
    %v412 = vld [vmem:[%s4] sm:$0x3]
    %v414 = vperm.slane %v412, 0
    %v415 = vperm.slane %v412, 1
    %v466 = vunpack.c.l.b16 %v364
    %v467 = vunpack.c.h.b16 %v364
    %v468 = vunpack.c.l.b16 %v365
    %v469 = vunpack.c.h.b16 %v365
    %v470 = vunpack.c.l.b16 %v366
    %v471 = vunpack.c.h.b16 %v366
    %v472 = vunpack.c.l.b16 %v367
    %v473 = vunpack.c.h.b16 %v367
    %v474 = vunpack.c.l.b16 %v368
    %v475 = vunpack.c.h.b16 %v368
    %v476 = vunpack.c.l.b16 %v369
    %v477 = vunpack.c.h.b16 %v369
    %v478 = vunpack.c.l.b16 %v370
    %v479 = vunpack.c.h.b16 %v370
    %v480 = vunpack.c.l.b16 %v371
    %v481 = vunpack.c.h.b16 %v371
    %v482 = vunpack.c.l.b16 %v372
    %v483 = vunpack.c.h.b16 %v372
    %v484 = vunpack.c.l.b16 %v373
    %v485 = vunpack.c.h.b16 %v373
    %v486 = vunpack.c.l.b16 %v374
    %v487 = vunpack.c.h.b16 %v374
    %v488 = vunpack.c.l.b16 %v375
    %v489 = vunpack.c.h.b16 %v375
    %v490 = vunpack.c.l.b16 %v376
    %v491 = vunpack.c.h.b16 %v376
    %v492 = vunpack.c.l.b16 %v377
    %v493 = vunpack.c.h.b16 %v377
    %v494 = vunpack.c.l.b16 %v378
    %v495 = vunpack.c.h.b16 %v378
    %v496 = vunpack.c.l.b16 %v379
    %v497 = vunpack.c.h.b16 %v379
    %v498 = vunpack.c.l.b16 %v380
    %v499 = vunpack.c.h.b16 %v380
    %v500 = vunpack.c.l.b16 %v381
    %v501 = vunpack.c.h.b16 %v381
    %v502 = vunpack.c.l.b16 %v382
    %v503 = vunpack.c.h.b16 %v382
    %v504 = vunpack.c.l.b16 %v383
    %v505 = vunpack.c.h.b16 %v383
    %v506 = vunpack.c.l.b16 %v384
    %v507 = vunpack.c.h.b16 %v384
    %v508 = vunpack.c.l.b16 %v385
    %v509 = vunpack.c.h.b16 %v385
    %v510 = vunpack.c.l.b16 %v386
    %v511 = vunpack.c.h.b16 %v386
    %v512 = vunpack.c.l.b16 %v387
    %v513 = vunpack.c.h.b16 %v387
    %v514 = vunpack.c.l.b16 %v388
    %v515 = vunpack.c.h.b16 %v388
    %v516 = vunpack.c.l.b16 %v389
    %v517 = vunpack.c.h.b16 %v389
    %v518 = vunpack.c.l.b16 %v390
    %v519 = vunpack.c.h.b16 %v390
    %v520 = vunpack.c.l.b16 %v391
    %v521 = vunpack.c.h.b16 %v391
    %v522 = vunpack.c.l.b16 %v392
    %v523 = vunpack.c.h.b16 %v392
    %v524 = vunpack.c.l.b16 %v393
    %v525 = vunpack.c.h.b16 %v393
    %v526 = vunpack.c.l.b16 %v394
    %v527 = vunpack.c.h.b16 %v394
    %v528 = vunpack.c.l.b16 %v395
    %v529 = vunpack.c.h.b16 %v395
    %v530 = vunpack.c.l.b16 %v396
    %v531 = vunpack.c.h.b16 %v396
    %v532 = vunpack.c.l.b16 %v397
    %v533 = vunpack.c.h.b16 %v397
    %v534 = vunpack.c.l.b16 %v398
    %v535 = vunpack.c.h.b16 %v398
    %v536 = vunpack.c.l.b16 %v399
    %v537 = vunpack.c.h.b16 %v399
    %v538 = vunpack.c.l.b16 %v400
    %v539 = vunpack.c.h.b16 %v400
    %v540 = vunpack.c.l.b16 %v401
    %v541 = vunpack.c.h.b16 %v401
    %v542 = vunpack.c.l.b16 %v402
    %v543 = vunpack.c.h.b16 %v402
    %v544 = vunpack.c.l.b16 %v403
    %v545 = vunpack.c.h.b16 %v403
    %v546 = vunpack.c.l.b16 %v404
    %v547 = vunpack.c.h.b16 %v404
    %v548 = vunpack.c.l.b16 %v405
    %v549 = vunpack.c.h.b16 %v405
    %v550 = vunpack.c.l.b16 %v406
    %v551 = vunpack.c.h.b16 %v406
    %v552 = vunpack.c.l.b16 %v407
    %v553 = vunpack.c.h.b16 %v407
    %v554 = vunpack.c.l.b16 %v408
    %v555 = vunpack.c.h.b16 %v408
    %v556 = vunpack.c.l.b16 %v409
    %v557 = vunpack.c.h.b16 %v409
    %v558 = vunpack.c.l.b16 %v410
    %v559 = vunpack.c.h.b16 %v410
    %v560 = vunpack.c.l.b16 %v411
    %v561 = vunpack.c.h.b16 %v411
    %v562 = vpack.c.b16 %v468, %v466
    %v563 = vpack.c.b16 %v469, %v467
    %v564 = vpack.c.b16 %v472, %v470
    %v565 = vpack.c.b16 %v473, %v471
    %v566 = vpack.c.b16 %v476, %v474
    %v567 = vpack.c.b16 %v477, %v475
    %v568 = vpack.c.b16 %v480, %v478
    %v569 = vpack.c.b16 %v481, %v479
    %v570 = vpack.c.b16 %v484, %v482
    %v571 = vpack.c.b16 %v485, %v483
    %v572 = vpack.c.b16 %v488, %v486
    %v573 = vpack.c.b16 %v489, %v487
    %v574 = vpack.c.b16 %v492, %v490
    %v575 = vpack.c.b16 %v493, %v491
    %v576 = vpack.c.b16 %v496, %v494
    %v577 = vpack.c.b16 %v497, %v495
    %v578 = vpack.c.b16 %v500, %v498
    %v579 = vpack.c.b16 %v501, %v499
    %v580 = vpack.c.b16 %v504, %v502
    %v581 = vpack.c.b16 %v505, %v503
    %v582 = vpack.c.b16 %v508, %v506
    %v583 = vpack.c.b16 %v509, %v507
    %v584 = vpack.c.b16 %v512, %v510
    %v585 = vpack.c.b16 %v513, %v511
    %v586 = vpack.c.b16 %v516, %v514
    %v587 = vpack.c.b16 %v517, %v515
    %v588 = vpack.c.b16 %v520, %v518
    %v589 = vpack.c.b16 %v521, %v519
    %v590 = vpack.c.b16 %v524, %v522
    %v591 = vpack.c.b16 %v525, %v523
    %v592 = vpack.c.b16 %v528, %v526
    %v593 = vpack.c.b16 %v529, %v527
    %v594 = vpack.c.b16 %v532, %v530
    %v595 = vpack.c.b16 %v533, %v531
    %v596 = vpack.c.b16 %v536, %v534
    %v597 = vpack.c.b16 %v537, %v535
    %v598 = vpack.c.b16 %v540, %v538
    %v599 = vpack.c.b16 %v541, %v539
    %v600 = vpack.c.b16 %v544, %v542
    %v601 = vpack.c.b16 %v545, %v543
    %v602 = vpack.c.b16 %v548, %v546
    %v603 = vpack.c.b16 %v549, %v547
    %v604 = vpack.c.b16 %v552, %v550
    %v605 = vpack.c.b16 %v553, %v551
    %v606 = vpack.c.b16 %v556, %v554
    %v607 = vpack.c.b16 %v557, %v555
    %v608 = vpack.c.b16 %v560, %v558
    %v609 = vpack.c.b16 %v561, %v559
    %658 = vmatpush.bf16.msra.mxu0 %v576
    %659 = vmatpush.bf16.msra.mxu0 %v574
    %660 = vmatpush.bf16.msra.mxu0 %v572
    %661 = vmatpush.bf16.msra.mxu0 %v570
    %662 = vmatpush.bf16.msra.mxu0 %v568
    %663 = vmatpush.bf16.msra.mxu0 %v566
    %664 = vmatpush.bf16.msra.mxu0 %v564
    %665 = vmatpush.bf16.msra.mxu0 %v562
    %666 = vmatmul.bf16.gmra.mxu0 %v336
    %v667 = vpop.f32.mrf.mxu0
    %v668 = vadd.f32 %v414, %v667
    %v669 = vpop.f32.mrf.mxu0
    %v670 = vadd.f32 %v414, %v669
    %671 = vmatmul.bf16.gmra.mxu0 %v337
    %v672 = vpop.f32.mrf.mxu0
    %v673 = vadd.f32 %v414, %v672
    %v674 = vpop.f32.mrf.mxu0
    %v675 = vadd.f32 %v414, %v674
    %676 = vdwg.mxu0
    %677 = vmatpush.bf16.msra.mxu0 %v592
    %678 = vmatpush.bf16.msra.mxu0 %v590
    %679 = vmatpush.bf16.msra.mxu0 %v588
    %680 = vmatpush.bf16.msra.mxu0 %v586
    %681 = vmatpush.bf16.msra.mxu0 %v584
    %682 = vmatpush.bf16.msra.mxu0 %v582
    %683 = vmatpush.bf16.msra.mxu0 %v580
    %684 = vmatpush.bf16.msra.mxu0 %v578
    %685 = vmatmul.bf16.gmra.mxu0 %v348
    %v686 = vpop.f32.mrf.mxu0
    %v687 = vadd.f32 %v668, %v686
    %v688 = vpop.f32.mrf.mxu0
    %v689 = vadd.f32 %v670, %v688
    %690 = vmatmul.bf16.gmra.mxu0 %v349
    %v691 = vpop.f32.mrf.mxu0
    %v692 = vadd.f32 %v673, %v691
    %v693 = vpop.f32.mrf.mxu0
    %v694 = vadd.f32 %v675, %v693
    %695 = vdwg.mxu0
    %696 = vmatpush.bf16.msra.mxu0 %v608
    %697 = vmatpush.bf16.msra.mxu0 %v606
    %698 = vmatpush.bf16.msra.mxu0 %v604
    %699 = vmatpush.bf16.msra.mxu0 %v602
    %700 = vmatpush.bf16.msra.mxu0 %v600
    %701 = vmatpush.bf16.msra.mxu0 %v598
    %702 = vmatpush.bf16.msra.mxu0 %v596
    %703 = vmatpush.bf16.msra.mxu0 %v594
    %704 = vmatmul.bf16.gmra.mxu0 %v360
    %v705 = vpop.f32.mrf.mxu0
    %v706 = vadd.f32 %v687, %v705
    %v707 = vpop.f32.mrf.mxu0
    %v708 = vadd.f32 %v689, %v707
    %709 = vmatmul.bf16.gmra.mxu0 %v361
    %v710 = vpop.f32.mrf.mxu0
    %v711 = vadd.f32 %v692, %v710
    %v712 = vpop.f32.mrf.mxu0
    %v713 = vadd.f32 %v694, %v712
    %714 = vdwg.mxu0
    %715 = vmatpush.bf16.msra.mxu0 %v577
    %716 = vmatpush.bf16.msra.mxu0 %v575
    %717 = vmatpush.bf16.msra.mxu0 %v573
    %718 = vmatpush.bf16.msra.mxu0 %v571
    %719 = vmatpush.bf16.msra.mxu0 %v569
    %720 = vmatpush.bf16.msra.mxu0 %v567
    %721 = vmatpush.bf16.msra.mxu0 %v565
    %722 = vmatpush.bf16.msra.mxu0 %v563
    %723 = vmatmul.bf16.gmra.mxu0 %v336
    %v724 = vpop.f32.mrf.mxu0
    %v725 = vadd.f32 %v415, %v724
    %v726 = vpop.f32.mrf.mxu0
    %v727 = vadd.f32 %v415, %v726
    %728 = vmatmul.bf16.gmra.mxu0 %v337
    %v729 = vpop.f32.mrf.mxu0
    %v730 = vadd.f32 %v415, %v729
    %v731 = vpop.f32.mrf.mxu0
    %v732 = vadd.f32 %v415, %v731
    %733 = vdwg.mxu0
    %734 = vmatpush.bf16.msra.mxu0 %v593
    %735 = vmatpush.bf16.msra.mxu0 %v591
    %736 = vmatpush.bf16.msra.mxu0 %v589
    %737 = vmatpush.bf16.msra.mxu0 %v587
    %738 = vmatpush.bf16.msra.mxu0 %v585
    %739 = vmatpush.bf16.msra.mxu0 %v583
    %740 = vmatpush.bf16.msra.mxu0 %v581
    %741 = vmatpush.bf16.msra.mxu0 %v579
    %742 = vmatmul.bf16.gmra.mxu0 %v348
    %v743 = vpop.f32.mrf.mxu0
    %v744 = vadd.f32 %v725, %v743
    %v745 = vpop.f32.mrf.mxu0
    %v746 = vadd.f32 %v727, %v745
    %747 = vmatmul.bf16.gmra.mxu0 %v349
    %v748 = vpop.f32.mrf.mxu0
    %v749 = vadd.f32 %v730, %v748
    %v750 = vpop.f32.mrf.mxu0
    %v751 = vadd.f32 %v732, %v750
    %752 = vdwg.mxu0
    %753 = vmatpush.bf16.msra.mxu0 %v609
    %754 = vmatpush.bf16.msra.mxu0 %v607
    %755 = vmatpush.bf16.msra.mxu0 %v605
    %756 = vmatpush.bf16.msra.mxu0 %v603
    %757 = vmatpush.bf16.msra.mxu0 %v601
    %758 = vmatpush.bf16.msra.mxu0 %v599
    %759 = vmatpush.bf16.msra.mxu0 %v597
    %760 = vmatpush.bf16.msra.mxu0 %v595
    %761 = vmatmul.bf16.gmra.mxu0 %v360
    %v762 = vpop.f32.mrf.mxu0
    %v763 = vadd.f32 %v744, %v762
    %v764 = vpop.f32.mrf.mxu0
    %v765 = vadd.f32 %v746, %v764
    %766 = vmatmul.bf16.gmra.mxu0 %v361
    %v767 = vpop.f32.mrf.mxu0
    %v768 = vadd.f32 %v749, %v767
    %v769 = vpop.f32.mrf.mxu0
    %v770 = vadd.f32 %v751, %v769
    %771 = vdwg.mxu0
    %v772 = vxor.u32 %v763, 2147483648
    %v773 = vxor.u32 %v765, 2147483648
    %v774 = vxor.u32 %v768, 2147483648
    %v775 = vxor.u32 %v770, 2147483648
    %v776 = vmul.f32 %v772, 1.442695
    %v777 = vpow.pop %v776
    %v778 = vmul.f32 %v773, 1.442695
    %v779 = vpow.pop %v778
    %v780 = vmul.f32 %v774, 1.442695
    %v781 = vpow.pop %v780
    %v782 = vmul.f32 %v775, 1.442695
    %v783 = vpow.pop %v782
    %v784 = vadd.f32 %v777, 1.0
    %v785 = vadd.f32 %v779, 1.0
    %v786 = vadd.f32 %v781, 1.0
    %v787 = vadd.f32 %v783, 1.0
    %v788 = vrcp.pop %v784
    %v789 = vmul.f32 %v784, %v788
    %v790 = vsub.f32 1.0, %v789
    %v791 = vmul.f32 %v788, %v790
    %v792 = vadd.f32 %v788, %v791
    %vm793 = vweird.f32 %v784
    %vm794 = vweird.f32 %v788
    %vm795 = vmor %vm793, %vm794
    %v796 = vsel %vm795, %v788, %v792
    %v797 = vand.u32 2147483647, %v784
    %vm798 = vcmp.eq.f32.partialorder %v797, 8.507059e+37
    %v799 = vand.u32 %v784, 2147483648
    %v800 = vor.u32 1.1754944e-38, %v799
    %v801 = vsel %vm798, %v800, %v796
    %v802 = vmul.f32 1.0, %v801
    %v803 = vrcp.pop %v785
    %v804 = vmul.f32 %v785, %v803
    %v805 = vsub.f32 1.0, %v804
    %v806 = vmul.f32 %v803, %v805
    %v807 = vadd.f32 %v803, %v806
    %vm808 = vweird.f32 %v785
    %vm809 = vweird.f32 %v803
    %vm810 = vmor %vm808, %vm809
    %v811 = vsel %vm810, %v803, %v807
    %v812 = vand.u32 2147483647, %v785
    %vm813 = vcmp.eq.f32.partialorder %v812, 8.507059e+37
    %v814 = vand.u32 %v785, 2147483648
    %v815 = vor.u32 1.1754944e-38, %v814
    %v816 = vsel %vm813, %v815, %v811
    %v817 = vmul.f32 1.0, %v816
    %v818 = vrcp.pop %v786
    %v819 = vmul.f32 %v786, %v818
    %v820 = vsub.f32 1.0, %v819
    %v821 = vmul.f32 %v818, %v820
    %v822 = vadd.f32 %v818, %v821
    %vm823 = vweird.f32 %v786
    %vm824 = vweird.f32 %v818
    %vm825 = vmor %vm823, %vm824
    %v826 = vsel %vm825, %v818, %v822
    %v827 = vand.u32 2147483647, %v786
    %vm828 = vcmp.eq.f32.partialorder %v827, 8.507059e+37
    %v829 = vand.u32 %v786, 2147483648
    %v830 = vor.u32 1.1754944e-38, %v829
    %v831 = vsel %vm828, %v830, %v826
    %v832 = vmul.f32 1.0, %v831
    %v833 = vrcp.pop %v787
    %v834 = vmul.f32 %v787, %v833
    %v835 = vsub.f32 1.0, %v834
    %v836 = vmul.f32 %v833, %v835
    %v837 = vadd.f32 %v833, %v836
    %vm838 = vweird.f32 %v787
    %vm839 = vweird.f32 %v833
    %vm840 = vmor %vm838, %vm839
    %v841 = vsel %vm840, %v833, %v837
    %v842 = vand.u32 2147483647, %v787
    %vm843 = vcmp.eq.f32.partialorder %v842, 8.507059e+37
    %v844 = vand.u32 %v787, 2147483648
    %v845 = vor.u32 1.1754944e-38, %v844
    %v846 = vsel %vm843, %v845, %v841
    %v847 = vmul.f32 1.0, %v846
    %v848 = vmul.f32 %v706, %v802
    %v849 = vmul.f32 %v708, %v817
    %v850 = vmul.f32 %v711, %v832
    %v851 = vmul.f32 %v713, %v847
    %v852 = vadd.f32 %v848, %v279
    %v853 = vadd.f32 %v849, %v280
    %v854 = vadd.f32 %v850, %v281
    %v855 = vadd.f32 %v851, %v282
    %vm856 = vcmp.ge.s32.totalorder %v284, 2
    %vm857 = vcmp.ge.s32.totalorder %v285, 2
    %v858 = vrot.slane %v852, 6
    %v859 = vrot.slane %v853, 6
    %v860 = vrot.slane %v854, 6
    %v861 = vrot.slane %v855, 6
    %vm862 = vcmp.lt.s32.totalorder %v284, 2
    %v863 = vsel %vm862, %v860, %v861
    %v864 = vsel %vm862, %v859, %v860
    %v865 = vsel %vm862, %v858, %v859
    %v866 = vsel %vm862, %v861, %v858
    %v867 = vsel %vm856, %v866, 0.0
    %v868 = vsel %vm857, %v865, 0.0
    %v869 = vsel %vm856, %v864, 0.0
    %v870 = vsel %vm857, %v863, 0.0
    %vm871 = vcmp.lt.s32.totalorder %v284, 14
    %vm872 = vcmp.lt.s32.totalorder %v285, 14
    %v873 = vrot.slane %v852, 2
    %v874 = vrot.slane %v853, 2
    %v875 = vrot.slane %v854, 2
    %v876 = vrot.slane %v855, 2
    %vm877 = vcmp.lt.s32.totalorder %v284, 6
    %v878 = vsel %vm877, %v875, %v876
    %v879 = vsel %vm877, %v874, %v875
    %v880 = vsel %vm877, %v873, %v874
    %v881 = vsel %vm877, %v876, %v873
    %v882 = vsel %vm871, %v880, 0.0
    %v883 = vsel %vm872, %v879, 0.0
    %v884 = vsel %vm871, %v878, 0.0
    %v885 = vsel %vm872, %v881, 0.0
    %v886 = vpack.c.bf16 %v867, %v867
    %v887 = vpack.c.bf16 %v868, %v868
    %v888 = vpack.c.bf16 %v869, %v869
    %v889 = vpack.c.bf16 %v870, %v870
    %v890 = vpack.c.bf16 %v852, %v852
    %v891 = vpack.c.bf16 %v853, %v853
    %v892 = vpack.c.bf16 %v854, %v854
    %v893 = vpack.c.bf16 %v855, %v855
    %v894 = vpack.c.bf16 %v882, %v882
    %v895 = vpack.c.bf16 %v883, %v883
    %v896 = vpack.c.bf16 %v884, %v884
    %v897 = vpack.c.bf16 %v885, %v885
    %v902 = vunpack.c.l.b16 %v886
    %v903 = vunpack.c.l.b16 %v887
    %v904 = vunpack.c.l.b16 %v888
    %v905 = vunpack.c.l.b16 %v889
    %v906 = vpack.c.b16 %v903, %v902
    %v907 = vpack.c.b16 %v905, %v904
    %v914 = vunpack.c.l.b16 %v890
    %v915 = vunpack.c.l.b16 %v891
    %v916 = vunpack.c.l.b16 %v892
    %v917 = vunpack.c.l.b16 %v893
    %v918 = vpack.c.b16 %v915, %v914
    %v919 = vpack.c.b16 %v917, %v916
    %v926 = vunpack.c.l.b16 %v894
    %v927 = vunpack.c.l.b16 %v895
    %v928 = vunpack.c.l.b16 %v896
    %v929 = vunpack.c.l.b16 %v897
    %v930 = vpack.c.b16 %v927, %v926
    %v931 = vpack.c.b16 %v929, %v928
    %v934 = vld [vmem:[#allocation10] sm:$0xff]
    %v935 = vld [vmem:[#allocation10 + $0x8] sm:$0xff]
    %v936 = vld [vmem:[#allocation10 + $0x10] sm:$0xff]
    %v937 = vld [vmem:[#allocation10 + $0x18] sm:$0xff]
    %v938 = vld [vmem:[#allocation10 + $0x20] sm:$0xff]
    %v939 = vld [vmem:[#allocation10 + $0x28] sm:$0xff]
    %v940 = vld [vmem:[#allocation10 + $0x30] sm:$0xff]
    %v941 = vld [vmem:[#allocation10 + $0x38] sm:$0xff]
    %v942 = vld [vmem:[#allocation10 + $0x40] sm:$0xff]
    %v943 = vld [vmem:[#allocation10 + $0x48] sm:$0xff]
    %v944 = vld [vmem:[#allocation10 + $0x50] sm:$0xff]
    %v945 = vld [vmem:[#allocation10 + $0x58] sm:$0xff]
    %v946 = vld [vmem:[#allocation10 + $0x60] sm:$0xff]
    %v947 = vld [vmem:[#allocation10 + $0x68] sm:$0xff]
    %v948 = vld [vmem:[#allocation10 + $0x70] sm:$0xff]
    %v949 = vld [vmem:[#allocation10 + $0x78] sm:$0xff]
    %v950 = vld [vmem:[#allocation10 + $0x80] sm:$0xff]
    %v951 = vld [vmem:[#allocation10 + $0x88] sm:$0xff]
    %v952 = vld [vmem:[#allocation10 + $0x90] sm:$0xff]
    %v953 = vld [vmem:[#allocation10 + $0x98] sm:$0xff]
    %v954 = vld [vmem:[#allocation10 + $0xa0] sm:$0xff]
    %v955 = vld [vmem:[#allocation10 + $0xa8] sm:$0xff]
    %v956 = vld [vmem:[#allocation10 + $0xb0] sm:$0xff]
    %v957 = vld [vmem:[#allocation10 + $0xb8] sm:$0xff]
    %v958 = vld [vmem:[#allocation10 + $0xc0] sm:$0xff]
    %v959 = vld [vmem:[#allocation10 + $0xc8] sm:$0xff]
    %v960 = vld [vmem:[#allocation10 + $0xd0] sm:$0xff]
    %v961 = vld [vmem:[#allocation10 + $0xd8] sm:$0xff]
    %v962 = vld [vmem:[#allocation10 + $0xe0] sm:$0xff]
    %v963 = vld [vmem:[#allocation10 + $0xe8] sm:$0xff]
    %v964 = vld [vmem:[#allocation10 + $0xf0] sm:$0xff]
    %v965 = vld [vmem:[#allocation10 + $0xf8] sm:$0xff]
    %v966 = vld [vmem:[#allocation10 + $0x100] sm:$0xff]
    %v967 = vld [vmem:[#allocation10 + $0x108] sm:$0xff]
    %v968 = vld [vmem:[#allocation10 + $0x110] sm:$0xff]
    %v969 = vld [vmem:[#allocation10 + $0x118] sm:$0xff]
    %v970 = vld [vmem:[#allocation10 + $0x120] sm:$0xff]
    %v971 = vld [vmem:[#allocation10 + $0x128] sm:$0xff]
    %v972 = vld [vmem:[#allocation10 + $0x130] sm:$0xff]
    %v973 = vld [vmem:[#allocation10 + $0x138] sm:$0xff]
    %v974 = vld [vmem:[#allocation10 + $0x140] sm:$0xff]
    %v975 = vld [vmem:[#allocation10 + $0x148] sm:$0xff]
    %v976 = vld [vmem:[#allocation10 + $0x150] sm:$0xff]
    %v977 = vld [vmem:[#allocation10 + $0x158] sm:$0xff]
    %v978 = vld [vmem:[#allocation10 + $0x160] sm:$0xff]
    %v979 = vld [vmem:[#allocation10 + $0x168] sm:$0xff]
    %v980 = vld [vmem:[#allocation10 + $0x170] sm:$0xff]
    %v981 = vld [vmem:[#allocation10 + $0x178] sm:$0xff]
    %v982 = vld [vmem:[%s6] sm:$0x3]
    %v984 = vperm.slane %v982, 0
    %v985 = vperm.slane %v982, 1
    %v1036 = vunpack.c.l.b16 %v934
    %v1037 = vunpack.c.h.b16 %v934
    %v1038 = vunpack.c.l.b16 %v935
    %v1039 = vunpack.c.h.b16 %v935
    %v1040 = vunpack.c.l.b16 %v936
    %v1041 = vunpack.c.h.b16 %v936
    %v1042 = vunpack.c.l.b16 %v937
    %v1043 = vunpack.c.h.b16 %v937
    %v1044 = vunpack.c.l.b16 %v938
    %v1045 = vunpack.c.h.b16 %v938
    %v1046 = vunpack.c.l.b16 %v939
    %v1047 = vunpack.c.h.b16 %v939
    %v1048 = vunpack.c.l.b16 %v940
    %v1049 = vunpack.c.h.b16 %v940
    %v1050 = vunpack.c.l.b16 %v941
    %v1051 = vunpack.c.h.b16 %v941
    %v1052 = vunpack.c.l.b16 %v942
    %v1053 = vunpack.c.h.b16 %v942
    %v1054 = vunpack.c.l.b16 %v943
    %v1055 = vunpack.c.h.b16 %v943
    %v1056 = vunpack.c.l.b16 %v944
    %v1057 = vunpack.c.h.b16 %v944
    %v1058 = vunpack.c.l.b16 %v945
    %v1059 = vunpack.c.h.b16 %v945
    %v1060 = vunpack.c.l.b16 %v946
    %v1061 = vunpack.c.h.b16 %v946
    %v1062 = vunpack.c.l.b16 %v947
    %v1063 = vunpack.c.h.b16 %v947
    %v1064 = vunpack.c.l.b16 %v948
    %v1065 = vunpack.c.h.b16 %v948
    %v1066 = vunpack.c.l.b16 %v949
    %v1067 = vunpack.c.h.b16 %v949
    %v1068 = vunpack.c.l.b16 %v950
    %v1069 = vunpack.c.h.b16 %v950
    %v1070 = vunpack.c.l.b16 %v951
    %v1071 = vunpack.c.h.b16 %v951
    %v1072 = vunpack.c.l.b16 %v952
    %v1073 = vunpack.c.h.b16 %v952
    %v1074 = vunpack.c.l.b16 %v953
    %v1075 = vunpack.c.h.b16 %v953
    %v1076 = vunpack.c.l.b16 %v954
    %v1077 = vunpack.c.h.b16 %v954
    %v1078 = vunpack.c.l.b16 %v955
    %v1079 = vunpack.c.h.b16 %v955
    %v1080 = vunpack.c.l.b16 %v956
    %v1081 = vunpack.c.h.b16 %v956
    %v1082 = vunpack.c.l.b16 %v957
    %v1083 = vunpack.c.h.b16 %v957
    %v1084 = vunpack.c.l.b16 %v958
    %v1085 = vunpack.c.h.b16 %v958
    %v1086 = vunpack.c.l.b16 %v959
    %v1087 = vunpack.c.h.b16 %v959
    %v1088 = vunpack.c.l.b16 %v960
    %v1089 = vunpack.c.h.b16 %v960
    %v1090 = vunpack.c.l.b16 %v961
    %v1091 = vunpack.c.h.b16 %v961
    %v1092 = vunpack.c.l.b16 %v962
    %v1093 = vunpack.c.h.b16 %v962
    %v1094 = vunpack.c.l.b16 %v963
    %v1095 = vunpack.c.h.b16 %v963
    %v1096 = vunpack.c.l.b16 %v964
    %v1097 = vunpack.c.h.b16 %v964
    %v1098 = vunpack.c.l.b16 %v965
    %v1099 = vunpack.c.h.b16 %v965
    %v1100 = vunpack.c.l.b16 %v966
    %v1101 = vunpack.c.h.b16 %v966
    %v1102 = vunpack.c.l.b16 %v967
    %v1103 = vunpack.c.h.b16 %v967
    %v1104 = vunpack.c.l.b16 %v968
    %v1105 = vunpack.c.h.b16 %v968
    %v1106 = vunpack.c.l.b16 %v969
    %v1107 = vunpack.c.h.b16 %v969
    %v1108 = vunpack.c.l.b16 %v970
    %v1109 = vunpack.c.h.b16 %v970
    %v1110 = vunpack.c.l.b16 %v971
    %v1111 = vunpack.c.h.b16 %v971
    %v1112 = vunpack.c.l.b16 %v972
    %v1113 = vunpack.c.h.b16 %v972
    %v1114 = vunpack.c.l.b16 %v973
    %v1115 = vunpack.c.h.b16 %v973
    %v1116 = vunpack.c.l.b16 %v974
    %v1117 = vunpack.c.h.b16 %v974
    %v1118 = vunpack.c.l.b16 %v975
    %v1119 = vunpack.c.h.b16 %v975
    %v1120 = vunpack.c.l.b16 %v976
    %v1121 = vunpack.c.h.b16 %v976
    %v1122 = vunpack.c.l.b16 %v977
    %v1123 = vunpack.c.h.b16 %v977
    %v1124 = vunpack.c.l.b16 %v978
    %v1125 = vunpack.c.h.b16 %v978
    %v1126 = vunpack.c.l.b16 %v979
    %v1127 = vunpack.c.h.b16 %v979
    %v1128 = vunpack.c.l.b16 %v980
    %v1129 = vunpack.c.h.b16 %v980
    %v1130 = vunpack.c.l.b16 %v981
    %v1131 = vunpack.c.h.b16 %v981
    %v1132 = vpack.c.b16 %v1038, %v1036
    %v1133 = vpack.c.b16 %v1039, %v1037
    %v1134 = vpack.c.b16 %v1042, %v1040
    %v1135 = vpack.c.b16 %v1043, %v1041
    %v1136 = vpack.c.b16 %v1046, %v1044
    %v1137 = vpack.c.b16 %v1047, %v1045
    %v1138 = vpack.c.b16 %v1050, %v1048
    %v1139 = vpack.c.b16 %v1051, %v1049
    %v1140 = vpack.c.b16 %v1054, %v1052
    %v1141 = vpack.c.b16 %v1055, %v1053
    %v1142 = vpack.c.b16 %v1058, %v1056
    %v1143 = vpack.c.b16 %v1059, %v1057
    %v1144 = vpack.c.b16 %v1062, %v1060
    %v1145 = vpack.c.b16 %v1063, %v1061
    %v1146 = vpack.c.b16 %v1066, %v1064
    %v1147 = vpack.c.b16 %v1067, %v1065
    %v1148 = vpack.c.b16 %v1070, %v1068
    %v1149 = vpack.c.b16 %v1071, %v1069
    %v1150 = vpack.c.b16 %v1074, %v1072
    %v1151 = vpack.c.b16 %v1075, %v1073
    %v1152 = vpack.c.b16 %v1078, %v1076
    %v1153 = vpack.c.b16 %v1079, %v1077
    %v1154 = vpack.c.b16 %v1082, %v1080
    %v1155 = vpack.c.b16 %v1083, %v1081
    %v1156 = vpack.c.b16 %v1086, %v1084
    %v1157 = vpack.c.b16 %v1087, %v1085
    %v1158 = vpack.c.b16 %v1090, %v1088
    %v1159 = vpack.c.b16 %v1091, %v1089
    %v1160 = vpack.c.b16 %v1094, %v1092
    %v1161 = vpack.c.b16 %v1095, %v1093
    %v1162 = vpack.c.b16 %v1098, %v1096
    %v1163 = vpack.c.b16 %v1099, %v1097
    %v1164 = vpack.c.b16 %v1102, %v1100
    %v1165 = vpack.c.b16 %v1103, %v1101
    %v1166 = vpack.c.b16 %v1106, %v1104
    %v1167 = vpack.c.b16 %v1107, %v1105
    %v1168 = vpack.c.b16 %v1110, %v1108
    %v1169 = vpack.c.b16 %v1111, %v1109
    %v1170 = vpack.c.b16 %v1114, %v1112
    %v1171 = vpack.c.b16 %v1115, %v1113
    %v1172 = vpack.c.b16 %v1118, %v1116
    %v1173 = vpack.c.b16 %v1119, %v1117
    %v1174 = vpack.c.b16 %v1122, %v1120
    %v1175 = vpack.c.b16 %v1123, %v1121
    %v1176 = vpack.c.b16 %v1126, %v1124
    %v1177 = vpack.c.b16 %v1127, %v1125
    %v1178 = vpack.c.b16 %v1130, %v1128
    %v1179 = vpack.c.b16 %v1131, %v1129
    %1228 = vmatpush.bf16.msra.mxu0 %v1146
    %1229 = vmatpush.bf16.msra.mxu0 %v1144
    %1230 = vmatpush.bf16.msra.mxu0 %v1142
    %1231 = vmatpush.bf16.msra.mxu0 %v1140
    %1232 = vmatpush.bf16.msra.mxu0 %v1138
    %1233 = vmatpush.bf16.msra.mxu0 %v1136
    %1234 = vmatpush.bf16.msra.mxu0 %v1134
    %1235 = vmatpush.bf16.msra.mxu0 %v1132
    %1236 = vmatmul.bf16.gmra.mxu0 %v906
    %v1237 = vpop.f32.mrf.mxu0
    %v1238 = vadd.f32 %v984, %v1237
    %v1239 = vpop.f32.mrf.mxu0
    %v1240 = vadd.f32 %v984, %v1239
    %1241 = vmatmul.bf16.gmra.mxu0 %v907
    %v1242 = vpop.f32.mrf.mxu0
    %v1243 = vadd.f32 %v984, %v1242
    %v1244 = vpop.f32.mrf.mxu0
    %v1245 = vadd.f32 %v984, %v1244
    %1246 = vdwg.mxu0
    %1247 = vmatpush.bf16.msra.mxu0 %v1162
    %1248 = vmatpush.bf16.msra.mxu0 %v1160
    %1249 = vmatpush.bf16.msra.mxu0 %v1158
    %1250 = vmatpush.bf16.msra.mxu0 %v1156
    %1251 = vmatpush.bf16.msra.mxu0 %v1154
    %1252 = vmatpush.bf16.msra.mxu0 %v1152
    %1253 = vmatpush.bf16.msra.mxu0 %v1150
    %1254 = vmatpush.bf16.msra.mxu0 %v1148
    %1255 = vmatmul.bf16.gmra.mxu0 %v918
    %v1256 = vpop.f32.mrf.mxu0
    %v1257 = vadd.f32 %v1238, %v1256
    %v1258 = vpop.f32.mrf.mxu0
    %v1259 = vadd.f32 %v1240, %v1258
    %1260 = vmatmul.bf16.gmra.mxu0 %v919
    %v1261 = vpop.f32.mrf.mxu0
    %v1262 = vadd.f32 %v1243, %v1261
    %v1263 = vpop.f32.mrf.mxu0
    %v1264 = vadd.f32 %v1245, %v1263
    %1265 = vdwg.mxu0
    %1266 = vmatpush.bf16.msra.mxu0 %v1178
    %1267 = vmatpush.bf16.msra.mxu0 %v1176
    %1268 = vmatpush.bf16.msra.mxu0 %v1174
    %1269 = vmatpush.bf16.msra.mxu0 %v1172
    %1270 = vmatpush.bf16.msra.mxu0 %v1170
    %1271 = vmatpush.bf16.msra.mxu0 %v1168
    %1272 = vmatpush.bf16.msra.mxu0 %v1166
    %1273 = vmatpush.bf16.msra.mxu0 %v1164
    %1274 = vmatmul.bf16.gmra.mxu0 %v930
    %v1275 = vpop.f32.mrf.mxu0
    %v1276 = vadd.f32 %v1257, %v1275
    %v1277 = vpop.f32.mrf.mxu0
    %v1278 = vadd.f32 %v1259, %v1277
    %1279 = vmatmul.bf16.gmra.mxu0 %v931
    %v1280 = vpop.f32.mrf.mxu0
    %v1281 = vadd.f32 %v1262, %v1280
    %v1282 = vpop.f32.mrf.mxu0
    %v1283 = vadd.f32 %v1264, %v1282
    %1284 = vdwg.mxu0
    %1285 = vmatpush.bf16.msra.mxu0 %v1147
    %1286 = vmatpush.bf16.msra.mxu0 %v1145
    %1287 = vmatpush.bf16.msra.mxu0 %v1143
    %1288 = vmatpush.bf16.msra.mxu0 %v1141
    %1289 = vmatpush.bf16.msra.mxu0 %v1139
    %1290 = vmatpush.bf16.msra.mxu0 %v1137
    %1291 = vmatpush.bf16.msra.mxu0 %v1135
    %1292 = vmatpush.bf16.msra.mxu0 %v1133
    %1293 = vmatmul.bf16.gmra.mxu0 %v906
    %v1294 = vpop.f32.mrf.mxu0
    %v1295 = vadd.f32 %v985, %v1294
    %v1296 = vpop.f32.mrf.mxu0
    %v1297 = vadd.f32 %v985, %v1296
    %1298 = vmatmul.bf16.gmra.mxu0 %v907
    %v1299 = vpop.f32.mrf.mxu0
    %v1300 = vadd.f32 %v985, %v1299
    %v1301 = vpop.f32.mrf.mxu0
    %v1302 = vadd.f32 %v985, %v1301
    %1303 = vdwg.mxu0
    %1304 = vmatpush.bf16.msra.mxu0 %v1163
    %1305 = vmatpush.bf16.msra.mxu0 %v1161
    %1306 = vmatpush.bf16.msra.mxu0 %v1159
    %1307 = vmatpush.bf16.msra.mxu0 %v1157
    %1308 = vmatpush.bf16.msra.mxu0 %v1155
    %1309 = vmatpush.bf16.msra.mxu0 %v1153
    %1310 = vmatpush.bf16.msra.mxu0 %v1151
    %1311 = vmatpush.bf16.msra.mxu0 %v1149
    %1312 = vmatmul.bf16.gmra.mxu0 %v918
    %v1313 = vpop.f32.mrf.mxu0
    %v1314 = vadd.f32 %v1295, %v1313
    %v1315 = vpop.f32.mrf.mxu0
    %v1316 = vadd.f32 %v1297, %v1315
    %1317 = vmatmul.bf16.gmra.mxu0 %v919
    %v1318 = vpop.f32.mrf.mxu0
    %v1319 = vadd.f32 %v1300, %v1318
    %v1320 = vpop.f32.mrf.mxu0
    %v1321 = vadd.f32 %v1302, %v1320
    %1322 = vdwg.mxu0
    %1323 = vmatpush.bf16.msra.mxu0 %v1179
    %1324 = vmatpush.bf16.msra.mxu0 %v1177
    %1325 = vmatpush.bf16.msra.mxu0 %v1175
    %1326 = vmatpush.bf16.msra.mxu0 %v1173
    %1327 = vmatpush.bf16.msra.mxu0 %v1171
    %1328 = vmatpush.bf16.msra.mxu0 %v1169
    %1329 = vmatpush.bf16.msra.mxu0 %v1167
    %1330 = vmatpush.bf16.msra.mxu0 %v1165
    %1331 = vmatmul.bf16.gmra.mxu0 %v930
    %v1332 = vpop.f32.mrf.mxu0
    %v1333 = vadd.f32 %v1314, %v1332
    %v1334 = vpop.f32.mrf.mxu0
    %v1335 = vadd.f32 %v1316, %v1334
    %1336 = vmatmul.bf16.gmra.mxu0 %v931
    %v1337 = vpop.f32.mrf.mxu0
    %v1338 = vadd.f32 %v1319, %v1337
    %v1339 = vpop.f32.mrf.mxu0
    %v1340 = vadd.f32 %v1321, %v1339
    %1341 = vdwg.mxu0
    %v1342 = vxor.u32 %v1333, 2147483648
    %v1343 = vxor.u32 %v1335, 2147483648
    %v1344 = vxor.u32 %v1338, 2147483648
    %v1345 = vxor.u32 %v1340, 2147483648
    %v1346 = vmul.f32 %v1342, 1.442695
    %v1347 = vpow.pop %v1346
    %v1348 = vmul.f32 %v1343, 1.442695
    %v1349 = vpow.pop %v1348
    %v1350 = vmul.f32 %v1344, 1.442695
    %v1351 = vpow.pop %v1350
    %v1352 = vmul.f32 %v1345, 1.442695
    %v1353 = vpow.pop %v1352
    %v1354 = vadd.f32 %v1347, 1.0
    %v1355 = vadd.f32 %v1349, 1.0
    %v1356 = vadd.f32 %v1351, 1.0
    %v1357 = vadd.f32 %v1353, 1.0
    %v1358 = vrcp.pop %v1354
    %v1359 = vmul.f32 %v1354, %v1358
    %v1360 = vsub.f32 1.0, %v1359
    %v1361 = vmul.f32 %v1358, %v1360
    %v1362 = vadd.f32 %v1358, %v1361
    %vm1363 = vweird.f32 %v1354
    %vm1364 = vweird.f32 %v1358
    %vm1365 = vmor %vm1363, %vm1364
    %v1366 = vsel %vm1365, %v1358, %v1362
    %v1367 = vand.u32 2147483647, %v1354
    %vm1368 = vcmp.eq.f32.partialorder %v1367, 8.507059e+37
    %v1369 = vand.u32 %v1354, 2147483648
    %v1370 = vor.u32 1.1754944e-38, %v1369
    %v1371 = vsel %vm1368, %v1370, %v1366
    %v1372 = vmul.f32 1.0, %v1371
    %v1373 = vrcp.pop %v1355
    %v1374 = vmul.f32 %v1355, %v1373
    %v1375 = vsub.f32 1.0, %v1374
    %v1376 = vmul.f32 %v1373, %v1375
    %v1377 = vadd.f32 %v1373, %v1376
    %vm1378 = vweird.f32 %v1355
    %vm1379 = vweird.f32 %v1373
    %vm1380 = vmor %vm1378, %vm1379
    %v1381 = vsel %vm1380, %v1373, %v1377
    %v1382 = vand.u32 2147483647, %v1355
    %vm1383 = vcmp.eq.f32.partialorder %v1382, 8.507059e+37
    %v1384 = vand.u32 %v1355, 2147483648
    %v1385 = vor.u32 1.1754944e-38, %v1384
    %v1386 = vsel %vm1383, %v1385, %v1381
    %v1387 = vmul.f32 1.0, %v1386
    %v1388 = vrcp.pop %v1356
    %v1389 = vmul.f32 %v1356, %v1388
    %v1390 = vsub.f32 1.0, %v1389
    %v1391 = vmul.f32 %v1388, %v1390
    %v1392 = vadd.f32 %v1388, %v1391
    %vm1393 = vweird.f32 %v1356
    %vm1394 = vweird.f32 %v1388
    %vm1395 = vmor %vm1393, %vm1394
    %v1396 = vsel %vm1395, %v1388, %v1392
    %v1397 = vand.u32 2147483647, %v1356
    %vm1398 = vcmp.eq.f32.partialorder %v1397, 8.507059e+37
    %v1399 = vand.u32 %v1356, 2147483648
    %v1400 = vor.u32 1.1754944e-38, %v1399
    %v1401 = vsel %vm1398, %v1400, %v1396
    %v1402 = vmul.f32 1.0, %v1401
    %v1403 = vrcp.pop %v1357
    %v1404 = vmul.f32 %v1357, %v1403
    %v1405 = vsub.f32 1.0, %v1404
    %v1406 = vmul.f32 %v1403, %v1405
    %v1407 = vadd.f32 %v1403, %v1406
    %vm1408 = vweird.f32 %v1357
    %vm1409 = vweird.f32 %v1403
    %vm1410 = vmor %vm1408, %vm1409
    %v1411 = vsel %vm1410, %v1403, %v1407
    %v1412 = vand.u32 2147483647, %v1357
    %vm1413 = vcmp.eq.f32.partialorder %v1412, 8.507059e+37
    %v1414 = vand.u32 %v1357, 2147483648
    %v1415 = vor.u32 1.1754944e-38, %v1414
    %v1416 = vsel %vm1413, %v1415, %v1411
    %v1417 = vmul.f32 1.0, %v1416
    %v1418 = vmul.f32 %v1276, %v1372
    %v1419 = vmul.f32 %v1278, %v1387
    %v1420 = vmul.f32 %v1281, %v1402
    %v1421 = vmul.f32 %v1283, %v1417
    %v1422 = vadd.f32 %v1418, %v852
    %v1423 = vadd.f32 %v1419, %v853
    %v1424 = vadd.f32 %v1420, %v854
    %v1425 = vadd.f32 %v1421, %v855
    %vm1426 = vcmp.ge.s32.totalorder %v284, 4
    %vm1427 = vcmp.ge.s32.totalorder %v285, 4
    %v1428 = vrot.slane %v1422, 4
    %v1429 = vrot.slane %v1423, 4
    %v1430 = vrot.slane %v1424, 4
    %v1431 = vrot.slane %v1425, 4
    %vm1432 = vcmp.lt.s32.totalorder %v284, 4
    %v1433 = vsel %vm1432, %v1430, %v1431
    %v1434 = vsel %vm1432, %v1429, %v1430
    %v1435 = vsel %vm1432, %v1428, %v1429
    %v1436 = vsel %vm1432, %v1431, %v1428
    %v1437 = vsel %vm1426, %v1436, 0.0
    %v1438 = vsel %vm1427, %v1435, 0.0
    %v1439 = vsel %vm1426, %v1434, 0.0
    %v1440 = vsel %vm1427, %v1433, 0.0
    %vm1441 = vcmp.lt.s32.totalorder %v284, 12
    %vm1442 = vcmp.lt.s32.totalorder %v285, 12
    %v1443 = vsel %vm1441, %v1435, 0.0
    %v1444 = vsel %vm1442, %v1434, 0.0
    %v1445 = vsel %vm1441, %v1433, 0.0
    %v1446 = vsel %vm1442, %v1436, 0.0
    %v1447 = vpack.c.bf16 %v1437, %v1437
    %v1448 = vpack.c.bf16 %v1438, %v1438
    %v1449 = vpack.c.bf16 %v1439, %v1439
    %v1450 = vpack.c.bf16 %v1440, %v1440
    %v1451 = vpack.c.bf16 %v1422, %v1422
    %v1452 = vpack.c.bf16 %v1423, %v1423
    %v1453 = vpack.c.bf16 %v1424, %v1424
    %v1454 = vpack.c.bf16 %v1425, %v1425
    %v1455 = vpack.c.bf16 %v1443, %v1443
    %v1456 = vpack.c.bf16 %v1444, %v1444
    %v1457 = vpack.c.bf16 %v1445, %v1445
    %v1458 = vpack.c.bf16 %v1446, %v1446
    %v1463 = vunpack.c.l.b16 %v1447
    %v1464 = vunpack.c.l.b16 %v1448
    %v1465 = vunpack.c.l.b16 %v1449
    %v1466 = vunpack.c.l.b16 %v1450
    %v1467 = vpack.c.b16 %v1464, %v1463
    %v1468 = vpack.c.b16 %v1466, %v1465
    %v1475 = vunpack.c.l.b16 %v1451
    %v1476 = vunpack.c.l.b16 %v1452
    %v1477 = vunpack.c.l.b16 %v1453
    %v1478 = vunpack.c.l.b16 %v1454
    %v1479 = vpack.c.b16 %v1476, %v1475
    %v1480 = vpack.c.b16 %v1478, %v1477
    %v1487 = vunpack.c.l.b16 %v1455
    %v1488 = vunpack.c.l.b16 %v1456
    %v1489 = vunpack.c.l.b16 %v1457
    %v1490 = vunpack.c.l.b16 %v1458
    %v1491 = vpack.c.b16 %v1488, %v1487
    %v1492 = vpack.c.b16 %v1490, %v1489
    %v1495 = vld [vmem:[#allocation11] sm:$0xff]
    %v1496 = vld [vmem:[#allocation11 + $0x8] sm:$0xff]
    %v1497 = vld [vmem:[#allocation11 + $0x10] sm:$0xff]
    %v1498 = vld [vmem:[#allocation11 + $0x18] sm:$0xff]
    %v1499 = vld [vmem:[#allocation11 + $0x20] sm:$0xff]
    %v1500 = vld [vmem:[#allocation11 + $0x28] sm:$0xff]
    %v1501 = vld [vmem:[#allocation11 + $0x30] sm:$0xff]
    %v1502 = vld [vmem:[#allocation11 + $0x38] sm:$0xff]
    %v1503 = vld [vmem:[#allocation11 + $0x40] sm:$0xff]
    %v1504 = vld [vmem:[#allocation11 + $0x48] sm:$0xff]
    %v1505 = vld [vmem:[#allocation11 + $0x50] sm:$0xff]
    %v1506 = vld [vmem:[#allocation11 + $0x58] sm:$0xff]
    %v1507 = vld [vmem:[#allocation11 + $0x60] sm:$0xff]
    %v1508 = vld [vmem:[#allocation11 + $0x68] sm:$0xff]
    %v1509 = vld [vmem:[#allocation11 + $0x70] sm:$0xff]
    %v1510 = vld [vmem:[#allocation11 + $0x78] sm:$0xff]
    %v1511 = vld [vmem:[#allocation11 + $0x80] sm:$0xff]
    %v1512 = vld [vmem:[#allocation11 + $0x88] sm:$0xff]
    %v1513 = vld [vmem:[#allocation11 + $0x90] sm:$0xff]
    %v1514 = vld [vmem:[#allocation11 + $0x98] sm:$0xff]
    %v1515 = vld [vmem:[#allocation11 + $0xa0] sm:$0xff]
    %v1516 = vld [vmem:[#allocation11 + $0xa8] sm:$0xff]
    %v1517 = vld [vmem:[#allocation11 + $0xb0] sm:$0xff]
    %v1518 = vld [vmem:[#allocation11 + $0xb8] sm:$0xff]
    %v1519 = vld [vmem:[#allocation11 + $0xc0] sm:$0xff]
    %v1520 = vld [vmem:[#allocation11 + $0xc8] sm:$0xff]
    %v1521 = vld [vmem:[#allocation11 + $0xd0] sm:$0xff]
    %v1522 = vld [vmem:[#allocation11 + $0xd8] sm:$0xff]
    %v1523 = vld [vmem:[#allocation11 + $0xe0] sm:$0xff]
    %v1524 = vld [vmem:[#allocation11 + $0xe8] sm:$0xff]
    %v1525 = vld [vmem:[#allocation11 + $0xf0] sm:$0xff]
    %v1526 = vld [vmem:[#allocation11 + $0xf8] sm:$0xff]
    %v1527 = vld [vmem:[#allocation11 + $0x100] sm:$0xff]
    %v1528 = vld [vmem:[#allocation11 + $0x108] sm:$0xff]
    %v1529 = vld [vmem:[#allocation11 + $0x110] sm:$0xff]
    %v1530 = vld [vmem:[#allocation11 + $0x118] sm:$0xff]
    %v1531 = vld [vmem:[#allocation11 + $0x120] sm:$0xff]
    %v1532 = vld [vmem:[#allocation11 + $0x128] sm:$0xff]
    %v1533 = vld [vmem:[#allocation11 + $0x130] sm:$0xff]
    %v1534 = vld [vmem:[#allocation11 + $0x138] sm:$0xff]
    %v1535 = vld [vmem:[#allocation11 + $0x140] sm:$0xff]
    %v1536 = vld [vmem:[#allocation11 + $0x148] sm:$0xff]
    %v1537 = vld [vmem:[#allocation11 + $0x150] sm:$0xff]
    %v1538 = vld [vmem:[#allocation11 + $0x158] sm:$0xff]
    %v1539 = vld [vmem:[#allocation11 + $0x160] sm:$0xff]
    %v1540 = vld [vmem:[#allocation11 + $0x168] sm:$0xff]
    %v1541 = vld [vmem:[#allocation11 + $0x170] sm:$0xff]
    %v1542 = vld [vmem:[#allocation11 + $0x178] sm:$0xff]
    %v1543 = vld [vmem:[%s8] sm:$0x3]
    %v1545 = vperm.slane %v1543, 0
    %v1546 = vperm.slane %v1543, 1
    %v1597 = vunpack.c.l.b16 %v1495
    %v1598 = vunpack.c.h.b16 %v1495
    %v1599 = vunpack.c.l.b16 %v1496
    %v1600 = vunpack.c.h.b16 %v1496
    %v1601 = vunpack.c.l.b16 %v1497
    %v1602 = vunpack.c.h.b16 %v1497
    %v1603 = vunpack.c.l.b16 %v1498
    %v1604 = vunpack.c.h.b16 %v1498
    %v1605 = vunpack.c.l.b16 %v1499
    %v1606 = vunpack.c.h.b16 %v1499
    %v1607 = vunpack.c.l.b16 %v1500
    %v1608 = vunpack.c.h.b16 %v1500
    %v1609 = vunpack.c.l.b16 %v1501
    %v1610 = vunpack.c.h.b16 %v1501
    %v1611 = vunpack.c.l.b16 %v1502
    %v1612 = vunpack.c.h.b16 %v1502
    %v1613 = vunpack.c.l.b16 %v1503
    %v1614 = vunpack.c.h.b16 %v1503
    %v1615 = vunpack.c.l.b16 %v1504
    %v1616 = vunpack.c.h.b16 %v1504
    %v1617 = vunpack.c.l.b16 %v1505
    %v1618 = vunpack.c.h.b16 %v1505
    %v1619 = vunpack.c.l.b16 %v1506
    %v1620 = vunpack.c.h.b16 %v1506
    %v1621 = vunpack.c.l.b16 %v1507
    %v1622 = vunpack.c.h.b16 %v1507
    %v1623 = vunpack.c.l.b16 %v1508
    %v1624 = vunpack.c.h.b16 %v1508
    %v1625 = vunpack.c.l.b16 %v1509
    %v1626 = vunpack.c.h.b16 %v1509
    %v1627 = vunpack.c.l.b16 %v1510
    %v1628 = vunpack.c.h.b16 %v1510
    %v1629 = vunpack.c.l.b16 %v1511
    %v1630 = vunpack.c.h.b16 %v1511
    %v1631 = vunpack.c.l.b16 %v1512
    %v1632 = vunpack.c.h.b16 %v1512
    %v1633 = vunpack.c.l.b16 %v1513
    %v1634 = vunpack.c.h.b16 %v1513
    %v1635 = vunpack.c.l.b16 %v1514
    %v1636 = vunpack.c.h.b16 %v1514
    %v1637 = vunpack.c.l.b16 %v1515
    %v1638 = vunpack.c.h.b16 %v1515
    %v1639 = vunpack.c.l.b16 %v1516
    %v1640 = vunpack.c.h.b16 %v1516
    %v1641 = vunpack.c.l.b16 %v1517
    %v1642 = vunpack.c.h.b16 %v1517
    %v1643 = vunpack.c.l.b16 %v1518
    %v1644 = vunpack.c.h.b16 %v1518
    %v1645 = vunpack.c.l.b16 %v1519
    %v1646 = vunpack.c.h.b16 %v1519
    %v1647 = vunpack.c.l.b16 %v1520
    %v1648 = vunpack.c.h.b16 %v1520
    %v1649 = vunpack.c.l.b16 %v1521
    %v1650 = vunpack.c.h.b16 %v1521
    %v1651 = vunpack.c.l.b16 %v1522
    %v1652 = vunpack.c.h.b16 %v1522
    %v1653 = vunpack.c.l.b16 %v1523
    %v1654 = vunpack.c.h.b16 %v1523
    %v1655 = vunpack.c.l.b16 %v1524
    %v1656 = vunpack.c.h.b16 %v1524
    %v1657 = vunpack.c.l.b16 %v1525
    %v1658 = vunpack.c.h.b16 %v1525
    %v1659 = vunpack.c.l.b16 %v1526
    %v1660 = vunpack.c.h.b16 %v1526
    %v1661 = vunpack.c.l.b16 %v1527
    %v1662 = vunpack.c.h.b16 %v1527
    %v1663 = vunpack.c.l.b16 %v1528
    %v1664 = vunpack.c.h.b16 %v1528
    %v1665 = vunpack.c.l.b16 %v1529
    %v1666 = vunpack.c.h.b16 %v1529
    %v1667 = vunpack.c.l.b16 %v1530
    %v1668 = vunpack.c.h.b16 %v1530
    %v1669 = vunpack.c.l.b16 %v1531
    %v1670 = vunpack.c.h.b16 %v1531
    %v1671 = vunpack.c.l.b16 %v1532
    %v1672 = vunpack.c.h.b16 %v1532
    %v1673 = vunpack.c.l.b16 %v1533
    %v1674 = vunpack.c.h.b16 %v1533
    %v1675 = vunpack.c.l.b16 %v1534
    %v1676 = vunpack.c.h.b16 %v1534
    %v1677 = vunpack.c.l.b16 %v1535
    %v1678 = vunpack.c.h.b16 %v1535
    %v1679 = vunpack.c.l.b16 %v1536
    %v1680 = vunpack.c.h.b16 %v1536
    %v1681 = vunpack.c.l.b16 %v1537
    %v1682 = vunpack.c.h.b16 %v1537
    %v1683 = vunpack.c.l.b16 %v1538
    %v1684 = vunpack.c.h.b16 %v1538
    %v1685 = vunpack.c.l.b16 %v1539
    %v1686 = vunpack.c.h.b16 %v1539
    %v1687 = vunpack.c.l.b16 %v1540
    %v1688 = vunpack.c.h.b16 %v1540
    %v1689 = vunpack.c.l.b16 %v1541
    %v1690 = vunpack.c.h.b16 %v1541
    %v1691 = vunpack.c.l.b16 %v1542
    %v1692 = vunpack.c.h.b16 %v1542
    %v1693 = vpack.c.b16 %v1599, %v1597
    %v1694 = vpack.c.b16 %v1600, %v1598
    %v1695 = vpack.c.b16 %v1603, %v1601
    %v1696 = vpack.c.b16 %v1604, %v1602
    %v1697 = vpack.c.b16 %v1607, %v1605
    %v1698 = vpack.c.b16 %v1608, %v1606
    %v1699 = vpack.c.b16 %v1611, %v1609
    %v1700 = vpack.c.b16 %v1612, %v1610
    %v1701 = vpack.c.b16 %v1615, %v1613
    %v1702 = vpack.c.b16 %v1616, %v1614
    %v1703 = vpack.c.b16 %v1619, %v1617
    %v1704 = vpack.c.b16 %v1620, %v1618
    %v1705 = vpack.c.b16 %v1623, %v1621
    %v1706 = vpack.c.b16 %v1624, %v1622
    %v1707 = vpack.c.b16 %v1627, %v1625
    %v1708 = vpack.c.b16 %v1628, %v1626
    %v1709 = vpack.c.b16 %v1631, %v1629
    %v1710 = vpack.c.b16 %v1632, %v1630
    %v1711 = vpack.c.b16 %v1635, %v1633
    %v1712 = vpack.c.b16 %v1636, %v1634
    %v1713 = vpack.c.b16 %v1639, %v1637
    %v1714 = vpack.c.b16 %v1640, %v1638
    %v1715 = vpack.c.b16 %v1643, %v1641
    %v1716 = vpack.c.b16 %v1644, %v1642
    %v1717 = vpack.c.b16 %v1647, %v1645
    %v1718 = vpack.c.b16 %v1648, %v1646
    %v1719 = vpack.c.b16 %v1651, %v1649
    %v1720 = vpack.c.b16 %v1652, %v1650
    %v1721 = vpack.c.b16 %v1655, %v1653
    %v1722 = vpack.c.b16 %v1656, %v1654
    %v1723 = vpack.c.b16 %v1659, %v1657
    %v1724 = vpack.c.b16 %v1660, %v1658
    %v1725 = vpack.c.b16 %v1663, %v1661
    %v1726 = vpack.c.b16 %v1664, %v1662
    %v1727 = vpack.c.b16 %v1667, %v1665
    %v1728 = vpack.c.b16 %v1668, %v1666
    %v1729 = vpack.c.b16 %v1671, %v1669
    %v1730 = vpack.c.b16 %v1672, %v1670
    %v1731 = vpack.c.b16 %v1675, %v1673
    %v1732 = vpack.c.b16 %v1676, %v1674
    %v1733 = vpack.c.b16 %v1679, %v1677
    %v1734 = vpack.c.b16 %v1680, %v1678
    %v1735 = vpack.c.b16 %v1683, %v1681
    %v1736 = vpack.c.b16 %v1684, %v1682
    %v1737 = vpack.c.b16 %v1687, %v1685
    %v1738 = vpack.c.b16 %v1688, %v1686
    %v1739 = vpack.c.b16 %v1691, %v1689
    %v1740 = vpack.c.b16 %v1692, %v1690
    %1789 = vmatpush.bf16.msra.mxu0 %v1707
    %1790 = vmatpush.bf16.msra.mxu0 %v1705
    %1791 = vmatpush.bf16.msra.mxu0 %v1703
    %1792 = vmatpush.bf16.msra.mxu0 %v1701
    %1793 = vmatpush.bf16.msra.mxu0 %v1699
    %1794 = vmatpush.bf16.msra.mxu0 %v1697
    %1795 = vmatpush.bf16.msra.mxu0 %v1695
    %1796 = vmatpush.bf16.msra.mxu0 %v1693
    %1797 = vmatmul.bf16.gmra.mxu0 %v1467
    %v1798 = vpop.f32.mrf.mxu0
    %v1799 = vadd.f32 %v1545, %v1798
    %v1800 = vpop.f32.mrf.mxu0
    %v1801 = vadd.f32 %v1545, %v1800
    %1802 = vmatmul.bf16.gmra.mxu0 %v1468
    %v1803 = vpop.f32.mrf.mxu0
    %v1804 = vadd.f32 %v1545, %v1803
    %v1805 = vpop.f32.mrf.mxu0
    %v1806 = vadd.f32 %v1545, %v1805
    %1807 = vdwg.mxu0
    %1808 = vmatpush.bf16.msra.mxu0 %v1723
    %1809 = vmatpush.bf16.msra.mxu0 %v1721
    %1810 = vmatpush.bf16.msra.mxu0 %v1719
    %1811 = vmatpush.bf16.msra.mxu0 %v1717
    %1812 = vmatpush.bf16.msra.mxu0 %v1715
    %1813 = vmatpush.bf16.msra.mxu0 %v1713
    %1814 = vmatpush.bf16.msra.mxu0 %v1711
    %1815 = vmatpush.bf16.msra.mxu0 %v1709
    %1816 = vmatmul.bf16.gmra.mxu0 %v1479
    %v1817 = vpop.f32.mrf.mxu0
    %v1818 = vadd.f32 %v1799, %v1817
    %v1819 = vpop.f32.mrf.mxu0
    %v1820 = vadd.f32 %v1801, %v1819
    %1821 = vmatmul.bf16.gmra.mxu0 %v1480
    %v1822 = vpop.f32.mrf.mxu0
    %v1823 = vadd.f32 %v1804, %v1822
    %v1824 = vpop.f32.mrf.mxu0
    %v1825 = vadd.f32 %v1806, %v1824
    %1826 = vdwg.mxu0
    %1827 = vmatpush.bf16.msra.mxu0 %v1739
    %1828 = vmatpush.bf16.msra.mxu0 %v1737
    %1829 = vmatpush.bf16.msra.mxu0 %v1735
    %1830 = vmatpush.bf16.msra.mxu0 %v1733
    %1831 = vmatpush.bf16.msra.mxu0 %v1731
    %1832 = vmatpush.bf16.msra.mxu0 %v1729
    %1833 = vmatpush.bf16.msra.mxu0 %v1727
    %1834 = vmatpush.bf16.msra.mxu0 %v1725
    %1835 = vmatmul.bf16.gmra.mxu0 %v1491
    %v1836 = vpop.f32.mrf.mxu0
    %v1837 = vadd.f32 %v1818, %v1836
    %v1838 = vpop.f32.mrf.mxu0
    %v1839 = vadd.f32 %v1820, %v1838
    %1840 = vmatmul.bf16.gmra.mxu0 %v1492
    %v1841 = vpop.f32.mrf.mxu0
    %v1842 = vadd.f32 %v1823, %v1841
    %v1843 = vpop.f32.mrf.mxu0
    %v1844 = vadd.f32 %v1825, %v1843
    %1845 = vdwg.mxu0
    %1846 = vmatpush.bf16.msra.mxu0 %v1708
    %1847 = vmatpush.bf16.msra.mxu0 %v1706
    %1848 = vmatpush.bf16.msra.mxu0 %v1704
    %1849 = vmatpush.bf16.msra.mxu0 %v1702
    %1850 = vmatpush.bf16.msra.mxu0 %v1700
    %1851 = vmatpush.bf16.msra.mxu0 %v1698
    %1852 = vmatpush.bf16.msra.mxu0 %v1696
    %1853 = vmatpush.bf16.msra.mxu0 %v1694
    %1854 = vmatmul.bf16.gmra.mxu0 %v1467
    %v1855 = vpop.f32.mrf.mxu0
    %v1856 = vadd.f32 %v1546, %v1855
    %v1857 = vpop.f32.mrf.mxu0
    %v1858 = vadd.f32 %v1546, %v1857
    %1859 = vmatmul.bf16.gmra.mxu0 %v1468
    %v1860 = vpop.f32.mrf.mxu0
    %v1861 = vadd.f32 %v1546, %v1860
    %v1862 = vpop.f32.mrf.mxu0
    %v1863 = vadd.f32 %v1546, %v1862
    %1864 = vdwg.mxu0
    %1865 = vmatpush.bf16.msra.mxu0 %v1724
    %1866 = vmatpush.bf16.msra.mxu0 %v1722
    %1867 = vmatpush.bf16.msra.mxu0 %v1720
    %1868 = vmatpush.bf16.msra.mxu0 %v1718
    %1869 = vmatpush.bf16.msra.mxu0 %v1716
    %1870 = vmatpush.bf16.msra.mxu0 %v1714
    %1871 = vmatpush.bf16.msra.mxu0 %v1712
    %1872 = vmatpush.bf16.msra.mxu0 %v1710
    %1873 = vmatmul.bf16.gmra.mxu0 %v1479
    %v1874 = vpop.f32.mrf.mxu0
    %v1875 = vadd.f32 %v1856, %v1874
    %v1876 = vpop.f32.mrf.mxu0
    %v1877 = vadd.f32 %v1858, %v1876
    %1878 = vmatmul.bf16.gmra.mxu0 %v1480
    %v1879 = vpop.f32.mrf.mxu0
    %v1880 = vadd.f32 %v1861, %v1879
    %v1881 = vpop.f32.mrf.mxu0
    %v1882 = vadd.f32 %v1863, %v1881
    %1883 = vdwg.mxu0
    %1884 = vmatpush.bf16.msra.mxu0 %v1740
    %1885 = vmatpush.bf16.msra.mxu0 %v1738
    %1886 = vmatpush.bf16.msra.mxu0 %v1736
    %1887 = vmatpush.bf16.msra.mxu0 %v1734
    %1888 = vmatpush.bf16.msra.mxu0 %v1732
    %1889 = vmatpush.bf16.msra.mxu0 %v1730
    %1890 = vmatpush.bf16.msra.mxu0 %v1728
    %1891 = vmatpush.bf16.msra.mxu0 %v1726
    %1892 = vmatmul.bf16.gmra.mxu0 %v1491
    %v1893 = vpop.f32.mrf.mxu0
    %v1894 = vadd.f32 %v1875, %v1893
    %v1895 = vpop.f32.mrf.mxu0
    %v1896 = vadd.f32 %v1877, %v1895
    %1897 = vmatmul.bf16.gmra.mxu0 %v1492
    %v1898 = vpop.f32.mrf.mxu0
    %v1899 = vadd.f32 %v1880, %v1898
    %v1900 = vpop.f32.mrf.mxu0
    %v1901 = vadd.f32 %v1882, %v1900
    %1902 = vdwg.mxu0
    %v1903 = vxor.u32 %v1894, 2147483648
    %v1904 = vxor.u32 %v1896, 2147483648
    %v1905 = vxor.u32 %v1899, 2147483648
    %v1906 = vxor.u32 %v1901, 2147483648
    %v1907 = vmul.f32 %v1903, 1.442695
    %v1908 = vpow.pop %v1907
    %v1909 = vmul.f32 %v1904, 1.442695
    %v1910 = vpow.pop %v1909
    %v1911 = vmul.f32 %v1905, 1.442695
    %v1912 = vpow.pop %v1911
    %v1913 = vmul.f32 %v1906, 1.442695
    %v1914 = vpow.pop %v1913
    %v1915 = vadd.f32 %v1908, 1.0
    %v1916 = vadd.f32 %v1910, 1.0
    %v1917 = vadd.f32 %v1912, 1.0
    %v1918 = vadd.f32 %v1914, 1.0
    %v1919 = vrcp.pop %v1915
    %v1920 = vmul.f32 %v1915, %v1919
    %v1921 = vsub.f32 1.0, %v1920
    %v1922 = vmul.f32 %v1919, %v1921
    %v1923 = vadd.f32 %v1919, %v1922
    %vm1924 = vweird.f32 %v1915
    %vm1925 = vweird.f32 %v1919
    %vm1926 = vmor %vm1924, %vm1925
    %v1927 = vsel %vm1926, %v1919, %v1923
    %v1928 = vand.u32 2147483647, %v1915
    %vm1929 = vcmp.eq.f32.partialorder %v1928, 8.507059e+37
    %v1930 = vand.u32 %v1915, 2147483648
    %v1931 = vor.u32 1.1754944e-38, %v1930
    %v1932 = vsel %vm1929, %v1931, %v1927
    %v1933 = vmul.f32 1.0, %v1932
    %v1934 = vrcp.pop %v1916
    %v1935 = vmul.f32 %v1916, %v1934
    %v1936 = vsub.f32 1.0, %v1935
    %v1937 = vmul.f32 %v1934, %v1936
    %v1938 = vadd.f32 %v1934, %v1937
    %vm1939 = vweird.f32 %v1916
    %vm1940 = vweird.f32 %v1934
    %vm1941 = vmor %vm1939, %vm1940
    %v1942 = vsel %vm1941, %v1934, %v1938
    %v1943 = vand.u32 2147483647, %v1916
    %vm1944 = vcmp.eq.f32.partialorder %v1943, 8.507059e+37
    %v1945 = vand.u32 %v1916, 2147483648
    %v1946 = vor.u32 1.1754944e-38, %v1945
    %v1947 = vsel %vm1944, %v1946, %v1942
    %v1948 = vmul.f32 1.0, %v1947
    %v1949 = vrcp.pop %v1917
    %v1950 = vmul.f32 %v1917, %v1949
    %v1951 = vsub.f32 1.0, %v1950
    %v1952 = vmul.f32 %v1949, %v1951
    %v1953 = vadd.f32 %v1949, %v1952
    %vm1954 = vweird.f32 %v1917
    %vm1955 = vweird.f32 %v1949
    %vm1956 = vmor %vm1954, %vm1955
    %v1957 = vsel %vm1956, %v1949, %v1953
    %v1958 = vand.u32 2147483647, %v1917
    %vm1959 = vcmp.eq.f32.partialorder %v1958, 8.507059e+37
    %v1960 = vand.u32 %v1917, 2147483648
    %v1961 = vor.u32 1.1754944e-38, %v1960
    %v1962 = vsel %vm1959, %v1961, %v1957
    %v1963 = vmul.f32 1.0, %v1962
    %v1964 = vrcp.pop %v1918
    %v1965 = vmul.f32 %v1918, %v1964
    %v1966 = vsub.f32 1.0, %v1965
    %v1967 = vmul.f32 %v1964, %v1966
    %v1968 = vadd.f32 %v1964, %v1967
    %vm1969 = vweird.f32 %v1918
    %vm1970 = vweird.f32 %v1964
    %vm1971 = vmor %vm1969, %vm1970
    %v1972 = vsel %vm1971, %v1964, %v1968
    %v1973 = vand.u32 2147483647, %v1918
    %vm1974 = vcmp.eq.f32.partialorder %v1973, 8.507059e+37
    %v1975 = vand.u32 %v1918, 2147483648
    %v1976 = vor.u32 1.1754944e-38, %v1975
    %v1977 = vsel %vm1974, %v1976, %v1972
    %v1978 = vmul.f32 1.0, %v1977
    %v1979 = vmul.f32 %v1837, %v1933
    %v1980 = vmul.f32 %v1839, %v1948
    %v1981 = vmul.f32 %v1842, %v1963
    %v1982 = vmul.f32 %v1844, %v1978
    %v1983 = vadd.f32 %v1979, %v1422
    %v1984 = vadd.f32 %v1980, %v1423
    %v1985 = vadd.f32 %v1981, %v1424
    %v1986 = vadd.f32 %v1982, %v1425
    %v1987 = vpack.c.bf16 %v1984, %v1983
    %v1988 = vpack.c.bf16 %v1986, %v1985
    %v1989 = vld [vmem:[#allocation13] sm:$0xf]
    %v1990 = vld [vmem:[#allocation13 + $0x4] sm:$0xf]
    %v1991 = vld [vmem:[#allocation13 + $0x8] sm:$0xf]
    %v1992 = vld [vmem:[#allocation13 + $0xc] sm:$0xf]
    %v1993 = vld [vmem:[#allocation13 + $0x10] sm:$0xf]
    %v1994 = vld [vmem:[#allocation13 + $0x14] sm:$0xf]
    %v1995 = vld [vmem:[#allocation13 + $0x18] sm:$0xf]
    %v1996 = vld [vmem:[#allocation13 + $0x1c] sm:$0xf]
    %v1997 = vld [vmem:[#allocation13 + $0x20] sm:$0xf]
    %v1998 = vld [vmem:[#allocation13 + $0x24] sm:$0xf]
    %v1999 = vld [vmem:[#allocation13 + $0x28] sm:$0xf]
    %v2000 = vld [vmem:[#allocation13 + $0x2c] sm:$0xf]
    %v2001 = vld [vmem:[#allocation13 + $0x30] sm:$0xf]
    %v2002 = vld [vmem:[#allocation13 + $0x34] sm:$0xf]
    %v2003 = vld [vmem:[#allocation13 + $0x38] sm:$0xf]
    %v2004 = vld [vmem:[#allocation13 + $0x3c] sm:$0xf]
    %v2005 = vld [vmem:[%s10] sm:$0x1]
    %v2007 = vperm.slane %v2005, 0
    %v2025 = vunpack.c.l.b16 %v1989
    %v2026 = vunpack.c.l.b16 %v1990
    %v2027 = vunpack.c.l.b16 %v1991
    %v2028 = vunpack.c.l.b16 %v1992
    %v2029 = vunpack.c.l.b16 %v1993
    %v2030 = vunpack.c.l.b16 %v1994
    %v2031 = vunpack.c.l.b16 %v1995
    %v2032 = vunpack.c.l.b16 %v1996
    %v2033 = vunpack.c.l.b16 %v1997
    %v2034 = vunpack.c.l.b16 %v1998
    %v2035 = vunpack.c.l.b16 %v1999
    %v2036 = vunpack.c.l.b16 %v2000
    %v2037 = vunpack.c.l.b16 %v2001
    %v2038 = vunpack.c.l.b16 %v2002
    %v2039 = vunpack.c.l.b16 %v2003
    %v2040 = vunpack.c.l.b16 %v2004
    %v2041 = vpack.c.b16 %v2026, %v2025
    %v2042 = vpack.c.b16 %v2028, %v2027
    %v2043 = vpack.c.b16 %v2030, %v2029
    %v2044 = vpack.c.b16 %v2032, %v2031
    %v2045 = vpack.c.b16 %v2034, %v2033
    %v2046 = vpack.c.b16 %v2036, %v2035
    %v2047 = vpack.c.b16 %v2038, %v2037
    %v2048 = vpack.c.b16 %v2040, %v2039
    %2057 = vmatpush.bf16.msra.mxu0 %v2048
    %2058 = vmatpush.bf16.msra.mxu0 %v2047
    %2059 = vmatpush.bf16.msra.mxu0 %v2046
    %2060 = vmatpush.bf16.msra.mxu0 %v2045
    %2061 = vmatpush.bf16.msra.mxu0 %v2044
    %2062 = vmatpush.bf16.msra.mxu0 %v2043
    %2063 = vmatpush.bf16.msra.mxu0 %v2042
    %2064 = vmatpush.bf16.msra.mxu0 %v2041
    %2065 = vmatmul.bf16.gmra.mxu0 %v1987
    %v2066 = vpop.f32.mrf.mxu0
    %v2067 = vadd.f32 %v2007, %v2066
    %v2068 = vpop.f32.mrf.mxu0
    %v2069 = vadd.f32 %v2007, %v2068
    %2070 = vmatmul.bf16.gmra.mxu0 %v1988
    %v2071 = vpop.f32.mrf.mxu0
    %v2072 = vadd.f32 %v2007, %v2071
    %v2073 = vpop.f32.mrf.mxu0
    %v2074 = vadd.f32 %v2007, %v2073
    %2075 = vdwg.mxu0
    %2076 = vst [vmem:[#allocation14] sm:$0xff] %v2067
    %2077 = vst [vmem:[#allocation14 + $0x8] sm:$0xff] %v2069
    %2078 = vst [vmem:[#allocation14 + $0x10] sm:$0xff] %v2072
    %2079 = vst [vmem:[#allocation14 + $0x18] sm:$0xff] %v2074
    // Predicated region
    $region74: #{tpu_custom_call.1} parent=1 // pred_check
      _
    $region75: #{tpu_custom_call.1} parent=1 // pred_check_branch
      %2081 = sbr.rel (0) target = $region77
    $region76: #{tpu_custom_call.1} parent=1 // pred_region
      %2083 = vsyncadd [#allocation4], 0
      %s2084 = sshll.u32 [#allocation14], 4
      %s2085 = int_to_ptr.vmem [resolvable:$true] %s2084
      %s2086 = sshll.u32 %s11, 4
      %s2087 = int_to_ptr.hbm [resolvable:$true] %s2086
      %2092 = dma.vmem_to_hbm [thread:$0]  %s2085, 512, %s2087, [#allocation4], 128, 128, 8
    $region77: #{tpu_custom_call.1} parent=1 // pred_fallthru
      _
    // Predicated region
    $region78: #{tpu_custom_call.1} parent=1 // pred_check
      _
    $region79: #{tpu_custom_call.1} parent=1 // pred_check_branch
      %2094 = sbr.rel (0) target = $region81
    $region80: #{tpu_custom_call.1} parent=1 // pred_region
      %2096 = dma.done [#allocation4], 512
    $region81: #{tpu_custom_call.1} parent=1 // pred_fallthru
      _
    %2097 = vsyncpa [#allocation3], 1
    %2098 = vsyncpa [#allocation6], 1
    %2099 = vsyncpa [#allocation9], 1
    %2100 = vsyncpa [#allocation12], 1
    %2101 = vsyncpa [#allocation4], 1

// kernel: tpu_custom_call.1
$region0: #{tpu_custom_call.1}
  #allocation0 [shape = 'u32[]', space=smem, size = 0x4, offset = 0x4, fixed_abs, tag = 'smem constant byte address 0x4 - core index']
  #allocation1 [shape = 'u32[72,128]{1,0:T(1,128)}', space=vmem, size = 0x9000, scoped, tag = 'internal scratch']
  %s0 = inlined_call_operand.hbm [shape: f32[2,16,24], index: 0, kind: input, shape index: {}]
  %s1 = inlined_call_operand.hbm [shape: bf16[24,128], index: 1, kind: input, shape index: {}]
  %s2 = inlined_call_operand.hbm [shape: f32[1,128], index: 2, kind: input, shape index: {}]
  %s3 = inlined_call_operand.hbm [shape: bf16[384,256], index: 3, kind: input, shape index: {}]
  %s4 = inlined_call_operand.vmem [shape: f32[1,256], index: 4, kind: input, shape index: {}]
  %s5 = inlined_call_operand.hbm [shape: bf16[384,256], index: 5, kind: input, shape index: {}]
  %s6 = inlined_call_operand.vmem [shape: f32[1,256], index: 6, kind: input, shape index: {}]
  %s7 = inlined_call_operand.hbm [shape: bf16[384,256], index: 7, kind: input, shape index: {}]
  %s8 = inlined_call_operand.vmem [shape: f32[1,256], index: 8, kind: input, shape index: {}]
  %s9 = inlined_call_operand.hbm [shape: bf16[128,128], index: 9, kind: input, shape index: {}]
  %s10 = inlined_call_operand.vmem [shape: f32[1,128], index: 10, kind: input, shape index: {}]
  %s11 = inlined_call_operand.hbm [shape: f32[2,16,128], index: 11, kind: output, shape index: {}]
  %s12 = sld [smem:[#allocation0]]
  $region82: #{tpu_custom_call.1} parent=0
    _
  %s14 = ssub.s32 1, %s12
  %s15 = scalar_select 0, %s14, %s12
  $region1: #{tpu_custom_call.1} parent=0
    #allocation2 [shape = 'u8[16384]{0}', space=vmem, size = 0x4000, scoped, tag = 'input window, operand 0, single buffered']
    #allocation3 [shape = 's32[1]{0}', space=sflag, size = 0x4, scoped, tag = 'scoped memory for tpu_custom_call.1']
    #allocation4 [shape = 's32[1]{0}', space=sflag, size = 0x4, scoped, tag = 'scoped memory for tpu_custom_call.1']
    #allocation5 [shape = 'u8[6144]{0}', space=vmem, size = 0x1800, scoped, tag = 'input window, operand 1, single buffered']
    #allocation6 [shape = 's32[1]{0}', space=sflag, size = 0x4, scoped, tag = 'scoped memory for tpu_custom_call.1']
    #allocation7 [shape = 'u8[512]{0}', space=vmem, size = 0x400, scoped, tag = 'input window, operand 2, single buffered']
    #allocation8 [shape = 'u8[196608]{0}', space=vmem, size = 0x30000, scoped, tag = 'input window, operand 3, single buffered']
    #allocation9 [shape = 's32[1]{0}', space=sflag, size = 0x4, scoped, tag = 'scoped memory for tpu_custom_call.1']
    #allocation10 [shape = 'u8[196608]{0}', space=vmem, size = 0x30000, scoped, tag = 'input window, operand 5, single buffered']
    #allocation11 [shape = 'u8[196608]{0}', space=vmem, size = 0x30000, scoped, tag = 'input window, operand 7, single buffered']
    #allocation12 [shape = 's32[1]{0}', space=sflag, size = 0x4, scoped, tag = 'scoped memory for tpu_custom_call.1']
    #allocation13 [shape = 'u8[32768]{0}', space=vmem, size = 0x8000, scoped, tag = 'input window, operand 9, single buffered']
    #allocation14 [shape = 'u8[16384]{0}', space=vmem, size = 0x4000, scoped, tag = 'output window, operand 0, single buffered']
    %16 = vsyncpa [#allocation3], 0
    %17 = vsyncpa [#allocation6], 0
    %18 = vsyncpa [#allocation9], 0
    %19 = vsyncpa [#allocation12], 0
    %20 = vsyncpa [#allocation4], 0
    // Predicated region
    $region2: #{tpu_custom_call.1} parent=1 // pred_check
      _
    $region3: #{tpu_custom_call.1} parent=1 // pred_check_branch
      %22 = sbr.rel (0) target = $region5
    $region4: #{tpu_custom_call.1} parent=1 // pred_region
      %24 = vsyncadd [#allocation3], 0
      %s25 = sshll.u32 %s0, 4
      %s26 = int_to_ptr.hbm [resolvable:$true] %s25
      %s27 = sshll.u32 [#allocation2], 4
      %s28 = int_to_ptr.vmem [resolvable:$true] %s27
      %33 = dma.hbm_to_vmem [thread:$0]  %s26, 512, %s28, [#allocation3], 128, 128, 8
    $region5: #{tpu_custom_call.1} parent=1 // pred_fallthru
      _
    // Predicated region
    $region6: #{tpu_custom_call.1} parent=1 // pred_check
      _
    $region7: #{tpu_custom_call.1} parent=1 // pred_check_branch
      %35 = sbr.rel (0) target = $region9
    $region8: #{tpu_custom_call.1} parent=1 // pred_region
      %37 = vsyncadd [#allocation6], 0
      %s38 = sshll.u32 %s1, 4
      %s39 = int_to_ptr.hbm [resolvable:$true] %s38
      %s40 = sshll.u32 [#allocation5], 4
      %s41 = int_to_ptr.vmem [resolvable:$true] %s40
      %46 = dma.hbm_to_vmem [thread:$0]  %s39, 192, %s41, [#allocation6], 64, 64, 4
    $region9: #{tpu_custom_call.1} parent=1 // pred_fallthru
      _
    // Predicated region
    $region10: #{tpu_custom_call.1} parent=1 // pred_check
      _
    $region11: #{tpu_custom_call.1} parent=1 // pred_check_branch
      %48 = sbr.rel (0) target = $region13
    $region12: #{tpu_custom_call.1} parent=1 // pred_region
      %50 = vsyncadd [#allocation6], 0
      %s52 = sshll.u32 %s2, 4
      %s53 = int_to_ptr.hbm [resolvable:$true] %s52
      %s54 = sshll.u32 [#allocation7], 4
      %s55 = int_to_ptr.vmem [resolvable:$true] %s54
      %57 = dma.hbm_to_vmem [thread:$0]  %s53, 16, %s55, [#allocation6]
    $region13: #{tpu_custom_call.1} parent=1 // pred_fallthru
      _
    // Predicated region
    $region14: #{tpu_custom_call.1} parent=1 // pred_check
      _
    $region15: #{tpu_custom_call.1} parent=1 // pred_check_branch
      %59 = sbr.rel (0) target = $region17
    $region16: #{tpu_custom_call.1} parent=1 // pred_region
      %61 = vsyncadd [#allocation9], 0
      %s62 = sshll.u32 %s3, 4
      %s63 = int_to_ptr.hbm [resolvable:$true] %s62
      %s64 = sshll.u32 [#allocation8], 4
      %s65 = int_to_ptr.vmem [resolvable:$true] %s64
      %70 = dma.hbm_to_vmem [thread:$0]  %s63, 6144, %s65, [#allocation9], 128, 128, 8
    $region17: #{tpu_custom_call.1} parent=1 // pred_fallthru
      _
    // Predicated region
    $region18: #{tpu_custom_call.1} parent=1 // pred_check
      _
    $region19: #{tpu_custom_call.1} parent=1 // pred_check_branch
      %72 = sbr.rel (0) target = $region21
    $region20: #{tpu_custom_call.1} parent=1 // pred_region
      _
    $region21: #{tpu_custom_call.1} parent=1 // pred_fallthru
      _
    // Predicated region
    $region22: #{tpu_custom_call.1} parent=1 // pred_check
      _
    $region23: #{tpu_custom_call.1} parent=1 // pred_check_branch
      %74 = sbr.rel (0) target = $region25
    $region24: #{tpu_custom_call.1} parent=1 // pred_region
      %76 = vsyncadd [#allocation9], 0
      %s77 = sshll.u32 %s5, 4
      %s78 = int_to_ptr.hbm [resolvable:$true] %s77
      %s79 = sshll.u32 [#allocation10], 4
      %s80 = int_to_ptr.vmem [resolvable:$true] %s79
      %85 = dma.hbm_to_vmem [thread:$0]  %s78, 6144, %s80, [#allocation9], 128, 128, 8
    $region25: #{tpu_custom_call.1} parent=1 // pred_fallthru
      _
    // Predicated region
    $region26: #{tpu_custom_call.1} parent=1 // pred_check
      _
    $region27: #{tpu_custom_call.1} parent=1 // pred_check_branch
      %87 = sbr.rel (0) target = $region29
    $region28: #{tpu_custom_call.1} parent=1 // pred_region
      _
    $region29: #{tpu_custom_call.1} parent=1 // pred_fallthru
      _
    // Predicated region
    $region30: #{tpu_custom_call.1} parent=1 // pred_check
      _
    $region31: #{tpu_custom_call.1} parent=1 // pred_check_branch
      %89 = sbr.rel (0) target = $region33
    $region32: #{tpu_custom_call.1} parent=1 // pred_region
      %91 = vsyncadd [#allocation12], 0
      %s92 = sshll.u32 %s7, 4
      %s93 = int_to_ptr.hbm [resolvable:$true] %s92
      %s94 = sshll.u32 [#allocation11], 4
      %s95 = int_to_ptr.vmem [resolvable:$true] %s94
      %100 = dma.hbm_to_vmem [thread:$0]  %s93, 6144, %s95, [#allocation12], 128, 128, 8
    $region33: #{tpu_custom_call.1} parent=1 // pred_fallthru
      _
    // Predicated region
    $region34: #{tpu_custom_call.1} parent=1 // pred_check
      _
    $region35: #{tpu_custom_call.1} parent=1 // pred_check_branch
      %102 = sbr.rel (0) target = $region37
    $region36: #{tpu_custom_call.1} parent=1 // pred_region
      _
    $region37: #{tpu_custom_call.1} parent=1 // pred_fallthru
      _
    // Predicated region
    $region38: #{tpu_custom_call.1} parent=1 // pred_check
      _
    $region39: #{tpu_custom_call.1} parent=1 // pred_check_branch
      %104 = sbr.rel (0) target = $region41
    $region40: #{tpu_custom_call.1} parent=1 // pred_region
      %106 = vsyncadd [#allocation12], 0
      %s107 = sshll.u32 %s9, 4
      %s108 = int_to_ptr.hbm [resolvable:$true] %s107
      %s109 = sshll.u32 [#allocation13], 4
      %s110 = int_to_ptr.vmem [resolvable:$true] %s109
      %115 = dma.hbm_to_vmem [thread:$0]  %s108, 1024, %s110, [#allocation12], 64, 64, 4
    $region41: #{tpu_custom_call.1} parent=1 // pred_fallthru
      _
    // Predicated region
    $region42: #{tpu_custom_call.1} parent=1 // pred_check
      _
    $region43: #{tpu_custom_call.1} parent=1 // pred_check_branch
      %117 = sbr.rel (0) target = $region45
    $region44: #{tpu_custom_call.1} parent=1 // pred_region
      _
    $region45: #{tpu_custom_call.1} parent=1 // pred_fallthru
      _
    // Predicated region
    $region46: #{tpu_custom_call.1} parent=1 // pred_check
      _
    $region47: #{tpu_custom_call.1} parent=1 // pred_check_branch
      %119 = sbr.rel (0) target = $region49
    $region48: #{tpu_custom_call.1} parent=1 // pred_region
      %121 = dma.done [#allocation3], 512
    $region49: #{tpu_custom_call.1} parent=1 // pred_fallthru
      _
    // Predicated region
    $region50: #{tpu_custom_call.1} parent=1 // pred_check
      _
    $region51: #{tpu_custom_call.1} parent=1 // pred_check_branch
      %123 = sbr.rel (0) target = $region53
    $region52: #{tpu_custom_call.1} parent=1 // pred_region
      %125 = dma.done [#allocation6], 192
    $region53: #{tpu_custom_call.1} parent=1 // pred_fallthru
      _
    // Predicated region
    $region54: #{tpu_custom_call.1} parent=1 // pred_check
      _
    $region55: #{tpu_custom_call.1} parent=1 // pred_check_branch
      %127 = sbr.rel (0) target = $region57
    $region56: #{tpu_custom_call.1} parent=1 // pred_region
      %129 = dma.done [#allocation6], 16
    $region57: #{tpu_custom_call.1} parent=1 // pred_fallthru
      _
    // Predicated region
    $region58: #{tpu_custom_call.1} parent=1 // pred_check
      _
    $region59: #{tpu_custom_call.1} parent=1 // pred_check_branch
      %131 = sbr.rel (0) target = $region61
    $region60: #{tpu_custom_call.1} parent=1 // pred_region
      %133 = dma.done [#allocation9], 6144
    $region61: #{tpu_custom_call.1} parent=1 // pred_fallthru
      _
    // Predicated region
    $region62: #{tpu_custom_call.1} parent=1 // pred_check
      _
    $region63: #{tpu_custom_call.1} parent=1 // pred_check_branch
      %135 = sbr.rel (0) target = $region65
    $region64: #{tpu_custom_call.1} parent=1 // pred_region
      %137 = dma.done [#allocation9], 6144
    $region65: #{tpu_custom_call.1} parent=1 // pred_fallthru
      _
    // Predicated region
    $region66: #{tpu_custom_call.1} parent=1 // pred_check
      _
    $region67: #{tpu_custom_call.1} parent=1 // pred_check_branch
      %139 = sbr.rel (0) target = $region69
    $region68: #{tpu_custom_call.1} parent=1 // pred_region
      %141 = dma.done [#allocation12], 6144
    $region69: #{tpu_custom_call.1} parent=1 // pred_fallthru
      _
    // Predicated region
    $region70: #{tpu_custom_call.1} parent=1 // pred_check
      _
    $region71: #{tpu_custom_call.1} parent=1 // pred_check_branch
      %143 = sbr.rel (0) target = $region73
    $region72: #{tpu_custom_call.1} parent=1 // pred_region
      %145 = dma.done [#allocation12], 1024
    $region73: #{tpu_custom_call.1} parent=1 // pred_fallthru
      _
    %v147 = vld [vmem:[#allocation2] sm:$0xff]
    %v148 = vld [vmem:[#allocation2 + $0x8] sm:$0xff]
    %v149 = vld [vmem:[#allocation2 + $0x10] sm:$0xff]
    %v150 = vld [vmem:[#allocation2 + $0x18] sm:$0xff]
    %v151 = vpack.c.bf16 %v148, %v147
    %v152 = vpack.c.bf16 %v150, %v149
    %v153 = vld [vmem:[#allocation5] sm:$0xf]
    %v154 = vld [vmem:[#allocation5 + $0x4] sm:$0xf]
    %v155 = vld [vmem:[#allocation5 + $0x8] sm:$0xf]
    %v156 = vld [vmem:[#allocation7] sm:$0x1]
    %v158 = vperm.slane %v156, 0
    %v163 = vunpack.c.l.b16 %v153
    %v164 = vunpack.c.l.b16 %v154
    %v165 = vunpack.c.l.b16 %v155
    %v166 = vpack.c.b16 %v164, %v163
    %v167 = vpack.c.b16 %v165, %v165
    %vm169 = vcmask 195584
    %v171 = vsel %vm169, %v151, 0
    %v174 = vsel %vm169, %v152, 0
    %vm176 = vcmask 1043456
    %v178 = vsel %vm176, %v167, 0
    %180 = vmatpush.bf16.msra.mxu0 0
    %181 = vmatpush.bf16.msra.mxu0 0
    %182 = vmatpush.bf16.msra.mxu0 0
    %183 = vmatpush.bf16.msra.mxu0 0
    %184 = vmatpush.bf16.msra.mxu0 0
    %185 = vmatpush.bf16.msra.mxu0 0
    %186 = vmatpush.bf16.msra.mxu0 %v178
    %187 = vmatpush.bf16.msra.mxu0 %v166
    %188 = vmatmul.bf16.gmra.mxu0 %v171
    %v189 = vpop.f32.mrf.mxu0
    %v190 = vadd.f32 %v158, %v189
    %v191 = vpop.f32.mrf.mxu0
    %v192 = vadd.f32 %v158, %v191
    %193 = vmatmul.bf16.gmra.mxu0 %v174
    %v194 = vpop.f32.mrf.mxu0
    %v195 = vadd.f32 %v158, %v194
    %v196 = vpop.f32.mrf.mxu0
    %v197 = vadd.f32 %v158, %v196
    %198 = vdwg.mxu0
    %v199 = vmul.f32 %v190, 1.702
    %v200 = vmul.f32 %v192, 1.702
    %v201 = vmul.f32 %v195, 1.702
    %v202 = vmul.f32 %v197, 1.702
    %v203 = vxor.u32 %v199, 2147483648
    %v204 = vxor.u32 %v200, 2147483648
    %v205 = vxor.u32 %v201, 2147483648
    %v206 = vxor.u32 %v202, 2147483648
    %v207 = vmul.f32 %v203, 1.442695
    %v208 = vpow.pop %v207
    %v209 = vmul.f32 %v204, 1.442695
    %v210 = vpow.pop %v209
    %v211 = vmul.f32 %v205, 1.442695
    %v212 = vpow.pop %v211
    %v213 = vmul.f32 %v206, 1.442695
    %v214 = vpow.pop %v213
    %v215 = vadd.f32 %v208, 1.0
    %v216 = vadd.f32 %v210, 1.0
    %v217 = vadd.f32 %v212, 1.0
    %v218 = vadd.f32 %v214, 1.0
    %v219 = vrcp.pop %v215
    %v220 = vmul.f32 %v215, %v219
    %v221 = vsub.f32 1.0, %v220
    %v222 = vmul.f32 %v219, %v221
    %v223 = vadd.f32 %v219, %v222
    %vm224 = vweird.f32 %v215
    %vm225 = vweird.f32 %v219
    %vm226 = vmor %vm224, %vm225
    %v227 = vsel %vm226, %v219, %v223
    %v228 = vand.u32 2147483647, %v215
    %vm229 = vcmp.eq.f32.partialorder %v228, 8.507059e+37
    %v230 = vand.u32 %v215, 2147483648
    %v231 = vor.u32 1.1754944e-38, %v230
    %v232 = vsel %vm229, %v231, %v227
    %v233 = vmul.f32 1.0, %v232
    %v234 = vrcp.pop %v216
    %v235 = vmul.f32 %v216, %v234
    %v236 = vsub.f32 1.0, %v235
    %v237 = vmul.f32 %v234, %v236
    %v238 = vadd.f32 %v234, %v237
    %vm239 = vweird.f32 %v216
    %vm240 = vweird.f32 %v234
    %vm241 = vmor %vm239, %vm240
    %v242 = vsel %vm241, %v234, %v238
    %v243 = vand.u32 2147483647, %v216
    %vm244 = vcmp.eq.f32.partialorder %v243, 8.507059e+37
    %v245 = vand.u32 %v216, 2147483648
    %v246 = vor.u32 1.1754944e-38, %v245
    %v247 = vsel %vm244, %v246, %v242
    %v248 = vmul.f32 1.0, %v247
    %v249 = vrcp.pop %v217
    %v250 = vmul.f32 %v217, %v249
    %v251 = vsub.f32 1.0, %v250
    %v252 = vmul.f32 %v249, %v251
    %v253 = vadd.f32 %v249, %v252
    %vm254 = vweird.f32 %v217
    %vm255 = vweird.f32 %v249
    %vm256 = vmor %vm254, %vm255
    %v257 = vsel %vm256, %v249, %v253
    %v258 = vand.u32 2147483647, %v217
    %vm259 = vcmp.eq.f32.partialorder %v258, 8.507059e+37
    %v260 = vand.u32 %v217, 2147483648
    %v261 = vor.u32 1.1754944e-38, %v260
    %v262 = vsel %vm259, %v261, %v257
    %v263 = vmul.f32 1.0, %v262
    %v264 = vrcp.pop %v218
    %v265 = vmul.f32 %v218, %v264
    %v266 = vsub.f32 1.0, %v265
    %v267 = vmul.f32 %v264, %v266
    %v268 = vadd.f32 %v264, %v267
    %vm269 = vweird.f32 %v218
    %vm270 = vweird.f32 %v264
    %vm271 = vmor %vm269, %vm270
    %v272 = vsel %vm271, %v264, %v268
    %v273 = vand.u32 2147483647, %v218
    %vm274 = vcmp.eq.f32.partialorder %v273, 8.507059e+37
    %v275 = vand.u32 %v218, 2147483648
    %v276 = vor.u32 1.1754944e-38, %v275
    %v277 = vsel %vm274, %v276, %v272
    %v278 = vmul.f32 1.0, %v277
    %v279 = vmul.f32 %v190, %v233
    %v280 = vmul.f32 %v192, %v248
    %v281 = vmul.f32 %v195, %v263
    %v282 = vmul.f32 %v197, %v278
    %v283 = vlaneseq
    %v284 = vshrl.u32 %v283, 7
    %v285 = vadd.s32 %v284, 8
    %vm286 = vcmp.ge.s32.totalorder %v284, 1
    %vm287 = vcmp.ge.s32.totalorder %v285, 1
    %v288 = vrot.slane %v279, 7
    %v289 = vrot.slane %v280, 7
    %v290 = vrot.slane %v281, 7
    %v291 = vrot.slane %v282, 7
    %vm292 = vcmp.lt.s32.totalorder %v284, 1
    %v293 = vsel %vm292, %v290, %v291
    %v294 = vsel %vm292, %v289, %v290
    %v295 = vsel %vm292, %v288, %v289
    %v296 = vsel %vm292, %v291, %v288
    %v297 = vsel %vm286, %v296, 0.0
    %v298 = vsel %vm287, %v295, 0.0
    %v299 = vsel %vm286, %v294, 0.0
    %v300 = vsel %vm287, %v293, 0.0
    %vm301 = vcmp.lt.s32.totalorder %v284, 15
    %vm302 = vcmp.lt.s32.totalorder %v285, 15
    %v303 = vrot.slane %v279, 1
    %v304 = vrot.slane %v280, 1
    %v305 = vrot.slane %v281, 1
    %v306 = vrot.slane %v282, 1
    %vm307 = vcmp.lt.s32.totalorder %v284, 7
    %v308 = vsel %vm307, %v305, %v306
    %v309 = vsel %vm307, %v304, %v305
    %v310 = vsel %vm307, %v303, %v304
    %v311 = vsel %vm307, %v306, %v303
    %v312 = vsel %vm301, %v310, 0.0
    %v313 = vsel %vm302, %v309, 0.0
    %v314 = vsel %vm301, %v308, 0.0
    %v315 = vsel %vm302, %v311, 0.0
    %v316 = vpack.c.bf16 %v297, %v297
    %v317 = vpack.c.bf16 %v298, %v298
    %v318 = vpack.c.bf16 %v299, %v299
    %v319 = vpack.c.bf16 %v300, %v300
    %v320 = vpack.c.bf16 %v279, %v279
    %v321 = vpack.c.bf16 %v280, %v280
    %v322 = vpack.c.bf16 %v281, %v281
    %v323 = vpack.c.bf16 %v282, %v282
    %v324 = vpack.c.bf16 %v312, %v312
    %v325 = vpack.c.bf16 %v313, %v313
    %v326 = vpack.c.bf16 %v314, %v314
    %v327 = vpack.c.bf16 %v315, %v315
    %v332 = vunpack.c.l.b16 %v316
    %v333 = vunpack.c.l.b16 %v317
    %v334 = vunpack.c.l.b16 %v318
    %v335 = vunpack.c.l.b16 %v319
    %v336 = vpack.c.b16 %v333, %v332
    %v337 = vpack.c.b16 %v335, %v334
    %v344 = vunpack.c.l.b16 %v320
    %v345 = vunpack.c.l.b16 %v321
    %v346 = vunpack.c.l.b16 %v322
    %v347 = vunpack.c.l.b16 %v323
    %v348 = vpack.c.b16 %v345, %v344
    %v349 = vpack.c.b16 %v347, %v346
    %v356 = vunpack.c.l.b16 %v324
    %v357 = vunpack.c.l.b16 %v325
    %v358 = vunpack.c.l.b16 %v326
    %v359 = vunpack.c.l.b16 %v327
    %v360 = vpack.c.b16 %v357, %v356
    %v361 = vpack.c.b16 %v359, %v358
    %v364 = vld [vmem:[#allocation8] sm:$0xff]
    %v365 = vld [vmem:[#allocation8 + $0x8] sm:$0xff]
    %v366 = vld [vmem:[#allocation8 + $0x10] sm:$0xff]
    %v367 = vld [vmem:[#allocation8 + $0x18] sm:$0xff]
    %v368 = vld [vmem:[#allocation8 + $0x20] sm:$0xff]
    %v369 = vld [vmem:[#allocation8 + $0x28] sm:$0xff]
    %v370 = vld [vmem:[#allocation8 + $0x30] sm:$0xff]
    %v371 = vld [vmem:[#allocation8 + $0x38] sm:$0xff]
    %v372 = vld [vmem:[#allocation8 + $0x40] sm:$0xff]
    %v373 = vld [vmem:[#allocation8 + $0x48] sm:$0xff]
    %v374 = vld [vmem:[#allocation8 + $0x50] sm:$0xff]
    %v375 = vld [vmem:[#allocation8 + $0x58] sm:$0xff]
    %v376 = vld [vmem:[#allocation8 + $0x60] sm:$0xff]
    %v377 = vld [vmem:[#allocation8 + $0x68] sm:$0xff]
    %v378 = vld [vmem:[#allocation8 + $0x70] sm:$0xff]
    %v379 = vld [vmem:[#allocation8 + $0x78] sm:$0xff]
    %v380 = vld [vmem:[#allocation8 + $0x80] sm:$0xff]
    %v381 = vld [vmem:[#allocation8 + $0x88] sm:$0xff]
    %v382 = vld [vmem:[#allocation8 + $0x90] sm:$0xff]
    %v383 = vld [vmem:[#allocation8 + $0x98] sm:$0xff]
    %v384 = vld [vmem:[#allocation8 + $0xa0] sm:$0xff]
    %v385 = vld [vmem:[#allocation8 + $0xa8] sm:$0xff]
    %v386 = vld [vmem:[#allocation8 + $0xb0] sm:$0xff]
    %v387 = vld [vmem:[#allocation8 + $0xb8] sm:$0xff]
    %v388 = vld [vmem:[#allocation8 + $0xc0] sm:$0xff]
    %v389 = vld [vmem:[#allocation8 + $0xc8] sm:$0xff]
    %v390 = vld [vmem:[#allocation8 + $0xd0] sm:$0xff]
    %v391 = vld [vmem:[#allocation8 + $0xd8] sm:$0xff]
    %v392 = vld [vmem:[#allocation8 + $0xe0] sm:$0xff]
    %v393 = vld [vmem:[#allocation8 + $0xe8] sm:$0xff]
    %v394 = vld [vmem:[#allocation8 + $0xf0] sm:$0xff]
    %v395 = vld [vmem:[#allocation8 + $0xf8] sm:$0xff]
    %v396 = vld [vmem:[#allocation8 + $0x100] sm:$0xff]
    %v397 = vld [vmem:[#allocation8 + $0x108] sm:$0xff]
    %v398 = vld [vmem:[#allocation8 + $0x110] sm:$0xff]
    %v399 = vld [vmem:[#allocation8 + $0x118] sm:$0xff]
    %v400 = vld [vmem:[#allocation8 + $0x120] sm:$0xff]
    %v401 = vld [vmem:[#allocation8 + $0x128] sm:$0xff]
    %v402 = vld [vmem:[#allocation8 + $0x130] sm:$0xff]
    %v403 = vld [vmem:[#allocation8 + $0x138] sm:$0xff]
    %v404 = vld [vmem:[#allocation8 + $0x140] sm:$0xff]
    %v405 = vld [vmem:[#allocation8 + $0x148] sm:$0xff]
    %v406 = vld [vmem:[#allocation8 + $0x150] sm:$0xff]
    %v407 = vld [vmem:[#allocation8 + $0x158] sm:$0xff]
    %v408 = vld [vmem:[#allocation8 + $0x160] sm:$0xff]
    %v409 = vld [vmem:[#allocation8 + $0x168] sm:$0xff]
    %v410 = vld [vmem:[#allocation8 + $0x170] sm:$0xff]
    %v411 = vld [vmem:[#allocation8 + $0x178] sm:$0xff]
    %v412 = vld [vmem:[%s4] sm:$0x3]
    %v414 = vperm.slane %v412, 0
    %v415 = vperm.slane %v412, 1
    %v466 = vunpack.c.l.b16 %v364
    %v467 = vunpack.c.h.b16 %v364
    %v468 = vunpack.c.l.b16 %v365
    %v469 = vunpack.c.h.b16 %v365
    %v470 = vunpack.c.l.b16 %v366
    %v471 = vunpack.c.h.b16 %v366
    %v472 = vunpack.c.l.b16 %v367
    %v473 = vunpack.c.h.b16 %v367
    %v474 = vunpack.c.l.b16 %v368
    %v475 = vunpack.c.h.b16 %v368
    %v476 = vunpack.c.l.b16 %v369
    %v477 = vunpack.c.h.b16 %v369
    %v478 = vunpack.c.l.b16 %v370
    %v479 = vunpack.c.h.b16 %v370
    %v480 = vunpack.c.l.b16 %v371
    %v481 = vunpack.c.h.b16 %v371
    %v482 = vunpack.c.l.b16 %v372
    %v483 = vunpack.c.h.b16 %v372
    %v484 = vunpack.c.l.b16 %v373
    %v485 = vunpack.c.h.b16 %v373
    %v486 = vunpack.c.l.b16 %v374
    %v487 = vunpack.c.h.b16 %v374
    %v488 = vunpack.c.l.b16 %v375
    %v489 = vunpack.c.h.b16 %v375
    %v490 = vunpack.c.l.b16 %v376
    %v491 = vunpack.c.h.b16 %v376
    %v492 = vunpack.c.l.b16 %v377
    %v493 = vunpack.c.h.b16 %v377
    %v494 = vunpack.c.l.b16 %v378
    %v495 = vunpack.c.h.b16 %v378
    %v496 = vunpack.c.l.b16 %v379
    %v497 = vunpack.c.h.b16 %v379
    %v498 = vunpack.c.l.b16 %v380
    %v499 = vunpack.c.h.b16 %v380
    %v500 = vunpack.c.l.b16 %v381
    %v501 = vunpack.c.h.b16 %v381
    %v502 = vunpack.c.l.b16 %v382
    %v503 = vunpack.c.h.b16 %v382
    %v504 = vunpack.c.l.b16 %v383
    %v505 = vunpack.c.h.b16 %v383
    %v506 = vunpack.c.l.b16 %v384
    %v507 = vunpack.c.h.b16 %v384
    %v508 = vunpack.c.l.b16 %v385
    %v509 = vunpack.c.h.b16 %v385
    %v510 = vunpack.c.l.b16 %v386
    %v511 = vunpack.c.h.b16 %v386
    %v512 = vunpack.c.l.b16 %v387
    %v513 = vunpack.c.h.b16 %v387
    %v514 = vunpack.c.l.b16 %v388
    %v515 = vunpack.c.h.b16 %v388
    %v516 = vunpack.c.l.b16 %v389
    %v517 = vunpack.c.h.b16 %v389
    %v518 = vunpack.c.l.b16 %v390
    %v519 = vunpack.c.h.b16 %v390
    %v520 = vunpack.c.l.b16 %v391
    %v521 = vunpack.c.h.b16 %v391
    %v522 = vunpack.c.l.b16 %v392
    %v523 = vunpack.c.h.b16 %v392
    %v524 = vunpack.c.l.b16 %v393
    %v525 = vunpack.c.h.b16 %v393
    %v526 = vunpack.c.l.b16 %v394
    %v527 = vunpack.c.h.b16 %v394
    %v528 = vunpack.c.l.b16 %v395
    %v529 = vunpack.c.h.b16 %v395
    %v530 = vunpack.c.l.b16 %v396
    %v531 = vunpack.c.h.b16 %v396
    %v532 = vunpack.c.l.b16 %v397
    %v533 = vunpack.c.h.b16 %v397
    %v534 = vunpack.c.l.b16 %v398
    %v535 = vunpack.c.h.b16 %v398
    %v536 = vunpack.c.l.b16 %v399
    %v537 = vunpack.c.h.b16 %v399
    %v538 = vunpack.c.l.b16 %v400
    %v539 = vunpack.c.h.b16 %v400
    %v540 = vunpack.c.l.b16 %v401
    %v541 = vunpack.c.h.b16 %v401
    %v542 = vunpack.c.l.b16 %v402
    %v543 = vunpack.c.h.b16 %v402
    %v544 = vunpack.c.l.b16 %v403
    %v545 = vunpack.c.h.b16 %v403
    %v546 = vunpack.c.l.b16 %v404
    %v547 = vunpack.c.h.b16 %v404
    %v548 = vunpack.c.l.b16 %v405
    %v549 = vunpack.c.h.b16 %v405
    %v550 = vunpack.c.l.b16 %v406
    %v551 = vunpack.c.h.b16 %v406
    %v552 = vunpack.c.l.b16 %v407
    %v553 = vunpack.c.h.b16 %v407
    %v554 = vunpack.c.l.b16 %v408
    %v555 = vunpack.c.h.b16 %v408
    %v556 = vunpack.c.l.b16 %v409
    %v557 = vunpack.c.h.b16 %v409
    %v558 = vunpack.c.l.b16 %v410
    %v559 = vunpack.c.h.b16 %v410
    %v560 = vunpack.c.l.b16 %v411
    %v561 = vunpack.c.h.b16 %v411
    %v562 = vpack.c.b16 %v468, %v466
    %v563 = vpack.c.b16 %v469, %v467
    %v564 = vpack.c.b16 %v472, %v470
    %v565 = vpack.c.b16 %v473, %v471
    %v566 = vpack.c.b16 %v476, %v474
    %v567 = vpack.c.b16 %v477, %v475
    %v568 = vpack.c.b16 %v480, %v478
    %v569 = vpack.c.b16 %v481, %v479
    %v570 = vpack.c.b16 %v484, %v482
    %v571 = vpack.c.b16 %v485, %v483
    %v572 = vpack.c.b16 %v488, %v486
    %v573 = vpack.c.b16 %v489, %v487
    %v574 = vpack.c.b16 %v492, %v490
    %v575 = vpack.c.b16 %v493, %v491
    %v576 = vpack.c.b16 %v496, %v494
    %v577 = vpack.c.b16 %v497, %v495
    %v578 = vpack.c.b16 %v500, %v498
    %v579 = vpack.c.b16 %v501, %v499
    %v580 = vpack.c.b16 %v504, %v502
    %v581 = vpack.c.b16 %v505, %v503
    %v582 = vpack.c.b16 %v508, %v506
    %v583 = vpack.c.b16 %v509, %v507
    %v584 = vpack.c.b16 %v512, %v510
    %v585 = vpack.c.b16 %v513, %v511
    %v586 = vpack.c.b16 %v516, %v514
    %v587 = vpack.c.b16 %v517, %v515
    %v588 = vpack.c.b16 %v520, %v518
    %v589 = vpack.c.b16 %v521, %v519
    %v590 = vpack.c.b16 %v524, %v522
    %v591 = vpack.c.b16 %v525, %v523
    %v592 = vpack.c.b16 %v528, %v526
    %v593 = vpack.c.b16 %v529, %v527
    %v594 = vpack.c.b16 %v532, %v530
    %v595 = vpack.c.b16 %v533, %v531
    %v596 = vpack.c.b16 %v536, %v534
    %v597 = vpack.c.b16 %v537, %v535
    %v598 = vpack.c.b16 %v540, %v538
    %v599 = vpack.c.b16 %v541, %v539
    %v600 = vpack.c.b16 %v544, %v542
    %v601 = vpack.c.b16 %v545, %v543
    %v602 = vpack.c.b16 %v548, %v546
    %v603 = vpack.c.b16 %v549, %v547
    %v604 = vpack.c.b16 %v552, %v550
    %v605 = vpack.c.b16 %v553, %v551
    %v606 = vpack.c.b16 %v556, %v554
    %v607 = vpack.c.b16 %v557, %v555
    %v608 = vpack.c.b16 %v560, %v558
    %v609 = vpack.c.b16 %v561, %v559
    %658 = vmatpush.bf16.msra.mxu0 %v576
    %659 = vmatpush.bf16.msra.mxu0 %v574
    %660 = vmatpush.bf16.msra.mxu0 %v572
    %661 = vmatpush.bf16.msra.mxu0 %v570
    %662 = vmatpush.bf16.msra.mxu0 %v568
    %663 = vmatpush.bf16.msra.mxu0 %v566
    %664 = vmatpush.bf16.msra.mxu0 %v564
    %665 = vmatpush.bf16.msra.mxu0 %v562
    %666 = vmatmul.bf16.gmra.mxu0 %v336
    %v667 = vpop.f32.mrf.mxu0
    %v668 = vadd.f32 %v414, %v667
    %v669 = vpop.f32.mrf.mxu0
    %v670 = vadd.f32 %v414, %v669
    %671 = vmatmul.bf16.gmra.mxu0 %v337
    %v672 = vpop.f32.mrf.mxu0
    %v673 = vadd.f32 %v414, %v672
    %v674 = vpop.f32.mrf.mxu0
    %v675 = vadd.f32 %v414, %v674
    %676 = vdwg.mxu0
    %677 = vmatpush.bf16.msra.mxu0 %v592
    %678 = vmatpush.bf16.msra.mxu0 %v590
    %679 = vmatpush.bf16.msra.mxu0 %v588
    %680 = vmatpush.bf16.msra.mxu0 %v586
    %681 = vmatpush.bf16.msra.mxu0 %v584
    %682 = vmatpush.bf16.msra.mxu0 %v582
    %683 = vmatpush.bf16.msra.mxu0 %v580
    %684 = vmatpush.bf16.msra.mxu0 %v578
    %685 = vmatmul.bf16.gmra.mxu0 %v348
    %v686 = vpop.f32.mrf.mxu0
    %v687 = vadd.f32 %v668, %v686
    %v688 = vpop.f32.mrf.mxu0
    %v689 = vadd.f32 %v670, %v688
    %690 = vmatmul.bf16.gmra.mxu0 %v349
    %v691 = vpop.f32.mrf.mxu0
    %v692 = vadd.f32 %v673, %v691
    %v693 = vpop.f32.mrf.mxu0
    %v694 = vadd.f32 %v675, %v693
    %695 = vdwg.mxu0
    %696 = vmatpush.bf16.msra.mxu0 %v608
    %697 = vmatpush.bf16.msra.mxu0 %v606
    %698 = vmatpush.bf16.msra.mxu0 %v604
    %699 = vmatpush.bf16.msra.mxu0 %v602
    %700 = vmatpush.bf16.msra.mxu0 %v600
    %701 = vmatpush.bf16.msra.mxu0 %v598
    %702 = vmatpush.bf16.msra.mxu0 %v596
    %703 = vmatpush.bf16.msra.mxu0 %v594
    %704 = vmatmul.bf16.gmra.mxu0 %v360
    %v705 = vpop.f32.mrf.mxu0
    %v706 = vadd.f32 %v687, %v705
    %v707 = vpop.f32.mrf.mxu0
    %v708 = vadd.f32 %v689, %v707
    %709 = vmatmul.bf16.gmra.mxu0 %v361
    %v710 = vpop.f32.mrf.mxu0
    %v711 = vadd.f32 %v692, %v710
    %v712 = vpop.f32.mrf.mxu0
    %v713 = vadd.f32 %v694, %v712
    %714 = vdwg.mxu0
    %715 = vmatpush.bf16.msra.mxu0 %v577
    %716 = vmatpush.bf16.msra.mxu0 %v575
    %717 = vmatpush.bf16.msra.mxu0 %v573
    %718 = vmatpush.bf16.msra.mxu0 %v571
    %719 = vmatpush.bf16.msra.mxu0 %v569
    %720 = vmatpush.bf16.msra.mxu0 %v567
    %721 = vmatpush.bf16.msra.mxu0 %v565
    %722 = vmatpush.bf16.msra.mxu0 %v563
    %723 = vmatmul.bf16.gmra.mxu0 %v336
    %v724 = vpop.f32.mrf.mxu0
    %v725 = vadd.f32 %v415, %v724
    %v726 = vpop.f32.mrf.mxu0
    %v727 = vadd.f32 %v415, %v726
    %728 = vmatmul.bf16.gmra.mxu0 %v337
    %v729 = vpop.f32.mrf.mxu0
    %v730 = vadd.f32 %v415, %v729
    %v731 = vpop.f32.mrf.mxu0
    %v732 = vadd.f32 %v415, %v731
    %733 = vdwg.mxu0
    %734 = vmatpush.bf16.msra.mxu0 %v593
    %735 = vmatpush.bf16.msra.mxu0 %v591
    %736 = vmatpush.bf16.msra.mxu0 %v589
    %737 = vmatpush.bf16.msra.mxu0 %v587
    %738 = vmatpush.bf16.msra.mxu0 %v585
    %739 = vmatpush.bf16.msra.mxu0 %v583
    %740 = vmatpush.bf16.msra.mxu0 %v581
    %741 = vmatpush.bf16.msra.mxu0 %v579
    %742 = vmatmul.bf16.gmra.mxu0 %v348
    %v743 = vpop.f32.mrf.mxu0
    %v744 = vadd.f32 %v725, %v743
    %v745 = vpop.f32.mrf.mxu0
    %v746 = vadd.f32 %v727, %v745
    %747 = vmatmul.bf16.gmra.mxu0 %v349
    %v748 = vpop.f32.mrf.mxu0
    %v749 = vadd.f32 %v730, %v748
    %v750 = vpop.f32.mrf.mxu0
    %v751 = vadd.f32 %v732, %v750
    %752 = vdwg.mxu0
    %753 = vmatpush.bf16.msra.mxu0 %v609
    %754 = vmatpush.bf16.msra.mxu0 %v607
    %755 = vmatpush.bf16.msra.mxu0 %v605
    %756 = vmatpush.bf16.msra.mxu0 %v603
    %757 = vmatpush.bf16.msra.mxu0 %v601
    %758 = vmatpush.bf16.msra.mxu0 %v599
    %759 = vmatpush.bf16.msra.mxu0 %v597
    %760 = vmatpush.bf16.msra.mxu0 %v595
    %761 = vmatmul.bf16.gmra.mxu0 %v360
    %v762 = vpop.f32.mrf.mxu0
    %v763 = vadd.f32 %v744, %v762
    %v764 = vpop.f32.mrf.mxu0
    %v765 = vadd.f32 %v746, %v764
    %766 = vmatmul.bf16.gmra.mxu0 %v361
    %v767 = vpop.f32.mrf.mxu0
    %v768 = vadd.f32 %v749, %v767
    %v769 = vpop.f32.mrf.mxu0
    %v770 = vadd.f32 %v751, %v769
    %771 = vdwg.mxu0
    %v772 = vxor.u32 %v763, 2147483648
    %v773 = vxor.u32 %v765, 2147483648
    %v774 = vxor.u32 %v768, 2147483648
    %v775 = vxor.u32 %v770, 2147483648
    %v776 = vmul.f32 %v772, 1.442695
    %v777 = vpow.pop %v776
    %v778 = vmul.f32 %v773, 1.442695
    %v779 = vpow.pop %v778
    %v780 = vmul.f32 %v774, 1.442695
    %v781 = vpow.pop %v780
    %v782 = vmul.f32 %v775, 1.442695
    %v783 = vpow.pop %v782
    %v784 = vadd.f32 %v777, 1.0
    %v785 = vadd.f32 %v779, 1.0
    %v786 = vadd.f32 %v781, 1.0
    %v787 = vadd.f32 %v783, 1.0
    %v788 = vrcp.pop %v784
    %v789 = vmul.f32 %v784, %v788
    %v790 = vsub.f32 1.0, %v789
    %v791 = vmul.f32 %v788, %v790
    %v792 = vadd.f32 %v788, %v791
    %vm793 = vweird.f32 %v784
    %vm794 = vweird.f32 %v788
    %vm795 = vmor %vm793, %vm794
    %v796 = vsel %vm795, %v788, %v792
    %v797 = vand.u32 2147483647, %v784
    %vm798 = vcmp.eq.f32.partialorder %v797, 8.507059e+37
    %v799 = vand.u32 %v784, 2147483648
    %v800 = vor.u32 1.1754944e-38, %v799
    %v801 = vsel %vm798, %v800, %v796
    %v802 = vmul.f32 1.0, %v801
    %v803 = vrcp.pop %v785
    %v804 = vmul.f32 %v785, %v803
    %v805 = vsub.f32 1.0, %v804
    %v806 = vmul.f32 %v803, %v805
    %v807 = vadd.f32 %v803, %v806
    %vm808 = vweird.f32 %v785
    %vm809 = vweird.f32 %v803
    %vm810 = vmor %vm808, %vm809
    %v811 = vsel %vm810, %v803, %v807
    %v812 = vand.u32 2147483647, %v785
    %vm813 = vcmp.eq.f32.partialorder %v812, 8.507059e+37
    %v814 = vand.u32 %v785, 2147483648
    %v815 = vor.u32 1.1754944e-38, %v814
    %v816 = vsel %vm813, %v815, %v811
    %v817 = vmul.f32 1.0, %v816
    %v818 = vrcp.pop %v786
    %v819 = vmul.f32 %v786, %v818
    %v820 = vsub.f32 1.0, %v819
    %v821 = vmul.f32 %v818, %v820
    %v822 = vadd.f32 %v818, %v821
    %vm823 = vweird.f32 %v786
    %vm824 = vweird.f32 %v818
    %vm825 = vmor %vm823, %vm824
    %v826 = vsel %vm825, %v818, %v822
    %v827 = vand.u32 2147483647, %v786
    %vm828 = vcmp.eq.f32.partialorder %v827, 8.507059e+37
    %v829 = vand.u32 %v786, 2147483648
    %v830 = vor.u32 1.1754944e-38, %v829
    %v831 = vsel %vm828, %v830, %v826
    %v832 = vmul.f32 1.0, %v831
    %v833 = vrcp.pop %v787
    %v834 = vmul.f32 %v787, %v833
    %v835 = vsub.f32 1.0, %v834
    %v836 = vmul.f32 %v833, %v835
    %v837 = vadd.f32 %v833, %v836
    %vm838 = vweird.f32 %v787
    %vm839 = vweird.f32 %v833
    %vm840 = vmor %vm838, %vm839
    %v841 = vsel %vm840, %v833, %v837
    %v842 = vand.u32 2147483647, %v787
    %vm843 = vcmp.eq.f32.partialorder %v842, 8.507059e+37
    %v844 = vand.u32 %v787, 2147483648
    %v845 = vor.u32 1.1754944e-38, %v844
    %v846 = vsel %vm843, %v845, %v841
    %v847 = vmul.f32 1.0, %v846
    %v848 = vmul.f32 %v706, %v802
    %v849 = vmul.f32 %v708, %v817
    %v850 = vmul.f32 %v711, %v832
    %v851 = vmul.f32 %v713, %v847
    %v852 = vadd.f32 %v848, %v279
    %v853 = vadd.f32 %v849, %v280
    %v854 = vadd.f32 %v850, %v281
    %v855 = vadd.f32 %v851, %v282
    %vm856 = vcmp.ge.s32.totalorder %v284, 2
    %vm857 = vcmp.ge.s32.totalorder %v285, 2
    %v858 = vrot.slane %v852, 6
    %v859 = vrot.slane %v853, 6
    %v860 = vrot.slane %v854, 6
    %v861 = vrot.slane %v855, 6
    %vm862 = vcmp.lt.s32.totalorder %v284, 2
    %v863 = vsel %vm862, %v860, %v861
    %v864 = vsel %vm862, %v859, %v860
    %v865 = vsel %vm862, %v858, %v859
    %v866 = vsel %vm862, %v861, %v858
    %v867 = vsel %vm856, %v866, 0.0
    %v868 = vsel %vm857, %v865, 0.0
    %v869 = vsel %vm856, %v864, 0.0
    %v870 = vsel %vm857, %v863, 0.0
    %vm871 = vcmp.lt.s32.totalorder %v284, 14
    %vm872 = vcmp.lt.s32.totalorder %v285, 14
    %v873 = vrot.slane %v852, 2
    %v874 = vrot.slane %v853, 2
    %v875 = vrot.slane %v854, 2
    %v876 = vrot.slane %v855, 2
    %vm877 = vcmp.lt.s32.totalorder %v284, 6
    %v878 = vsel %vm877, %v875, %v876
    %v879 = vsel %vm877, %v874, %v875
    %v880 = vsel %vm877, %v873, %v874
    %v881 = vsel %vm877, %v876, %v873
    %v882 = vsel %vm871, %v880, 0.0
    %v883 = vsel %vm872, %v879, 0.0
    %v884 = vsel %vm871, %v878, 0.0
    %v885 = vsel %vm872, %v881, 0.0
    %v886 = vpack.c.bf16 %v867, %v867
    %v887 = vpack.c.bf16 %v868, %v868
    %v888 = vpack.c.bf16 %v869, %v869
    %v889 = vpack.c.bf16 %v870, %v870
    %v890 = vpack.c.bf16 %v852, %v852
    %v891 = vpack.c.bf16 %v853, %v853
    %v892 = vpack.c.bf16 %v854, %v854
    %v893 = vpack.c.bf16 %v855, %v855
    %v894 = vpack.c.bf16 %v882, %v882
    %v895 = vpack.c.bf16 %v883, %v883
    %v896 = vpack.c.bf16 %v884, %v884
    %v897 = vpack.c.bf16 %v885, %v885
    %v902 = vunpack.c.l.b16 %v886
    %v903 = vunpack.c.l.b16 %v887
    %v904 = vunpack.c.l.b16 %v888
    %v905 = vunpack.c.l.b16 %v889
    %v906 = vpack.c.b16 %v903, %v902
    %v907 = vpack.c.b16 %v905, %v904
    %v914 = vunpack.c.l.b16 %v890
    %v915 = vunpack.c.l.b16 %v891
    %v916 = vunpack.c.l.b16 %v892
    %v917 = vunpack.c.l.b16 %v893
    %v918 = vpack.c.b16 %v915, %v914
    %v919 = vpack.c.b16 %v917, %v916
    %v926 = vunpack.c.l.b16 %v894
    %v927 = vunpack.c.l.b16 %v895
    %v928 = vunpack.c.l.b16 %v896
    %v929 = vunpack.c.l.b16 %v897
    %v930 = vpack.c.b16 %v927, %v926
    %v931 = vpack.c.b16 %v929, %v928
    %v934 = vld [vmem:[#allocation10] sm:$0xff]
    %v935 = vld [vmem:[#allocation10 + $0x8] sm:$0xff]
    %v936 = vld [vmem:[#allocation10 + $0x10] sm:$0xff]
    %v937 = vld [vmem:[#allocation10 + $0x18] sm:$0xff]
    %v938 = vld [vmem:[#allocation10 + $0x20] sm:$0xff]
    %v939 = vld [vmem:[#allocation10 + $0x28] sm:$0xff]
    %v940 = vld [vmem:[#allocation10 + $0x30] sm:$0xff]
    %v941 = vld [vmem:[#allocation10 + $0x38] sm:$0xff]
    %v942 = vld [vmem:[#allocation10 + $0x40] sm:$0xff]
    %v943 = vld [vmem:[#allocation10 + $0x48] sm:$0xff]
    %v944 = vld [vmem:[#allocation10 + $0x50] sm:$0xff]
    %v945 = vld [vmem:[#allocation10 + $0x58] sm:$0xff]
    %v946 = vld [vmem:[#allocation10 + $0x60] sm:$0xff]
    %v947 = vld [vmem:[#allocation10 + $0x68] sm:$0xff]
    %v948 = vld [vmem:[#allocation10 + $0x70] sm:$0xff]
    %v949 = vld [vmem:[#allocation10 + $0x78] sm:$0xff]
    %v950 = vld [vmem:[#allocation10 + $0x80] sm:$0xff]
    %v951 = vld [vmem:[#allocation10 + $0x88] sm:$0xff]
    %v952 = vld [vmem:[#allocation10 + $0x90] sm:$0xff]
    %v953 = vld [vmem:[#allocation10 + $0x98] sm:$0xff]
    %v954 = vld [vmem:[#allocation10 + $0xa0] sm:$0xff]
    %v955 = vld [vmem:[#allocation10 + $0xa8] sm:$0xff]
    %v956 = vld [vmem:[#allocation10 + $0xb0] sm:$0xff]
    %v957 = vld [vmem:[#allocation10 + $0xb8] sm:$0xff]
    %v958 = vld [vmem:[#allocation10 + $0xc0] sm:$0xff]
    %v959 = vld [vmem:[#allocation10 + $0xc8] sm:$0xff]
    %v960 = vld [vmem:[#allocation10 + $0xd0] sm:$0xff]
    %v961 = vld [vmem:[#allocation10 + $0xd8] sm:$0xff]
    %v962 = vld [vmem:[#allocation10 + $0xe0] sm:$0xff]
    %v963 = vld [vmem:[#allocation10 + $0xe8] sm:$0xff]
    %v964 = vld [vmem:[#allocation10 + $0xf0] sm:$0xff]
    %v965 = vld [vmem:[#allocation10 + $0xf8] sm:$0xff]
    %v966 = vld [vmem:[#allocation10 + $0x100] sm:$0xff]
    %v967 = vld [vmem:[#allocation10 + $0x108] sm:$0xff]
    %v968 = vld [vmem:[#allocation10 + $0x110] sm:$0xff]
    %v969 = vld [vmem:[#allocation10 + $0x118] sm:$0xff]
    %v970 = vld [vmem:[#allocation10 + $0x120] sm:$0xff]
    %v971 = vld [vmem:[#allocation10 + $0x128] sm:$0xff]
    %v972 = vld [vmem:[#allocation10 + $0x130] sm:$0xff]
    %v973 = vld [vmem:[#allocation10 + $0x138] sm:$0xff]
    %v974 = vld [vmem:[#allocation10 + $0x140] sm:$0xff]
    %v975 = vld [vmem:[#allocation10 + $0x148] sm:$0xff]
    %v976 = vld [vmem:[#allocation10 + $0x150] sm:$0xff]
    %v977 = vld [vmem:[#allocation10 + $0x158] sm:$0xff]
    %v978 = vld [vmem:[#allocation10 + $0x160] sm:$0xff]
    %v979 = vld [vmem:[#allocation10 + $0x168] sm:$0xff]
    %v980 = vld [vmem:[#allocation10 + $0x170] sm:$0xff]
    %v981 = vld [vmem:[#allocation10 + $0x178] sm:$0xff]
    %v982 = vld [vmem:[%s6] sm:$0x3]
    %v984 = vperm.slane %v982, 0
    %v985 = vperm.slane %v982, 1
    %v1036 = vunpack.c.l.b16 %v934
    %v1037 = vunpack.c.h.b16 %v934
    %v1038 = vunpack.c.l.b16 %v935
    %v1039 = vunpack.c.h.b16 %v935
    %v1040 = vunpack.c.l.b16 %v936
    %v1041 = vunpack.c.h.b16 %v936
    %v1042 = vunpack.c.l.b16 %v937
    %v1043 = vunpack.c.h.b16 %v937
    %v1044 = vunpack.c.l.b16 %v938
    %v1045 = vunpack.c.h.b16 %v938
    %v1046 = vunpack.c.l.b16 %v939
    %v1047 = vunpack.c.h.b16 %v939
    %v1048 = vunpack.c.l.b16 %v940
    %v1049 = vunpack.c.h.b16 %v940
    %v1050 = vunpack.c.l.b16 %v941
    %v1051 = vunpack.c.h.b16 %v941
    %v1052 = vunpack.c.l.b16 %v942
    %v1053 = vunpack.c.h.b16 %v942
    %v1054 = vunpack.c.l.b16 %v943
    %v1055 = vunpack.c.h.b16 %v943
    %v1056 = vunpack.c.l.b16 %v944
    %v1057 = vunpack.c.h.b16 %v944
    %v1058 = vunpack.c.l.b16 %v945
    %v1059 = vunpack.c.h.b16 %v945
    %v1060 = vunpack.c.l.b16 %v946
    %v1061 = vunpack.c.h.b16 %v946
    %v1062 = vunpack.c.l.b16 %v947
    %v1063 = vunpack.c.h.b16 %v947
    %v1064 = vunpack.c.l.b16 %v948
    %v1065 = vunpack.c.h.b16 %v948
    %v1066 = vunpack.c.l.b16 %v949
    %v1067 = vunpack.c.h.b16 %v949
    %v1068 = vunpack.c.l.b16 %v950
    %v1069 = vunpack.c.h.b16 %v950
    %v1070 = vunpack.c.l.b16 %v951
    %v1071 = vunpack.c.h.b16 %v951
    %v1072 = vunpack.c.l.b16 %v952
    %v1073 = vunpack.c.h.b16 %v952
    %v1074 = vunpack.c.l.b16 %v953
    %v1075 = vunpack.c.h.b16 %v953
    %v1076 = vunpack.c.l.b16 %v954
    %v1077 = vunpack.c.h.b16 %v954
    %v1078 = vunpack.c.l.b16 %v955
    %v1079 = vunpack.c.h.b16 %v955
    %v1080 = vunpack.c.l.b16 %v956
    %v1081 = vunpack.c.h.b16 %v956
    %v1082 = vunpack.c.l.b16 %v957
    %v1083 = vunpack.c.h.b16 %v957
    %v1084 = vunpack.c.l.b16 %v958
    %v1085 = vunpack.c.h.b16 %v958
    %v1086 = vunpack.c.l.b16 %v959
    %v1087 = vunpack.c.h.b16 %v959
    %v1088 = vunpack.c.l.b16 %v960
    %v1089 = vunpack.c.h.b16 %v960
    %v1090 = vunpack.c.l.b16 %v961
    %v1091 = vunpack.c.h.b16 %v961
    %v1092 = vunpack.c.l.b16 %v962
    %v1093 = vunpack.c.h.b16 %v962
    %v1094 = vunpack.c.l.b16 %v963
    %v1095 = vunpack.c.h.b16 %v963
    %v1096 = vunpack.c.l.b16 %v964
    %v1097 = vunpack.c.h.b16 %v964
    %v1098 = vunpack.c.l.b16 %v965
    %v1099 = vunpack.c.h.b16 %v965
    %v1100 = vunpack.c.l.b16 %v966
    %v1101 = vunpack.c.h.b16 %v966
    %v1102 = vunpack.c.l.b16 %v967
    %v1103 = vunpack.c.h.b16 %v967
    %v1104 = vunpack.c.l.b16 %v968
    %v1105 = vunpack.c.h.b16 %v968
    %v1106 = vunpack.c.l.b16 %v969
    %v1107 = vunpack.c.h.b16 %v969
    %v1108 = vunpack.c.l.b16 %v970
    %v1109 = vunpack.c.h.b16 %v970
    %v1110 = vunpack.c.l.b16 %v971
    %v1111 = vunpack.c.h.b16 %v971
    %v1112 = vunpack.c.l.b16 %v972
    %v1113 = vunpack.c.h.b16 %v972
    %v1114 = vunpack.c.l.b16 %v973
    %v1115 = vunpack.c.h.b16 %v973
    %v1116 = vunpack.c.l.b16 %v974
    %v1117 = vunpack.c.h.b16 %v974
    %v1118 = vunpack.c.l.b16 %v975
    %v1119 = vunpack.c.h.b16 %v975
    %v1120 = vunpack.c.l.b16 %v976
    %v1121 = vunpack.c.h.b16 %v976
    %v1122 = vunpack.c.l.b16 %v977
    %v1123 = vunpack.c.h.b16 %v977
    %v1124 = vunpack.c.l.b16 %v978
    %v1125 = vunpack.c.h.b16 %v978
    %v1126 = vunpack.c.l.b16 %v979
    %v1127 = vunpack.c.h.b16 %v979
    %v1128 = vunpack.c.l.b16 %v980
    %v1129 = vunpack.c.h.b16 %v980
    %v1130 = vunpack.c.l.b16 %v981
    %v1131 = vunpack.c.h.b16 %v981
    %v1132 = vpack.c.b16 %v1038, %v1036
    %v1133 = vpack.c.b16 %v1039, %v1037
    %v1134 = vpack.c.b16 %v1042, %v1040
    %v1135 = vpack.c.b16 %v1043, %v1041
    %v1136 = vpack.c.b16 %v1046, %v1044
    %v1137 = vpack.c.b16 %v1047, %v1045
    %v1138 = vpack.c.b16 %v1050, %v1048
    %v1139 = vpack.c.b16 %v1051, %v1049
    %v1140 = vpack.c.b16 %v1054, %v1052
    %v1141 = vpack.c.b16 %v1055, %v1053
    %v1142 = vpack.c.b16 %v1058, %v1056
    %v1143 = vpack.c.b16 %v1059, %v1057
    %v1144 = vpack.c.b16 %v1062, %v1060
    %v1145 = vpack.c.b16 %v1063, %v1061
    %v1146 = vpack.c.b16 %v1066, %v1064
    %v1147 = vpack.c.b16 %v1067, %v1065
    %v1148 = vpack.c.b16 %v1070, %v1068
    %v1149 = vpack.c.b16 %v1071, %v1069
    %v1150 = vpack.c.b16 %v1074, %v1072
    %v1151 = vpack.c.b16 %v1075, %v1073
    %v1152 = vpack.c.b16 %v1078, %v1076
    %v1153 = vpack.c.b16 %v1079, %v1077
    %v1154 = vpack.c.b16 %v1082, %v1080
    %v1155 = vpack.c.b16 %v1083, %v1081
    %v1156 = vpack.c.b16 %v1086, %v1084
    %v1157 = vpack.c.b16 %v1087, %v1085
    %v1158 = vpack.c.b16 %v1090, %v1088
    %v1159 = vpack.c.b16 %v1091, %v1089
    %v1160 = vpack.c.b16 %v1094, %v1092
    %v1161 = vpack.c.b16 %v1095, %v1093
    %v1162 = vpack.c.b16 %v1098, %v1096
    %v1163 = vpack.c.b16 %v1099, %v1097
    %v1164 = vpack.c.b16 %v1102, %v1100
    %v1165 = vpack.c.b16 %v1103, %v1101
    %v1166 = vpack.c.b16 %v1106, %v1104
    %v1167 = vpack.c.b16 %v1107, %v1105
    %v1168 = vpack.c.b16 %v1110, %v1108
    %v1169 = vpack.c.b16 %v1111, %v1109
    %v1170 = vpack.c.b16 %v1114, %v1112
    %v1171 = vpack.c.b16 %v1115, %v1113
    %v1172 = vpack.c.b16 %v1118, %v1116
    %v1173 = vpack.c.b16 %v1119, %v1117
    %v1174 = vpack.c.b16 %v1122, %v1120
    %v1175 = vpack.c.b16 %v1123, %v1121
    %v1176 = vpack.c.b16 %v1126, %v1124
    %v1177 = vpack.c.b16 %v1127, %v1125
    %v1178 = vpack.c.b16 %v1130, %v1128
    %v1179 = vpack.c.b16 %v1131, %v1129
    %1228 = vmatpush.bf16.msra.mxu0 %v1146
    %1229 = vmatpush.bf16.msra.mxu0 %v1144
    %1230 = vmatpush.bf16.msra.mxu0 %v1142
    %1231 = vmatpush.bf16.msra.mxu0 %v1140
    %1232 = vmatpush.bf16.msra.mxu0 %v1138
    %1233 = vmatpush.bf16.msra.mxu0 %v1136
    %1234 = vmatpush.bf16.msra.mxu0 %v1134
    %1235 = vmatpush.bf16.msra.mxu0 %v1132
    %1236 = vmatmul.bf16.gmra.mxu0 %v906
    %v1237 = vpop.f32.mrf.mxu0
    %v1238 = vadd.f32 %v984, %v1237
    %v1239 = vpop.f32.mrf.mxu0
    %v1240 = vadd.f32 %v984, %v1239
    %1241 = vmatmul.bf16.gmra.mxu0 %v907
    %v1242 = vpop.f32.mrf.mxu0
    %v1243 = vadd.f32 %v984, %v1242
    %v1244 = vpop.f32.mrf.mxu0
    %v1245 = vadd.f32 %v984, %v1244
    %1246 = vdwg.mxu0
    %1247 = vmatpush.bf16.msra.mxu0 %v1162
    %1248 = vmatpush.bf16.msra.mxu0 %v1160
    %1249 = vmatpush.bf16.msra.mxu0 %v1158
    %1250 = vmatpush.bf16.msra.mxu0 %v1156
    %1251 = vmatpush.bf16.msra.mxu0 %v1154
    %1252 = vmatpush.bf16.msra.mxu0 %v1152
    %1253 = vmatpush.bf16.msra.mxu0 %v1150
    %1254 = vmatpush.bf16.msra.mxu0 %v1148
    %1255 = vmatmul.bf16.gmra.mxu0 %v918
    %v1256 = vpop.f32.mrf.mxu0
    %v1257 = vadd.f32 %v1238, %v1256
    %v1258 = vpop.f32.mrf.mxu0
    %v1259 = vadd.f32 %v1240, %v1258
    %1260 = vmatmul.bf16.gmra.mxu0 %v919
    %v1261 = vpop.f32.mrf.mxu0
    %v1262 = vadd.f32 %v1243, %v1261
    %v1263 = vpop.f32.mrf.mxu0
    %v1264 = vadd.f32 %v1245, %v1263
    %1265 = vdwg.mxu0
    %1266 = vmatpush.bf16.msra.mxu0 %v1178
    %1267 = vmatpush.bf16.msra.mxu0 %v1176
    %1268 = vmatpush.bf16.msra.mxu0 %v1174
    %1269 = vmatpush.bf16.msra.mxu0 %v1172
    %1270 = vmatpush.bf16.msra.mxu0 %v1170
    %1271 = vmatpush.bf16.msra.mxu0 %v1168
    %1272 = vmatpush.bf16.msra.mxu0 %v1166
    %1273 = vmatpush.bf16.msra.mxu0 %v1164
    %1274 = vmatmul.bf16.gmra.mxu0 %v930
    %v1275 = vpop.f32.mrf.mxu0
    %v1276 = vadd.f32 %v1257, %v1275
    %v1277 = vpop.f32.mrf.mxu0
    %v1278 = vadd.f32 %v1259, %v1277
    %1279 = vmatmul.bf16.gmra.mxu0 %v931
    %v1280 = vpop.f32.mrf.mxu0
    %v1281 = vadd.f32 %v1262, %v1280
    %v1282 = vpop.f32.mrf.mxu0
    %v1283 = vadd.f32 %v1264, %v1282
    %1284 = vdwg.mxu0
    %1285 = vmatpush.bf16.msra.mxu0 %v1147
    %1286 = vmatpush.bf16.msra.mxu0 %v1145
    %1287 = vmatpush.bf16.msra.mxu0 %v1143
    %1288 = vmatpush.bf16.msra.mxu0 %v1141
    %1289 = vmatpush.bf16.msra.mxu0 %v1139
    %1290 = vmatpush.bf16.msra.mxu0 %v1137
    %1291 = vmatpush.bf16.msra.mxu0 %v1135
    %1292 = vmatpush.bf16.msra.mxu0 %v1133
    %1293 = vmatmul.bf16.gmra.mxu0 %v906
    %v1294 = vpop.f32.mrf.mxu0
    %v1295 = vadd.f32 %v985, %v1294
    %v1296 = vpop.f32.mrf.mxu0
    %v1297 = vadd.f32 %v985, %v1296
    %1298 = vmatmul.bf16.gmra.mxu0 %v907
    %v1299 = vpop.f32.mrf.mxu0
    %v1300 = vadd.f32 %v985, %v1299
    %v1301 = vpop.f32.mrf.mxu0
    %v1302 = vadd.f32 %v985, %v1301
    %1303 = vdwg.mxu0
    %1304 = vmatpush.bf16.msra.mxu0 %v1163
    %1305 = vmatpush.bf16.msra.mxu0 %v1161
    %1306 = vmatpush.bf16.msra.mxu0 %v1159
    %1307 = vmatpush.bf16.msra.mxu0 %v1157
    %1308 = vmatpush.bf16.msra.mxu0 %v1155
    %1309 = vmatpush.bf16.msra.mxu0 %v1153
    %1310 = vmatpush.bf16.msra.mxu0 %v1151
    %1311 = vmatpush.bf16.msra.mxu0 %v1149
    %1312 = vmatmul.bf16.gmra.mxu0 %v918
    %v1313 = vpop.f32.mrf.mxu0
    %v1314 = vadd.f32 %v1295, %v1313
    %v1315 = vpop.f32.mrf.mxu0
    %v1316 = vadd.f32 %v1297, %v1315
    %1317 = vmatmul.bf16.gmra.mxu0 %v919
    %v1318 = vpop.f32.mrf.mxu0
    %v1319 = vadd.f32 %v1300, %v1318
    %v1320 = vpop.f32.mrf.mxu0
    %v1321 = vadd.f32 %v1302, %v1320
    %1322 = vdwg.mxu0
    %1323 = vmatpush.bf16.msra.mxu0 %v1179
    %1324 = vmatpush.bf16.msra.mxu0 %v1177
    %1325 = vmatpush.bf16.msra.mxu0 %v1175
    %1326 = vmatpush.bf16.msra.mxu0 %v1173
    %1327 = vmatpush.bf16.msra.mxu0 %v1171
    %1328 = vmatpush.bf16.msra.mxu0 %v1169
    %1329 = vmatpush.bf16.msra.mxu0 %v1167
    %1330 = vmatpush.bf16.msra.mxu0 %v1165
    %1331 = vmatmul.bf16.gmra.mxu0 %v930
    %v1332 = vpop.f32.mrf.mxu0
    %v1333 = vadd.f32 %v1314, %v1332
    %v1334 = vpop.f32.mrf.mxu0
    %v1335 = vadd.f32 %v1316, %v1334
    %1336 = vmatmul.bf16.gmra.mxu0 %v931
    %v1337 = vpop.f32.mrf.mxu0
    %v1338 = vadd.f32 %v1319, %v1337
    %v1339 = vpop.f32.mrf.mxu0
    %v1340 = vadd.f32 %v1321, %v1339
    %1341 = vdwg.mxu0
    %v1342 = vxor.u32 %v1333, 2147483648
    %v1343 = vxor.u32 %v1335, 2147483648
    %v1344 = vxor.u32 %v1338, 2147483648
    %v1345 = vxor.u32 %v1340, 2147483648
    %v1346 = vmul.f32 %v1342, 1.442695
    %v1347 = vpow.pop %v1346
    %v1348 = vmul.f32 %v1343, 1.442695
    %v1349 = vpow.pop %v1348
    %v1350 = vmul.f32 %v1344, 1.442695
    %v1351 = vpow.pop %v1350
    %v1352 = vmul.f32 %v1345, 1.442695
    %v1353 = vpow.pop %v1352
    %v1354 = vadd.f32 %v1347, 1.0
    %v1355 = vadd.f32 %v1349, 1.0
    %v1356 = vadd.f32 %v1351, 1.0
    %v1357 = vadd.f32 %v1353, 1.0
    %v1358 = vrcp.pop %v1354
    %v1359 = vmul.f32 %v1354, %v1358
    %v1360 = vsub.f32 1.0, %v1359
    %v1361 = vmul.f32 %v1358, %v1360
    %v1362 = vadd.f32 %v1358, %v1361
    %vm1363 = vweird.f32 %v1354
    %vm1364 = vweird.f32 %v1358
    %vm1365 = vmor %vm1363, %vm1364
    %v1366 = vsel %vm1365, %v1358, %v1362
    %v1367 = vand.u32 2147483647, %v1354
    %vm1368 = vcmp.eq.f32.partialorder %v1367, 8.507059e+37
    %v1369 = vand.u32 %v1354, 2147483648
    %v1370 = vor.u32 1.1754944e-38, %v1369
    %v1371 = vsel %vm1368, %v1370, %v1366
    %v1372 = vmul.f32 1.0, %v1371
    %v1373 = vrcp.pop %v1355
    %v1374 = vmul.f32 %v1355, %v1373
    %v1375 = vsub.f32 1.0, %v1374
    %v1376 = vmul.f32 %v1373, %v1375
    %v1377 = vadd.f32 %v1373, %v1376
    %vm1378 = vweird.f32 %v1355
    %vm1379 = vweird.f32 %v1373
    %vm1380 = vmor %vm1378, %vm1379
    %v1381 = vsel %vm1380, %v1373, %v1377
    %v1382 = vand.u32 2147483647, %v1355
    %vm1383 = vcmp.eq.f32.partialorder %v1382, 8.507059e+37
    %v1384 = vand.u32 %v1355, 2147483648
    %v1385 = vor.u32 1.1754944e-38, %v1384
    %v1386 = vsel %vm1383, %v1385, %v1381
    %v1387 = vmul.f32 1.0, %v1386
    %v1388 = vrcp.pop %v1356
    %v1389 = vmul.f32 %v1356, %v1388
    %v1390 = vsub.f32 1.0, %v1389
    %v1391 = vmul.f32 %v1388, %v1390
    %v1392 = vadd.f32 %v1388, %v1391
    %vm1393 = vweird.f32 %v1356
    %vm1394 = vweird.f32 %v1388
    %vm1395 = vmor %vm1393, %vm1394
    %v1396 = vsel %vm1395, %v1388, %v1392
    %v1397 = vand.u32 2147483647, %v1356
    %vm1398 = vcmp.eq.f32.partialorder %v1397, 8.507059e+37
    %v1399 = vand.u32 %v1356, 2147483648
    %v1400 = vor.u32 1.1754944e-38, %v1399
    %v1401 = vsel %vm1398, %v1400, %v1396
    %v1402 = vmul.f32 1.0, %v1401
    %v1403 = vrcp.pop %v1357
    %v1404 = vmul.f32 %v1357, %v1403
    %v1405 = vsub.f32 1.0, %v1404
    %v1406 = vmul.f32 %v1403, %v1405
    %v1407 = vadd.f32 %v1403, %v1406
    %vm1408 = vweird.f32 %v1357
    %vm1409 = vweird.f32 %v1403
    %vm1410 = vmor %vm1408, %vm1409
    %v1411 = vsel %vm1410, %v1403, %v1407
    %v1412 = vand.u32 2147483647, %v1357
    %vm1413 = vcmp.eq.f32.partialorder %v1412, 8.507059e+37
    %v1414 = vand.u32 %v1357, 2147483648
    %v1415 = vor.u32 1.1754944e-38, %v1414
    %v1416 = vsel %vm1413, %v1415, %v1411
    %v1417 = vmul.f32 1.0, %v1416
    %v1418 = vmul.f32 %v1276, %v1372
    %v1419 = vmul.f32 %v1278, %v1387
    %v1420 = vmul.f32 %v1281, %v1402
    %v1421 = vmul.f32 %v1283, %v1417
    %v1422 = vadd.f32 %v1418, %v852
    %v1423 = vadd.f32 %v1419, %v853
    %v1424 = vadd.f32 %v1420, %v854
    %v1425 = vadd.f32 %v1421, %v855
    %vm1426 = vcmp.ge.s32.totalorder %v284, 4
    %vm1427 = vcmp.ge.s32.totalorder %v285, 4
    %v1428 = vrot.slane %v1422, 4
    %v1429 = vrot.slane %v1423, 4
    %v1430 = vrot.slane %v1424, 4
    %v1431 = vrot.slane %v1425, 4
    %vm1432 = vcmp.lt.s32.totalorder %v284, 4
    %v1433 = vsel %vm1432, %v1430, %v1431
    %v1434 = vsel %vm1432, %v1429, %v1430
    %v1435 = vsel %vm1432, %v1428, %v1429
    %v1436 = vsel %vm1432, %v1431, %v1428
    %v1437 = vsel %vm1426, %v1436, 0.0
    %v1438 = vsel %vm1427, %v1435, 0.0
    %v1439 = vsel %vm1426, %v1434, 0.0
    %v1440 = vsel %vm1427, %v1433, 0.0
    %vm1441 = vcmp.lt.s32.totalorder %v284, 12
    %vm1442 = vcmp.lt.s32.totalorder %v285, 12
    %v1443 = vsel %vm1441, %v1435, 0.0
    %v1444 = vsel %vm1442, %v1434, 0.0
    %v1445 = vsel %vm1441, %v1433, 0.0
    %v1446 = vsel %vm1442, %v1436, 0.0
    %v1447 = vpack.c.bf16 %v1437, %v1437
    %v1448 = vpack.c.bf16 %v1438, %v1438
    %v1449 = vpack.c.bf16 %v1439, %v1439
    %v1450 = vpack.c.bf16 %v1440, %v1440
    %v1451 = vpack.c.bf16 %v1422, %v1422
    %v1452 = vpack.c.bf16 %v1423, %v1423
    %v1453 = vpack.c.bf16 %v1424, %v1424
    %v1454 = vpack.c.bf16 %v1425, %v1425
    %v1455 = vpack.c.bf16 %v1443, %v1443
    %v1456 = vpack.c.bf16 %v1444, %v1444
    %v1457 = vpack.c.bf16 %v1445, %v1445
    %v1458 = vpack.c.bf16 %v1446, %v1446
    %v1463 = vunpack.c.l.b16 %v1447
    %v1464 = vunpack.c.l.b16 %v1448
    %v1465 = vunpack.c.l.b16 %v1449
    %v1466 = vunpack.c.l.b16 %v1450
    %v1467 = vpack.c.b16 %v1464, %v1463
    %v1468 = vpack.c.b16 %v1466, %v1465
    %v1475 = vunpack.c.l.b16 %v1451
    %v1476 = vunpack.c.l.b16 %v1452
    %v1477 = vunpack.c.l.b16 %v1453
    %v1478 = vunpack.c.l.b16 %v1454
    %v1479 = vpack.c.b16 %v1476, %v1475
    %v1480 = vpack.c.b16 %v1478, %v1477
    %v1487 = vunpack.c.l.b16 %v1455
    %v1488 = vunpack.c.l.b16 %v1456
    %v1489 = vunpack.c.l.b16 %v1457
    %v1490 = vunpack.c.l.b16 %v1458
    %v1491 = vpack.c.b16 %v1488, %v1487
    %v1492 = vpack.c.b16 %v1490, %v1489
    %v1495 = vld [vmem:[#allocation11] sm:$0xff]
    %v1496 = vld [vmem:[#allocation11 + $0x8] sm:$0xff]
    %v1497 = vld [vmem:[#allocation11 + $0x10] sm:$0xff]
    %v1498 = vld [vmem:[#allocation11 + $0x18] sm:$0xff]
    %v1499 = vld [vmem:[#allocation11 + $0x20] sm:$0xff]
    %v1500 = vld [vmem:[#allocation11 + $0x28] sm:$0xff]
    %v1501 = vld [vmem:[#allocation11 + $0x30] sm:$0xff]
    %v1502 = vld [vmem:[#allocation11 + $0x38] sm:$0xff]
    %v1503 = vld [vmem:[#allocation11 + $0x40] sm:$0xff]
    %v1504 = vld [vmem:[#allocation11 + $0x48] sm:$0xff]
    %v1505 = vld [vmem:[#allocation11 + $0x50] sm:$0xff]
    %v1506 = vld [vmem:[#allocation11 + $0x58] sm:$0xff]
    %v1507 = vld [vmem:[#allocation11 + $0x60] sm:$0xff]
    %v1508 = vld [vmem:[#allocation11 + $0x68] sm:$0xff]
    %v1509 = vld [vmem:[#allocation11 + $0x70] sm:$0xff]
    %v1510 = vld [vmem:[#allocation11 + $0x78] sm:$0xff]
    %v1511 = vld [vmem:[#allocation11 + $0x80] sm:$0xff]
    %v1512 = vld [vmem:[#allocation11 + $0x88] sm:$0xff]
    %v1513 = vld [vmem:[#allocation11 + $0x90] sm:$0xff]
    %v1514 = vld [vmem:[#allocation11 + $0x98] sm:$0xff]
    %v1515 = vld [vmem:[#allocation11 + $0xa0] sm:$0xff]
    %v1516 = vld [vmem:[#allocation11 + $0xa8] sm:$0xff]
    %v1517 = vld [vmem:[#allocation11 + $0xb0] sm:$0xff]
    %v1518 = vld [vmem:[#allocation11 + $0xb8] sm:$0xff]
    %v1519 = vld [vmem:[#allocation11 + $0xc0] sm:$0xff]
    %v1520 = vld [vmem:[#allocation11 + $0xc8] sm:$0xff]
    %v1521 = vld [vmem:[#allocation11 + $0xd0] sm:$0xff]
    %v1522 = vld [vmem:[#allocation11 + $0xd8] sm:$0xff]
    %v1523 = vld [vmem:[#allocation11 + $0xe0] sm:$0xff]
    %v1524 = vld [vmem:[#allocation11 + $0xe8] sm:$0xff]
    %v1525 = vld [vmem:[#allocation11 + $0xf0] sm:$0xff]
    %v1526 = vld [vmem:[#allocation11 + $0xf8] sm:$0xff]
    %v1527 = vld [vmem:[#allocation11 + $0x100] sm:$0xff]
    %v1528 = vld [vmem:[#allocation11 + $0x108] sm:$0xff]
    %v1529 = vld [vmem:[#allocation11 + $0x110] sm:$0xff]
    %v1530 = vld [vmem:[#allocation11 + $0x118] sm:$0xff]
    %v1531 = vld [vmem:[#allocation11 + $0x120] sm:$0xff]
    %v1532 = vld [vmem:[#allocation11 + $0x128] sm:$0xff]
    %v1533 = vld [vmem:[#allocation11 + $0x130] sm:$0xff]
    %v1534 = vld [vmem:[#allocation11 + $0x138] sm:$0xff]
    %v1535 = vld [vmem:[#allocation11 + $0x140] sm:$0xff]
    %v1536 = vld [vmem:[#allocation11 + $0x148] sm:$0xff]
    %v1537 = vld [vmem:[#allocation11 + $0x150] sm:$0xff]
    %v1538 = vld [vmem:[#allocation11 + $0x158] sm:$0xff]
    %v1539 = vld [vmem:[#allocation11 + $0x160] sm:$0xff]
    %v1540 = vld [vmem:[#allocation11 + $0x168] sm:$0xff]
    %v1541 = vld [vmem:[#allocation11 + $0x170] sm:$0xff]
    %v1542 = vld [vmem:[#allocation11 + $0x178] sm:$0xff]
    %v1543 = vld [vmem:[%s8] sm:$0x3]
    %v1545 = vperm.slane %v1543, 0
    %v1546 = vperm.slane %v1543, 1
    %v1597 = vunpack.c.l.b16 %v1495
    %v1598 = vunpack.c.h.b16 %v1495
    %v1599 = vunpack.c.l.b16 %v1496
    %v1600 = vunpack.c.h.b16 %v1496
    %v1601 = vunpack.c.l.b16 %v1497
    %v1602 = vunpack.c.h.b16 %v1497
    %v1603 = vunpack.c.l.b16 %v1498
    %v1604 = vunpack.c.h.b16 %v1498
    %v1605 = vunpack.c.l.b16 %v1499
    %v1606 = vunpack.c.h.b16 %v1499
    %v1607 = vunpack.c.l.b16 %v1500
    %v1608 = vunpack.c.h.b16 %v1500
    %v1609 = vunpack.c.l.b16 %v1501
    %v1610 = vunpack.c.h.b16 %v1501
    %v1611 = vunpack.c.l.b16 %v1502
    %v1612 = vunpack.c.h.b16 %v1502
    %v1613 = vunpack.c.l.b16 %v1503
    %v1614 = vunpack.c.h.b16 %v1503
    %v1615 = vunpack.c.l.b16 %v1504
    %v1616 = vunpack.c.h.b16 %v1504
    %v1617 = vunpack.c.l.b16 %v1505
    %v1618 = vunpack.c.h.b16 %v1505
    %v1619 = vunpack.c.l.b16 %v1506
    %v1620 = vunpack.c.h.b16 %v1506
    %v1621 = vunpack.c.l.b16 %v1507
    %v1622 = vunpack.c.h.b16 %v1507
    %v1623 = vunpack.c.l.b16 %v1508
    %v1624 = vunpack.c.h.b16 %v1508
    %v1625 = vunpack.c.l.b16 %v1509
    %v1626 = vunpack.c.h.b16 %v1509
    %v1627 = vunpack.c.l.b16 %v1510
    %v1628 = vunpack.c.h.b16 %v1510
    %v1629 = vunpack.c.l.b16 %v1511
    %v1630 = vunpack.c.h.b16 %v1511
    %v1631 = vunpack.c.l.b16 %v1512
    %v1632 = vunpack.c.h.b16 %v1512
    %v1633 = vunpack.c.l.b16 %v1513
    %v1634 = vunpack.c.h.b16 %v1513
    %v1635 = vunpack.c.l.b16 %v1514
    %v1636 = vunpack.c.h.b16 %v1514
    %v1637 = vunpack.c.l.b16 %v1515
    %v1638 = vunpack.c.h.b16 %v1515
    %v1639 = vunpack.c.l.b16 %v1516
    %v1640 = vunpack.c.h.b16 %v1516
    %v1641 = vunpack.c.l.b16 %v1517
    %v1642 = vunpack.c.h.b16 %v1517
    %v1643 = vunpack.c.l.b16 %v1518
    %v1644 = vunpack.c.h.b16 %v1518
    %v1645 = vunpack.c.l.b16 %v1519
    %v1646 = vunpack.c.h.b16 %v1519
    %v1647 = vunpack.c.l.b16 %v1520
    %v1648 = vunpack.c.h.b16 %v1520
    %v1649 = vunpack.c.l.b16 %v1521
    %v1650 = vunpack.c.h.b16 %v1521
    %v1651 = vunpack.c.l.b16 %v1522
    %v1652 = vunpack.c.h.b16 %v1522
    %v1653 = vunpack.c.l.b16 %v1523
    %v1654 = vunpack.c.h.b16 %v1523
    %v1655 = vunpack.c.l.b16 %v1524
    %v1656 = vunpack.c.h.b16 %v1524
    %v1657 = vunpack.c.l.b16 %v1525
    %v1658 = vunpack.c.h.b16 %v1525
    %v1659 = vunpack.c.l.b16 %v1526
    %v1660 = vunpack.c.h.b16 %v1526
    %v1661 = vunpack.c.l.b16 %v1527
    %v1662 = vunpack.c.h.b16 %v1527
    %v1663 = vunpack.c.l.b16 %v1528
    %v1664 = vunpack.c.h.b16 %v1528
    %v1665 = vunpack.c.l.b16 %v1529
    %v1666 = vunpack.c.h.b16 %v1529
    %v1667 = vunpack.c.l.b16 %v1530
    %v1668 = vunpack.c.h.b16 %v1530
    %v1669 = vunpack.c.l.b16 %v1531
    %v1670 = vunpack.c.h.b16 %v1531
    %v1671 = vunpack.c.l.b16 %v1532
    %v1672 = vunpack.c.h.b16 %v1532
    %v1673 = vunpack.c.l.b16 %v1533
    %v1674 = vunpack.c.h.b16 %v1533
    %v1675 = vunpack.c.l.b16 %v1534
    %v1676 = vunpack.c.h.b16 %v1534
    %v1677 = vunpack.c.l.b16 %v1535
    %v1678 = vunpack.c.h.b16 %v1535
    %v1679 = vunpack.c.l.b16 %v1536
    %v1680 = vunpack.c.h.b16 %v1536
    %v1681 = vunpack.c.l.b16 %v1537
    %v1682 = vunpack.c.h.b16 %v1537
    %v1683 = vunpack.c.l.b16 %v1538
    %v1684 = vunpack.c.h.b16 %v1538
    %v1685 = vunpack.c.l.b16 %v1539
    %v1686 = vunpack.c.h.b16 %v1539
    %v1687 = vunpack.c.l.b16 %v1540
    %v1688 = vunpack.c.h.b16 %v1540
    %v1689 = vunpack.c.l.b16 %v1541
    %v1690 = vunpack.c.h.b16 %v1541
    %v1691 = vunpack.c.l.b16 %v1542
    %v1692 = vunpack.c.h.b16 %v1542
    %v1693 = vpack.c.b16 %v1599, %v1597
    %v1694 = vpack.c.b16 %v1600, %v1598
    %v1695 = vpack.c.b16 %v1603, %v1601
    %v1696 = vpack.c.b16 %v1604, %v1602
    %v1697 = vpack.c.b16 %v1607, %v1605
    %v1698 = vpack.c.b16 %v1608, %v1606
    %v1699 = vpack.c.b16 %v1611, %v1609
    %v1700 = vpack.c.b16 %v1612, %v1610
    %v1701 = vpack.c.b16 %v1615, %v1613
    %v1702 = vpack.c.b16 %v1616, %v1614
    %v1703 = vpack.c.b16 %v1619, %v1617
    %v1704 = vpack.c.b16 %v1620, %v1618
    %v1705 = vpack.c.b16 %v1623, %v1621
    %v1706 = vpack.c.b16 %v1624, %v1622
    %v1707 = vpack.c.b16 %v1627, %v1625
    %v1708 = vpack.c.b16 %v1628, %v1626
    %v1709 = vpack.c.b16 %v1631, %v1629
    %v1710 = vpack.c.b16 %v1632, %v1630
    %v1711 = vpack.c.b16 %v1635, %v1633
    %v1712 = vpack.c.b16 %v1636, %v1634
    %v1713 = vpack.c.b16 %v1639, %v1637
    %v1714 = vpack.c.b16 %v1640, %v1638
    %v1715 = vpack.c.b16 %v1643, %v1641
    %v1716 = vpack.c.b16 %v1644, %v1642
    %v1717 = vpack.c.b16 %v1647, %v1645
    %v1718 = vpack.c.b16 %v1648, %v1646
    %v1719 = vpack.c.b16 %v1651, %v1649
    %v1720 = vpack.c.b16 %v1652, %v1650
    %v1721 = vpack.c.b16 %v1655, %v1653
    %v1722 = vpack.c.b16 %v1656, %v1654
    %v1723 = vpack.c.b16 %v1659, %v1657
    %v1724 = vpack.c.b16 %v1660, %v1658
    %v1725 = vpack.c.b16 %v1663, %v1661
    %v1726 = vpack.c.b16 %v1664, %v1662
    %v1727 = vpack.c.b16 %v1667, %v1665
    %v1728 = vpack.c.b16 %v1668, %v1666
    %v1729 = vpack.c.b16 %v1671, %v1669
    %v1730 = vpack.c.b16 %v1672, %v1670
    %v1731 = vpack.c.b16 %v1675, %v1673
    %v1732 = vpack.c.b16 %v1676, %v1674
    %v1733 = vpack.c.b16 %v1679, %v1677
    %v1734 = vpack.c.b16 %v1680, %v1678
    %v1735 = vpack.c.b16 %v1683, %v1681
    %v1736 = vpack.c.b16 %v1684, %v1682
    %v1737 = vpack.c.b16 %v1687, %v1685
    %v1738 = vpack.c.b16 %v1688, %v1686
    %v1739 = vpack.c.b16 %v1691, %v1689
    %v1740 = vpack.c.b16 %v1692, %v1690
    %1789 = vmatpush.bf16.msra.mxu0 %v1707
    %1790 = vmatpush.bf16.msra.mxu0 %v1705
    %1791 = vmatpush.bf16.msra.mxu0 %v1703
    %1792 = vmatpush.bf16.msra.mxu0 %v1701
    %1793 = vmatpush.bf16.msra.mxu0 %v1699
    %1794 = vmatpush.bf16.msra.mxu0 %v1697
    %1795 = vmatpush.bf16.msra.mxu0 %v1695
    %1796 = vmatpush.bf16.msra.mxu0 %v1693
    %1797 = vmatmul.bf16.gmra.mxu0 %v1467
    %v1798 = vpop.f32.mrf.mxu0
    %v1799 = vadd.f32 %v1545, %v1798
    %v1800 = vpop.f32.mrf.mxu0
    %v1801 = vadd.f32 %v1545, %v1800
    %1802 = vmatmul.bf16.gmra.mxu0 %v1468
    %v1803 = vpop.f32.mrf.mxu0
    %v1804 = vadd.f32 %v1545, %v1803
    %v1805 = vpop.f32.mrf.mxu0
    %v1806 = vadd.f32 %v1545, %v1805
    %1807 = vdwg.mxu0
    %1808 = vmatpush.bf16.msra.mxu0 %v1723
    %1809 = vmatpush.bf16.msra.mxu0 %v1721
    %1810 = vmatpush.bf16.msra.mxu0 %v1719
    %1811 = vmatpush.bf16.msra.mxu0 %v1717
    %1812 = vmatpush.bf16.msra.mxu0 %v1715
    %1813 = vmatpush.bf16.msra.mxu0 %v1713
    %1814 = vmatpush.bf16.msra.mxu0 %v1711
    %1815 = vmatpush.bf16.msra.mxu0 %v1709
    %1816 = vmatmul.bf16.gmra.mxu0 %v1479
    %v1817 = vpop.f32.mrf.mxu0
    %v1818 = vadd.f32 %v1799, %v1817
    %v1819 = vpop.f32.mrf.mxu0
    %v1820 = vadd.f32 %v1801, %v1819
    %1821 = vmatmul.bf16.gmra.mxu0 %v1480
    %v1822 = vpop.f32.mrf.mxu0
    %v1823 = vadd.f32 %v1804, %v1822
    %v1824 = vpop.f32.mrf.mxu0
    %v1825 = vadd.f32 %v1806, %v1824
    %1826 = vdwg.mxu0
    %1827 = vmatpush.bf16.msra.mxu0 %v1739
    %1828 = vmatpush.bf16.msra.mxu0 %v1737
    %1829 = vmatpush.bf16.msra.mxu0 %v1735
    %1830 = vmatpush.bf16.msra.mxu0 %v1733
    %1831 = vmatpush.bf16.msra.mxu0 %v1731
    %1832 = vmatpush.bf16.msra.mxu0 %v1729
    %1833 = vmatpush.bf16.msra.mxu0 %v1727
    %1834 = vmatpush.bf16.msra.mxu0 %v1725
    %1835 = vmatmul.bf16.gmra.mxu0 %v1491
    %v1836 = vpop.f32.mrf.mxu0
    %v1837 = vadd.f32 %v1818, %v1836
    %v1838 = vpop.f32.mrf.mxu0
    %v1839 = vadd.f32 %v1820, %v1838
    %1840 = vmatmul.bf16.gmra.mxu0 %v1492
    %v1841 = vpop.f32.mrf.mxu0
    %v1842 = vadd.f32 %v1823, %v1841
    %v1843 = vpop.f32.mrf.mxu0
    %v1844 = vadd.f32 %v1825, %v1843
    %1845 = vdwg.mxu0
    %1846 = vmatpush.bf16.msra.mxu0 %v1708
    %1847 = vmatpush.bf16.msra.mxu0 %v1706
    %1848 = vmatpush.bf16.msra.mxu0 %v1704
    %1849 = vmatpush.bf16.msra.mxu0 %v1702
    %1850 = vmatpush.bf16.msra.mxu0 %v1700
    %1851 = vmatpush.bf16.msra.mxu0 %v1698
    %1852 = vmatpush.bf16.msra.mxu0 %v1696
    %1853 = vmatpush.bf16.msra.mxu0 %v1694
    %1854 = vmatmul.bf16.gmra.mxu0 %v1467
    %v1855 = vpop.f32.mrf.mxu0
    %v1856 = vadd.f32 %v1546, %v1855
    %v1857 = vpop.f32.mrf.mxu0
    %v1858 = vadd.f32 %v1546, %v1857
    %1859 = vmatmul.bf16.gmra.mxu0 %v1468
    %v1860 = vpop.f32.mrf.mxu0
    %v1861 = vadd.f32 %v1546, %v1860
    %v1862 = vpop.f32.mrf.mxu0
    %v1863 = vadd.f32 %v1546, %v1862
    %1864 = vdwg.mxu0
    %1865 = vmatpush.bf16.msra.mxu0 %v1724
    %1866 = vmatpush.bf16.msra.mxu0 %v1722
    %1867 = vmatpush.bf16.msra.mxu0 %v1720
    %1868 = vmatpush.bf16.msra.mxu0 %v1718
    %1869 = vmatpush.bf16.msra.mxu0 %v1716
    %1870 = vmatpush.bf16.msra.mxu0 %v1714
    %1871 = vmatpush.bf16.msra.mxu0 %v1712
    %1872 = vmatpush.bf16.msra.mxu0 %v1710
    %1873 = vmatmul.bf16.gmra.mxu0 %v1479
    %v1874 = vpop.f32.mrf.mxu0
    %v1875 = vadd.f32 %v1856, %v1874
    %v1876 = vpop.f32.mrf.mxu0
    %v1877 = vadd.f32 %v1858, %v1876
    %1878 = vmatmul.bf16.gmra.mxu0 %v1480
    %v1879 = vpop.f32.mrf.mxu0
    %v1880 = vadd.f32 %v1861, %v1879
    %v1881 = vpop.f32.mrf.mxu0
    %v1882 = vadd.f32 %v1863, %v1881
    %1883 = vdwg.mxu0
    %1884 = vmatpush.bf16.msra.mxu0 %v1740
    %1885 = vmatpush.bf16.msra.mxu0 %v1738
    %1886 = vmatpush.bf16.msra.mxu0 %v1736
    %1887 = vmatpush.bf16.msra.mxu0 %v1734
    %1888 = vmatpush.bf16.msra.mxu0 %v1732
    %1889 = vmatpush.bf16.msra.mxu0 %v1730
    %1890 = vmatpush.bf16.msra.mxu0 %v1728
    %1891 = vmatpush.bf16.msra.mxu0 %v1726
    %1892 = vmatmul.bf16.gmra.mxu0 %v1491
    %v1893 = vpop.f32.mrf.mxu0
    %v1894 = vadd.f32 %v1875, %v1893
    %v1895 = vpop.f32.mrf.mxu0
    %v1896 = vadd.f32 %v1877, %v1895
    %1897 = vmatmul.bf16.gmra.mxu0 %v1492
    %v1898 = vpop.f32.mrf.mxu0
    %v1899 = vadd.f32 %v1880, %v1898
    %v1900 = vpop.f32.mrf.mxu0
    %v1901 = vadd.f32 %v1882, %v1900
    %1902 = vdwg.mxu0
    %v1903 = vxor.u32 %v1894, 2147483648
    %v1904 = vxor.u32 %v1896, 2147483648
    %v1905 = vxor.u32 %v1899, 2147483648
    %v1906 = vxor.u32 %v1901, 2147483648
    %v1907 = vmul.f32 %v1903, 1.442695
    %v1908 = vpow.pop %v1907
    %v1909 = vmul.f32 %v1904, 1.442695
    %v1910 = vpow.pop %v1909
    %v1911 = vmul.f32 %v1905, 1.442695
    %v1912 = vpow.pop %v1911
    %v1913 = vmul.f32 %v1906, 1.442695
    %v1914 = vpow.pop %v1913
    %v1915 = vadd.f32 %v1908, 1.0
    %v1916 = vadd.f32 %v1910, 1.0
    %v1917 = vadd.f32 %v1912, 1.0
    %v1918 = vadd.f32 %v1914, 1.0
    %v1919 = vrcp.pop %v1915
    %v1920 = vmul.f32 %v1915, %v1919
    %v1921 = vsub.f32 1.0, %v1920
    %v1922 = vmul.f32 %v1919, %v1921
    %v1923 = vadd.f32 %v1919, %v1922
    %vm1924 = vweird.f32 %v1915
    %vm1925 = vweird.f32 %v1919
    %vm1926 = vmor %vm1924, %vm1925
    %v1927 = vsel %vm1926, %v1919, %v1923
    %v1928 = vand.u32 2147483647, %v1915
    %vm1929 = vcmp.eq.f32.partialorder %v1928, 8.507059e+37
    %v1930 = vand.u32 %v1915, 2147483648
    %v1931 = vor.u32 1.1754944e-38, %v1930
    %v1932 = vsel %vm1929, %v1931, %v1927
    %v1933 = vmul.f32 1.0, %v1932
    %v1934 = vrcp.pop %v1916
    %v1935 = vmul.f32 %v1916, %v1934
    %v1936 = vsub.f32 1.0, %v1935
    %v1937 = vmul.f32 %v1934, %v1936
    %v1938 = vadd.f32 %v1934, %v1937
    %vm1939 = vweird.f32 %v1916
    %vm1940 = vweird.f32 %v1934
    %vm1941 = vmor %vm1939, %vm1940
    %v1942 = vsel %vm1941, %v1934, %v1938
    %v1943 = vand.u32 2147483647, %v1916
    %vm1944 = vcmp.eq.f32.partialorder %v1943, 8.507059e+37
    %v1945 = vand.u32 %v1916, 2147483648
    %v1946 = vor.u32 1.1754944e-38, %v1945
    %v1947 = vsel %vm1944, %v1946, %v1942
    %v1948 = vmul.f32 1.0, %v1947
    %v1949 = vrcp.pop %v1917
    %v1950 = vmul.f32 %v1917, %v1949
    %v1951 = vsub.f32 1.0, %v1950
    %v1952 = vmul.f32 %v1949, %v1951
    %v1953 = vadd.f32 %v1949, %v1952
    %vm1954 = vweird.f32 %v1917
    %vm1955 = vweird.f32 %v1949
    %vm1956 = vmor %vm1954, %vm1955
    %v1957 = vsel %vm1956, %v1949, %v1953
    %v1958 = vand.u32 2147483647, %v1917
    %vm1959 = vcmp.eq.f32.partialorder %v1958, 8.507059e+37
    %v1960 = vand.u32 %v1917, 2147483648
    %v1961 = vor.u32 1.1754944e-38, %v1960
    %v1962 = vsel %vm1959, %v1961, %v1957
    %v1963 = vmul.f32 1.0, %v1962
    %v1964 = vrcp.pop %v1918
    %v1965 = vmul.f32 %v1918, %v1964
    %v1966 = vsub.f32 1.0, %v1965
    %v1967 = vmul.f32 %v1964, %v1966
    %v1968 = vadd.f32 %v1964, %v1967
    %vm1969 = vweird.f32 %v1918
    %vm1970 = vweird.f32 %v1964
    %vm1971 = vmor %vm1969, %vm1970
    %v1972 = vsel %vm1971, %v1964, %v1968
    %v1973 = vand.u32 2147483647, %v1918
    %vm1974 = vcmp.eq.f32.partialorder %v1973, 8.507059e+37
    %v1975 = vand.u32 %v1918, 2147483648
    %v1976 = vor.u32 1.1754944e-38, %v1975
    %v1977 = vsel %vm1974, %v1976, %v1972
    %v1978 = vmul.f32 1.0, %v1977
    %v1979 = vmul.f32 %v1837, %v1933
    %v1980 = vmul.f32 %v1839, %v1948
    %v1981 = vmul.f32 %v1842, %v1963
    %v1982 = vmul.f32 %v1844, %v1978
    %v1983 = vadd.f32 %v1979, %v1422
    %v1984 = vadd.f32 %v1980, %v1423
    %v1985 = vadd.f32 %v1981, %v1424
    %v1986 = vadd.f32 %v1982, %v1425
    %v1987 = vpack.c.bf16 %v1984, %v1983
    %v1988 = vpack.c.bf16 %v1986, %v1985
    %v1989 = vld [vmem:[#allocation13] sm:$0xf]
    %v1990 = vld [vmem:[#allocation13 + $0x4] sm:$0xf]
    %v1991 = vld [vmem:[#allocation13 + $0x8] sm:$0xf]
    %v1992 = vld [vmem:[#allocation13 + $0xc] sm:$0xf]
    %v1993 = vld [vmem:[#allocation13 + $0x10] sm:$0xf]
    %v1994 = vld [vmem:[#allocation13 + $0x14] sm:$0xf]
    %v1995 = vld [vmem:[#allocation13 + $0x18] sm:$0xf]
    %v1996 = vld [vmem:[#allocation13 + $0x1c] sm:$0xf]
    %v1997 = vld [vmem:[#allocation13 + $0x20] sm:$0xf]
    %v1998 = vld [vmem:[#allocation13 + $0x24] sm:$0xf]
    %v1999 = vld [vmem:[#allocation13 + $0x28] sm:$0xf]
    %v2000 = vld [vmem:[#allocation13 + $0x2c] sm:$0xf]
    %v2001 = vld [vmem:[#allocation13 + $0x30] sm:$0xf]
    %v2002 = vld [vmem:[#allocation13 + $0x34] sm:$0xf]
    %v2003 = vld [vmem:[#allocation13 + $0x38] sm:$0xf]
    %v2004 = vld [vmem:[#allocation13 + $0x3c] sm:$0xf]
    %v2005 = vld [vmem:[%s10] sm:$0x1]
    %v2007 = vperm.slane %v2005, 0
    %v2025 = vunpack.c.l.b16 %v1989
    %v2026 = vunpack.c.l.b16 %v1990
    %v2027 = vunpack.c.l.b16 %v1991
    %v2028 = vunpack.c.l.b16 %v1992
    %v2029 = vunpack.c.l.b16 %v1993
    %v2030 = vunpack.c.l.b16 %v1994
    %v2031 = vunpack.c.l.b16 %v1995
    %v2032 = vunpack.c.l.b16 %v1996
    %v2033 = vunpack.c.l.b16 %v1997
    %v2034 = vunpack.c.l.b16 %v1998
    %v2035 = vunpack.c.l.b16 %v1999
    %v2036 = vunpack.c.l.b16 %v2000
    %v2037 = vunpack.c.l.b16 %v2001
    %v2038 = vunpack.c.l.b16 %v2002
    %v2039 = vunpack.c.l.b16 %v2003
    %v2040 = vunpack.c.l.b16 %v2004
    %v2041 = vpack.c.b16 %v2026, %v2025
    %v2042 = vpack.c.b16 %v2028, %v2027
    %v2043 = vpack.c.b16 %v2030, %v2029
    %v2044 = vpack.c.b16 %v2032, %v2031
    %v2045 = vpack.c.b16 %v2034, %v2033
    %v2046 = vpack.c.b16 %v2036, %v2035
    %v2047 = vpack.c.b16 %v2038, %v2037
    %v2048 = vpack.c.b16 %v2040, %v2039
    %2057 = vmatpush.bf16.msra.mxu0 %v2048
    %2058 = vmatpush.bf16.msra.mxu0 %v2047
    %2059 = vmatpush.bf16.msra.mxu0 %v2046
    %2060 = vmatpush.bf16.msra.mxu0 %v2045
    %2061 = vmatpush.bf16.msra.mxu0 %v2044
    %2062 = vmatpush.bf16.msra.mxu0 %v2043
    %2063 = vmatpush.bf16.msra.mxu0 %v2042
    %2064 = vmatpush.bf16.msra.mxu0 %v2041
    %2065 = vmatmul.bf16.gmra.mxu0 %v1987
    %v2066 = vpop.f32.mrf.mxu0
    %v2067 = vadd.f32 %v2007, %v2066
    %v2068 = vpop.f32.mrf.mxu0
    %v2069 = vadd.f32 %v2007, %v2068
    %2070 = vmatmul.bf16.gmra.mxu0 %v1988
    %v2071 = vpop.f32.mrf.mxu0
    %v2072 = vadd.f32 %v2007, %v2071
    %v2073 = vpop.f32.mrf.mxu0
    %v2074 = vadd.f32 %v2007, %v2073
    %2075 = vdwg.mxu0
    %2076 = vst [vmem:[#allocation14] sm:$0xff] %v2067
    %2077 = vst [vmem:[#allocation14 + $0x8] sm:$0xff] %v2069
    %2078 = vst [vmem:[#allocation14 + $0x10] sm:$0xff] %v2072
    %2079 = vst [vmem:[#allocation14 + $0x18] sm:$0xff] %v2074
    // Predicated region
    $region74: #{tpu_custom_call.1} parent=1 // pred_check
      _
    $region75: #{tpu_custom_call.1} parent=1 // pred_check_branch
      %2081 = sbr.rel (0) target = $region77
    $region76: #{tpu_custom_call.1} parent=1 // pred_region
      %2083 = vsyncadd [#allocation4], 0
      %s2084 = sshll.u32 [#allocation14], 4
      %s2085 = int_to_ptr.vmem [resolvable:$true] %s2084
      %s2086 = sshll.u32 %s11, 4
      %s2087 = int_to_ptr.hbm [resolvable:$true] %s2086
      %2092 = dma.vmem_to_hbm [thread:$0]  %s2085, 512, %s2087, [#allocation4], 128, 128, 8
    $region77: #{tpu_custom_call.1} parent=1 // pred_fallthru
      _
    // Predicated region
    $region78: #{tpu_custom_call.1} parent=1 // pred_check
      _
    $region79: #{tpu_custom_call.1} parent=1 // pred_check_branch
      %2094 = sbr.rel (0) target = $region81
    $region80: #{tpu_custom_call.1} parent=1 // pred_region
      %2096 = dma.done [#allocation4], 512
    $region81: #{tpu_custom_call.1} parent=1 // pred_fallthru
      _
    %2097 = vsyncpa [#allocation3], 1
    %2098 = vsyncpa [#allocation6], 1
    %2099 = vsyncpa [#allocation9], 1
    %2100 = vsyncpa [#allocation12], 1
    %2101 = vsyncpa [#allocation4], 1

</llo_original>
